<compile_context>
chip_gen: v6e
topology: v6e:2x2x1
jax: 0.10.0
libtpu: 0.0.40
codegen_flags: <defaults>
</compile_context>

<pallas_src>
import functools

import jax
import jax.numpy as jnp
from jax import lax
from jax.experimental import pallas as pl
from jax.experimental.pallas import tpu as pltpu


def _round_up(x, m):
    return ((x + m - 1) // m) * m


def _lstm_fc_kernel(x_ref, wih0_ref, whh0_ref, b0_ref,
                    wih_ref, whh_ref, b_ref,
                    fcw_ref, fcb_ref,
                    out_ref,
                    gbuf_ref, seq_ref,
                    *, hidden, num_layers, seq_len, batch_tile):
    """Stacked LSTM + final Linear for one batch tile.

    x_ref   : (T*Bt, I)     layer-0 inputs, rows ordered (t, local_batch)
    wih0_ref: (I, 4H)       layer-0 input weights (transposed)
    whh0_ref: (H, 4H)       layer-0 recurrent weights (transposed)
    b0_ref  : (1, 4H)       layer-0 bias (b_ih + b_hh)
    wih_ref : (L-1, H, 4H)  layers 1..L-1 input weights
    whh_ref : (L-1, H, 4H)  layers 1..L-1 recurrent weights
    b_ref   : (L-1, 1, 4H)  layers 1..L-1 biases
    fcw_ref : (1, H)        fc weight row
    fcb_ref : (1, 1)        fc bias
    out_ref : (1, Bt)       lane-dense fc(out[:, -1]) for this tile
    gbuf_ref: (T*Bt, 4H)    VMEM scratch: precomputed input-side gate pre-acts
    seq_ref : (T*Bt, H)     VMEM scratch: current layer's output sequence
    """
    H = hidden
    T = seq_len
    B = batch_tile

    def project_inputs(seq_all, wih, b):
        # Bulk input-side projection for a whole layer: one (T*Bt, feat) matmul.
        gbuf_ref[...] = (
            jnp.dot(seq_all, wih, preferred_element_type=jnp.float32) + b)

    def run_recurrence(whh, write_seq):
        # Serial recurrence; only h @ W_hh remains inside the (unrolled) loop.
        h = jnp.zeros((B, H), jnp.float32)
        c = jnp.zeros((B, H), jnp.float32)
        for t in range(T):                                   # T=8: static unroll
            g = gbuf_ref[pl.ds(t * B, B), :]                 # static row slice
            if t > 0:
                g = g + jnp.dot(h, whh, preferred_element_type=jnp.float32)
            # sigmoid(x) == 0.5*(tanh(x/2)+1): single full-width EUP tanh for
            # the i/f/o gates; tanh only on the g slice (and on c).
            sig = jnp.tanh(g * 0.5) * 0.5 + 0.5              # (B, 4H)
            i_g = sig[:, 0 * H:1 * H]
            f_g = sig[:, 1 * H:2 * H]
            o_g = sig[:, 3 * H:4 * H]
            g_g = jnp.tanh(g[:, 2 * H:3 * H])                # (B, H)
            c = i_g * g_g if t == 0 else f_g * c + i_g * g_g  # c0 == 0
            h = o_g * jnp.tanh(c)
            if write_seq:
                seq_ref[pl.ds(t * B, B), :] = h
        return h

    # ---- layer 0: reads the raw (pre-flattened) input sequence ----
    project_inputs(x_ref[...], wih0_ref[...], b0_ref[...])
    h = run_recurrence(whh0_ref[...], write_seq=(num_layers > 1))

    # ---- layers 1..L-1: bulk-project previous layer's outputs, then recur ----
    for l in range(num_layers - 1):
        # seq_ref is fully read here before the recurrence overwrites it.
        project_inputs(seq_ref[...], wih_ref[l], b_ref[l])
        h = run_recurrence(whh_ref[l], write_seq=(l != num_layers - 2))

    # ---- final Linear on the last hidden state, lane-dense (1, Bt) ----
    # Contract fcw (1,H) with h (Bt,H) over H (like q @ k.T), no reshapes.
    fc = lax.dot_general(fcw_ref[...], h,
                         dimension_numbers=(((1,), (1,)), ((), ())),
                         preferred_element_type=jnp.float32)   # (1, Bt)
    out_ref[...] = fc + fcb_ref[...]


def init_lstm_params(key, input_size, hidden_size, num_layers):
    """Deterministic PyTorch-style init: U(-1/sqrt(H), 1/sqrt(H))."""
    k = 1.0 / jnp.sqrt(jnp.float32(hidden_size))

    def u(key, shape):
        return jax.random.uniform(key, shape, jnp.float32, -k, k)

    keys = jax.random.split(key, 4 * num_layers + 2)
    ki = iter(range(4 * num_layers + 2))

    wih_t, whh_t, bias = [], [], []
    for layer in range(num_layers):
        in_feat = input_size if layer == 0 else hidden_size
        w_ih = u(keys[next(ki)], (4 * hidden_size, in_feat))
        w_hh = u(keys[next(ki)], (4 * hidden_size, hidden_size))
        b_ih = u(keys[next(ki)], (4 * hidden_size,))
        b_hh = u(keys[next(ki)], (4 * hidden_size,))
        wih_t.append(w_ih.T)                              # (in_feat, 4H)
        whh_t.append(w_hh.T)                              # (H, 4H)
        bias.append((b_ih + b_hh).reshape(1, 4 * hidden_size))

    params = {
        "wih0": wih_t[0],                                 # (I, 4H)
        "whh0": whh_t[0],                                 # (H, 4H)
        "b0": bias[0],                                    # (1, 4H)
        "wih_rest": jnp.stack(wih_t[1:]),                 # (L-1, H, 4H)
        "whh_rest": jnp.stack(whh_t[1:]),                 # (L-1, H, 4H)
        "b_rest": jnp.stack(bias[1:]),                    # (L-1, 1, 4H)
    }
    fc_w = u(keys[next(ki)], (1, hidden_size))            # PyTorch Linear: (out, in)
    fc_b = u(keys[next(ki)], (1,))
    params["fcw_row"] = fc_w                              # (1, H)
    params["fcb"] = fc_b.reshape(1, 1)                    # (1, 1)
    return params


@functools.partial(jax.jit, static_argnames=("hidden_size", "num_layers"))
def lstm_model_forward(x, params, *, hidden_size, num_layers):
    """x: (B, T, I) batch_first, like the PyTorch module. Returns (B, 1)."""
    B, T, I = x.shape
    H = hidden_size

    # Adaptive batch tile (review): amortize the serial recurrence over many rows.
    #  - small batches: one tile covering the whole (8-padded) batch
    #  - large batches: 128-row tiles -> lane-aligned (1, Bt) output blocks and
    #    >=2 grid steps so both v7x TensorCores get work under "parallel".
    B8 = _round_up(B, 8)
    Bt = B8 if B8 <= 128 else 128
    B_pad = _round_up(B8, Bt)
    n_tiles = B_pad // Bt

    xf = jnp.pad(x.astype(jnp.float32), ((0, B_pad - B), (0, 0), (0, 0)))
    # Rows within each tile ordered (t, local_b); the kernel does no reshape.
    xf = xf.reshape(n_tiles, Bt, T, I).transpose(0, 2, 1, 3)
    xf = xf.reshape(n_tiles * T * Bt, I)

    kernel = functools.partial(
        _lstm_fc_kernel,
        hidden=H, num_layers=num_layers, seq_len=T, batch_tile=Bt,
    )

    out = pl.pallas_call(
        kernel,
        out_shape=jax.ShapeDtypeStruct((1, B_pad), jnp.float32),
        grid_spec=pltpu.PrefetchScalarGridSpec(
            num_scalar_prefetch=0,
            grid=(n_tiles,),                                   # batch tiles
            in_specs=[
                pl.BlockSpec((T * Bt, I), lambda b: (b, 0)),             # x
                pl.BlockSpec((I, 4 * H), lambda b: (0, 0)),              # wih0
                pl.BlockSpec((H, 4 * H), lambda b: (0, 0)),              # whh0
                pl.BlockSpec((1, 4 * H), lambda b: (0, 0)),              # b0
                pl.BlockSpec((num_layers - 1, H, 4 * H),
                             lambda b: (0, 0, 0)),                       # wih_rest
                pl.BlockSpec((num_layers - 1, H, 4 * H),
                             lambda b: (0, 0, 0)),                       # whh_rest
                pl.BlockSpec((num_layers - 1, 1, 4 * H),
                             lambda b: (0, 0, 0)),                       # b_rest
                pl.BlockSpec((1, H), lambda b: (0, 0)),                  # fcw
                pl.BlockSpec((1, 1), lambda b: (0, 0)),                  # fcb
            ],
            out_specs=pl.BlockSpec((1, Bt), lambda b: (0, b)),           # lane-dense
            scratch_shapes=[
                pltpu.VMEM((T * Bt, 4 * H), jnp.float32),   # gate pre-activations
                pltpu.VMEM((T * Bt, H), jnp.float32),       # layer output sequence
            ],
        ),
        compiler_params=pltpu.CompilerParams(
            dimension_semantics=("parallel",)),              # megacore on v7x
    )(xf,
      params["wih0"], params["whh0"], params["b0"],
      params["wih_rest"], params["whh_rest"], params["b_rest"],
      params["fcw_row"], params["fcb"])

    return out[0, :B].reshape(B, 1)                          # drop padded lanes


def lstm_model_reference(x, params, *, hidden_size, num_layers):
    """Pure-JAX reference mirroring PyTorch nn.LSTM + Linear semantics."""
    B, T, I = x.shape
    H = hidden_size
    seq = x.astype(jnp.float32)                              # (B, T, feat)

    def one_layer(seq_in, wih_t, whh_t, b):
        def step(carry, xt):
            h, c = carry
            gates = xt @ wih_t + h @ whh_t + b               # (B, 4H)
            i_g = jax.nn.sigmoid(gates[:, 0 * H:1 * H])
            f_g = jax.nn.sigmoid(gates[:, 1 * H:2 * H])
            g_g = jnp.tanh(gates[:, 2 * H:3 * H])
            o_g = jax.nn.sigmoid(gates[:, 3 * H:4 * H])
            c = f_g * c + i_g * g_g
            h = o_g * jnp.tanh(c)
            return (h, c), h

        h0 = jnp.zeros((B, H), jnp.float32)
        (_, _), hs = lax.scan(step, (h0, h0), jnp.transpose(seq_in, (1, 0, 2)))
        return jnp.transpose(hs, (1, 0, 2))                  # (B, T, H)

    seq = one_layer(seq, params["wih0"], params["whh0"], params["b0"])
    for l in range(num_layers - 1):
        seq = one_layer(seq, params["wih_rest"][l], params["whh_rest"][l],
                        params["b_rest"][l])
    return seq[:, -1] @ params["fcw_row"].T + params["fcb"]  # (B, 1)


if __name__ == "__main__":
    BATCH, SEQ, INPUT_SIZE = 2, 8, 16
    HIDDEN, NUM_LAYERS = 32, 4

    key = jax.random.PRNGKey(0)
    k_param, k_x = jax.random.split(key)
    params = init_lstm_params(k_param, INPUT_SIZE, HIDDEN, NUM_LAYERS)
    x = jax.random.normal(k_x, (BATCH, SEQ, INPUT_SIZE), jnp.float32)

    out = lstm_model_forward(x, params, hidden_size=HIDDEN, num_layers=NUM_LAYERS)
    out = jax.block_until_ready(out)
    assert out.shape == (BATCH, 1), out.shape

    ref = lstm_model_reference(x, params, hidden_size=HIDDEN, num_layers=NUM_LAYERS)
    assert jnp.allclose(out, ref, atol=1e-4, rtol=1e-4), (out, ref)

    print("KERNEL_OK")
</pallas_src>

<mosaic_0001>
module attributes {stable_mosaic.version = 11 : i64} {
  func.func @_lstm_fc_kernel(%arg0: i32, %arg1: memref<64x16xf32, #tpu.memory_space<vmem>>, %arg2: memref<16x128xf32, #tpu.memory_space<vmem>>, %arg3: memref<32x128xf32, #tpu.memory_space<vmem>>, %arg4: memref<1x128xf32, #tpu.memory_space<vmem>>, %arg5: memref<3x32x128xf32, #tpu.memory_space<vmem>>, %arg6: memref<3x32x128xf32, #tpu.memory_space<vmem>>, %arg7: memref<3x1x128xf32, #tpu.memory_space<vmem>>, %arg8: memref<1x32xf32, #tpu.memory_space<vmem>>, %arg9: memref<1x1xf32, #tpu.memory_space<vmem>>, %arg10: memref<1x8xf32, #tpu.memory_space<vmem>>, %arg11: memref<64x128xf32, #tpu.memory_space<vmem>>, %arg12: memref<64x32xf32, #tpu.memory_space<vmem>>) attributes {dimension_semantics = [#tpu.dimension_semantics<parallel>], iteration_bounds = array<i64: 1>, scalar_prefetch = 0 : i64, scratch_operands = 2 : i64, tpu.core_type = #tpu.core_type<tc>, window_params = [{transform_indices = @transform_0, window_bounds = array<i64: 64, 16>}, {pipeline_mode = #tpu.pipeline_mode<synchronous>, transform_indices = @transform_1, window_bounds = array<i64: 16, 128>}, {pipeline_mode = #tpu.pipeline_mode<synchronous>, transform_indices = @transform_2, window_bounds = array<i64: 32, 128>}, {pipeline_mode = #tpu.pipeline_mode<synchronous>, transform_indices = @transform_3, window_bounds = array<i64: 1, 128>}, {pipeline_mode = #tpu.pipeline_mode<synchronous>, transform_indices = @transform_4, window_bounds = array<i64: 3, 32, 128>}, {pipeline_mode = #tpu.pipeline_mode<synchronous>, transform_indices = @transform_5, window_bounds = array<i64: 3, 32, 128>}, {pipeline_mode = #tpu.pipeline_mode<synchronous>, transform_indices = @transform_6, window_bounds = array<i64: 3, 1, 128>}, {pipeline_mode = #tpu.pipeline_mode<synchronous>, transform_indices = @transform_7, window_bounds = array<i64: 1, 32>}, {pipeline_mode = #tpu.pipeline_mode<synchronous>, transform_indices = @transform_8, window_bounds = array<i64: 1, 1>}, {transform_indices = @transform_9, window_bounds = array<i64: 1, 8>}]} {
    %c0 = arith.constant 0 : index
    %c0_0 = arith.constant 0 : index
    %0 = vector.load %arg1[%c0, %c0_0] : memref<64x16xf32, #tpu.memory_space<vmem>>, vector<64x16xf32>
    %c0_1 = arith.constant 0 : index
    %c0_2 = arith.constant 0 : index
    %1 = vector.load %arg2[%c0_1, %c0_2] : memref<16x128xf32, #tpu.memory_space<vmem>>, vector<16x128xf32>
    %c0_3 = arith.constant 0 : index
    %c0_4 = arith.constant 0 : index
    %2 = vector.load %arg4[%c0_3, %c0_4] : memref<1x128xf32, #tpu.memory_space<vmem>>, vector<1x128xf32>
    %cst = arith.constant dense<0.000000e+00> : vector<64x128xf32>
    %3 = tpu.matmul %0, %1, %cst {dimension_numbers = #tpu.dot_dimension_numbers<[1], [0], [0], [1], [0, 0, 1, 1], [], []>} : vector<64x16xf32>, vector<16x128xf32>, vector<64x128xf32> -> vector<64x128xf32>
    %4 = vector.broadcast %2 : vector<1x128xf32> to vector<64x128xf32>
    %5 = arith.addf %3, %4 : vector<64x128xf32>
    %c0_5 = arith.constant 0 : index
    %c0_6 = arith.constant 0 : index
    %6 = vector.load %arg11[%c0_5, %c0_6] : memref<64x128xf32, #tpu.memory_space<vmem>>, vector<64x128xf32>
    tpu.vector_store %arg11[%c0_5, %c0_6], %5 {strides = array<i32>} : memref<64x128xf32, #tpu.memory_space<vmem>>, vector<64x128xf32>,
    %c0_7 = arith.constant 0 : index
    %c0_8 = arith.constant 0 : index
    %7 = vector.load %arg3[%c0_7, %c0_8] : memref<32x128xf32, #tpu.memory_space<vmem>>, vector<32x128xf32>
    %c0_9 = arith.constant 0 : index
    %c0_10 = arith.constant 0 : index
    %8 = vector.load %arg11[%c0_9, %c0_10] : memref<64x128xf32, #tpu.memory_space<vmem>>, vector<8x128xf32>
    %cst_11 = arith.constant 5.000000e-01 : f32
    %9 = vector.broadcast %cst_11 : f32 to vector<8x128xf32>
    %10 = arith.mulf %8, %9 : vector<8x128xf32>
    %11 = math.tanh %10 : vector<8x128xf32>
    %cst_12 = arith.constant 5.000000e-01 : f32
    %12 = vector.broadcast %cst_12 : f32 to vector<8x128xf32>
    %13 = arith.mulf %11, %12 : vector<8x128xf32>
    %cst_13 = arith.constant 5.000000e-01 : f32
    %14 = vector.broadcast %cst_13 : f32 to vector<8x128xf32>
    %15 = arith.addf %13, %14 : vector<8x128xf32>
    %16 = vector.extract_strided_slice %15 {offsets = [0, 0], sizes = [8, 32], strides = [1, 1]} : vector<8x128xf32> to vector<8x32xf32>
    %17 = vector.extract_strided_slice %15 {offsets = [0, 96], sizes = [8, 32], strides = [1, 1]} : vector<8x128xf32> to vector<8x32xf32>
    %18 = vector.extract_strided_slice %8 {offsets = [0, 64], sizes = [8, 32], strides = [1, 1]} : vector<8x128xf32> to vector<8x32xf32>
    %19 = math.tanh %18 : vector<8x32xf32>
    %20 = arith.mulf %16, %19 : vector<8x32xf32>
    %21 = math.tanh %20 : vector<8x32xf32>
    %22 = arith.mulf %17, %21 : vector<8x32xf32>
    %c0_14 = arith.constant 0 : index
    %c0_15 = arith.constant 0 : index
    %23 = vector.load %arg12[%c0_14, %c0_15] : memref<64x32xf32, #tpu.memory_space<vmem>>, vector<8x32xf32>
    tpu.vector_store %arg12[%c0_14, %c0_15], %22 {strides = array<i32>} : memref<64x32xf32, #tpu.memory_space<vmem>>, vector<8x32xf32>,
    %c8 = arith.constant 8 : index
    %c0_16 = arith.constant 0 : index
    %24 = vector.load %arg11[%c8, %c0_16] : memref<64x128xf32, #tpu.memory_space<vmem>>, vector<8x128xf32>
    %cst_17 = arith.constant dense<0.000000e+00> : vector<8x128xf32>
    %25 = tpu.matmul %22, %7, %cst_17 {dimension_numbers = #tpu.dot_dimension_numbers<[1], [0], [0], [1], [0, 0, 1, 1], [], []>} : vector<8x32xf32>, vector<32x128xf32>, vector<8x128xf32> -> vector<8x128xf32>
    %26 = arith.addf %24, %25 : vector<8x128xf32>
    %cst_18 = arith.constant 5.000000e-01 : f32
    %27 = vector.broadcast %cst_18 : f32 to vector<8x128xf32>
    %28 = arith.mulf %26, %27 : vector<8x128xf32>
    %29 = math.tanh %28 : vector<8x128xf32>
    %cst_19 = arith.constant 5.000000e-01 : f32
    %30 = vector.broadcast %cst_19 : f32 to vector<8x128xf32>
    %31 = arith.mulf %29, %30 : vector<8x128xf32>
    %cst_20 = arith.constant 5.000000e-01 : f32
    %32 = vector.broadcast %cst_20 : f32 to vector<8x128xf32>
    %33 = arith.addf %31, %32 : vector<8x128xf32>
    %34 = vector.extract_strided_slice %33 {offsets = [0, 0], sizes = [8, 32], strides = [1, 1]} : vector<8x128xf32> to vector<8x32xf32>
    %35 = vector.extract_strided_slice %33 {offsets = [0, 32], sizes = [8, 32], strides = [1, 1]} : vector<8x128xf32> to vector<8x32xf32>
    %36 = vector.extract_strided_slice %33 {offsets = [0, 96], sizes = [8, 32], strides = [1, 1]} : vector<8x128xf32> to vector<8x32xf32>
    %37 = vector.extract_strided_slice %26 {offsets = [0, 64], sizes = [8, 32], strides = [1, 1]} : vector<8x128xf32> to vector<8x32xf32>
    %38 = math.tanh %37 : vector<8x32xf32>
    %39 = arith.mulf %35, %20 : vector<8x32xf32>
    %40 = arith.mulf %34, %38 : vector<8x32xf32>
    %41 = arith.addf %39, %40 : vector<8x32xf32>
    %42 = math.tanh %41 : vector<8x32xf32>
    %43 = arith.mulf %36, %42 : vector<8x32xf32>
    %c8_21 = arith.constant 8 : index
    %c0_22 = arith.constant 0 : index
    %44 = vector.load %arg12[%c8_21, %c0_22] : memref<64x32xf32, #tpu.memory_space<vmem>>, vector<8x32xf32>
    tpu.vector_store %arg12[%c8_21, %c0_22], %43 {strides = array<i32>} : memref<64x32xf32, #tpu.memory_space<vmem>>, vector<8x32xf32>,
    %c16 = arith.constant 16 : index
    %c0_23 = arith.constant 0 : index
    %45 = vector.load %arg11[%c16, %c0_23] : memref<64x128xf32, #tpu.memory_space<vmem>>, vector<8x128xf32>
    %cst_24 = arith.constant dense<0.000000e+00> : vector<8x128xf32>
    %46 = tpu.matmul %43, %7, %cst_24 {dimension_numbers = #tpu.dot_dimension_numbers<[1], [0], [0], [1], [0, 0, 1, 1], [], []>} : vector<8x32xf32>, vector<32x128xf32>, vector<8x128xf32> -> vector<8x128xf32>
    %47 = arith.addf %45, %46 : vector<8x128xf32>
    %cst_25 = arith.constant 5.000000e-01 : f32
    %48 = vector.broadcast %cst_25 : f32 to vector<8x128xf32>
    %49 = arith.mulf %47, %48 : vector<8x128xf32>
    %50 = math.tanh %49 : vector<8x128xf32>
    %cst_26 = arith.constant 5.000000e-01 : f32
    %51 = vector.broadcast %cst_26 : f32 to vector<8x128xf32>
    %52 = arith.mulf %50, %51 : vector<8x128xf32>
    %cst_27 = arith.constant 5.000000e-01 : f32
    %53 = vector.broadcast %cst_27 : f32 to vector<8x128xf32>
    %54 = arith.addf %52, %53 : vector<8x128xf32>
    %55 = vector.extract_strided_slice %54 {offsets = [0, 0], sizes = [8, 32], strides = [1, 1]} : vector<8x128xf32> to vector<8x32xf32>
    %56 = vector.extract_strided_slice %54 {offsets = [0, 32], sizes = [8, 32], strides = [1, 1]} : vector<8x128xf32> to vector<8x32xf32>
    %57 = vector.extract_strided_slice %54 {offsets = [0, 96], sizes = [8, 32], strides = [1, 1]} : vector<8x128xf32> to vector<8x32xf32>
    %58 = vector.extract_strided_slice %47 {offsets = [0, 64], sizes = [8, 32], strides = [1, 1]} : vector<8x128xf32> to vector<8x32xf32>
    %59 = math.tanh %58 : vector<8x32xf32>
    %60 = arith.mulf %56, %41 : vector<8x32xf32>
    %61 = arith.mulf %55, %59 : vector<8x32xf32>
    %62 = arith.addf %60, %61 : vector<8x32xf32>
    %63 = math.tanh %62 : vector<8x32xf32>
    %64 = arith.mulf %57, %63 : vector<8x32xf32>
    %c16_28 = arith.constant 16 : index
    %c0_29 = arith.constant 0 : index
    %65 = vector.load %arg12[%c16_28, %c0_29] : memref<64x32xf32, #tpu.memory_space<vmem>>, vector<8x32xf32>
    tpu.vector_store %arg12[%c16_28, %c0_29], %64 {strides = array<i32>} : memref<64x32xf32, #tpu.memory_space<vmem>>, vector<8x32xf32>,
    %c24 = arith.constant 24 : index
    %c0_30 = arith.constant 0 : index
    %66 = vector.load %arg11[%c24, %c0_30] : memref<64x128xf32, #tpu.memory_space<vmem>>, vector<8x128xf32>
    %cst_31 = arith.constant dense<0.000000e+00> : vector<8x128xf32>
    %67 = tpu.matmul %64, %7, %cst_31 {dimension_numbers = #tpu.dot_dimension_numbers<[1], [0], [0], [1], [0, 0, 1, 1], [], []>} : vector<8x32xf32>, vector<32x128xf32>, vector<8x128xf32> -> vector<8x128xf32>
    %68 = arith.addf %66, %67 : vector<8x128xf32>
    %cst_32 = arith.constant 5.000000e-01 : f32
    %69 = vector.broadcast %cst_32 : f32 to vector<8x128xf32>
    %70 = arith.mulf %68, %69 : vector<8x128xf32>
    %71 = math.tanh %70 : vector<8x128xf32>
    %cst_33 = arith.constant 5.000000e-01 : f32
    %72 = vector.broadcast %cst_33 : f32 to vector<8x128xf32>
    %73 = arith.mulf %71, %72 : vector<8x128xf32>
    %cst_34 = arith.constant 5.000000e-01 : f32
    %74 = vector.broadcast %cst_34 : f32 to vector<8x128xf32>
    %75 = arith.addf %73, %74 : vector<8x128xf32>
    %76 = vector.extract_strided_slice %75 {offsets = [0, 0], sizes = [8, 32], strides = [1, 1]} : vector<8x128xf32> to vector<8x32xf32>
    %77 = vector.extract_strided_slice %75 {offsets = [0, 32], sizes = [8, 32], strides = [1, 1]} : vector<8x128xf32> to vector<8x32xf32>
    %78 = vector.extract_strided_slice %75 {offsets = [0, 96], sizes = [8, 32], strides = [1, 1]} : vector<8x128xf32> to vector<8x32xf32>
    %79 = vector.extract_strided_slice %68 {offsets = [0, 64], sizes = [8, 32], strides = [1, 1]} : vector<8x128xf32> to vector<8x32xf32>
    %80 = math.tanh %79 : vector<8x32xf32>
    %81 = arith.mulf %77, %62 : vector<8x32xf32>
    %82 = arith.mulf %76, %80 : vector<8x32xf32>
    %83 = arith.addf %81, %82 : vector<8x32xf32>
    %84 = math.tanh %83 : vector<8x32xf32>
    %85 = arith.mulf %78, %84 : vector<8x32xf32>
    %c24_35 = arith.constant 24 : index
    %c0_36 = arith.constant 0 : index
    %86 = vector.load %arg12[%c24_35, %c0_36] : memref<64x32xf32, #tpu.memory_space<vmem>>, vector<8x32xf32>
    tpu.vector_store %arg12[%c24_35, %c0_36], %85 {strides = array<i32>} : memref<64x32xf32, #tpu.memory_space<vmem>>, vector<8x32xf32>,
    %c32 = arith.constant 32 : index
    %c0_37 = arith.constant 0 : index
    %87 = vector.load %arg11[%c32, %c0_37] : memref<64x128xf32, #tpu.memory_space<vmem>>, vector<8x128xf32>
    %cst_38 = arith.constant dense<0.000000e+00> : vector<8x128xf32>
    %88 = tpu.matmul %85, %7, %cst_38 {dimension_numbers = #tpu.dot_dimension_numbers<[1], [0], [0], [1], [0, 0, 1, 1], [], []>} : vector<8x32xf32>, vector<32x128xf32>, vector<8x128xf32> -> vector<8x128xf32>
    %89 = arith.addf %87, %88 : vector<8x128xf32>
    %cst_39 = arith.constant 5.000000e-01 : f32
    %90 = vector.broadcast %cst_39 : f32 to vector<8x128xf32>
    %91 = arith.mulf %89, %90 : vector<8x128xf32>
    %92 = math.tanh %91 : vector<8x128xf32>
    %cst_40 = arith.constant 5.000000e-01 : f32
    %93 = vector.broadcast %cst_40 : f32 to vector<8x128xf32>
    %94 = arith.mulf %92, %93 : vector<8x128xf32>
    %cst_41 = arith.constant 5.000000e-01 : f32
    %95 = vector.broadcast %cst_41 : f32 to vector<8x128xf32>
    %96 = arith.addf %94, %95 : vector<8x128xf32>
    %97 = vector.extract_strided_slice %96 {offsets = [0, 0], sizes = [8, 32], strides = [1, 1]} : vector<8x128xf32> to vector<8x32xf32>
    %98 = vector.extract_strided_slice %96 {offsets = [0, 32], sizes = [8, 32], strides = [1, 1]} : vector<8x128xf32> to vector<8x32xf32>
    %99 = vector.extract_strided_slice %96 {offsets = [0, 96], sizes = [8, 32], strides = [1, 1]} : vector<8x128xf32> to vector<8x32xf32>
    %100 = vector.extract_strided_slice %89 {offsets = [0, 64], sizes = [8, 32], strides = [1, 1]} : vector<8x128xf32> to vector<8x32xf32>
    %101 = math.tanh %100 : vector<8x32xf32>
    %102 = arith.mulf %98, %83 : vector<8x32xf32>
    %103 = arith.mulf %97, %101 : vector<8x32xf32>
    %104 = arith.addf %102, %103 : vector<8x32xf32>
    %105 = math.tanh %104 : vector<8x32xf32>
    %106 = arith.mulf %99, %105 : vector<8x32xf32>
    %c32_42 = arith.constant 32 : index
    %c0_43 = arith.constant 0 : index
    %107 = vector.load %arg12[%c32_42, %c0_43] : memref<64x32xf32, #tpu.memory_space<vmem>>, vector<8x32xf32>
    tpu.vector_store %arg12[%c32_42, %c0_43], %106 {strides = array<i32>} : memref<64x32xf32, #tpu.memory_space<vmem>>, vector<8x32xf32>,
    %c40 = arith.constant 40 : index
    %c0_44 = arith.constant 0 : index
    %108 = vector.load %arg11[%c40, %c0_44] : memref<64x128xf32, #tpu.memory_space<vmem>>, vector<8x128xf32>
    %cst_45 = arith.constant dense<0.000000e+00> : vector<8x128xf32>
    %109 = tpu.matmul %106, %7, %cst_45 {dimension_numbers = #tpu.dot_dimension_numbers<[1], [0], [0], [1], [0, 0, 1, 1], [], []>} : vector<8x32xf32>, vector<32x128xf32>, vector<8x128xf32> -> vector<8x128xf32>
    %110 = arith.addf %108, %109 : vector<8x128xf32>
    %cst_46 = arith.constant 5.000000e-01 : f32
    %111 = vector.broadcast %cst_46 : f32 to vector<8x128xf32>
    %112 = arith.mulf %110, %111 : vector<8x128xf32>
    %113 = math.tanh %112 : vector<8x128xf32>
    %cst_47 = arith.constant 5.000000e-01 : f32
    %114 = vector.broadcast %cst_47 : f32 to vector<8x128xf32>
    %115 = arith.mulf %113, %114 : vector<8x128xf32>
    %cst_48 = arith.constant 5.000000e-01 : f32
    %116 = vector.broadcast %cst_48 : f32 to vector<8x128xf32>
    %117 = arith.addf %115, %116 : vector<8x128xf32>
    %118 = vector.extract_strided_slice %117 {offsets = [0, 0], sizes = [8, 32], strides = [1, 1]} : vector<8x128xf32> to vector<8x32xf32>
    %119 = vector.extract_strided_slice %117 {offsets = [0, 32], sizes = [8, 32], strides = [1, 1]} : vector<8x128xf32> to vector<8x32xf32>
    %120 = vector.extract_strided_slice %117 {offsets = [0, 96], sizes = [8, 32], strides = [1, 1]} : vector<8x128xf32> to vector<8x32xf32>
    %121 = vector.extract_strided_slice %110 {offsets = [0, 64], sizes = [8, 32], strides = [1, 1]} : vector<8x128xf32> to vector<8x32xf32>
    %122 = math.tanh %121 : vector<8x32xf32>
    %123 = arith.mulf %119, %104 : vector<8x32xf32>
    %124 = arith.mulf %118, %122 : vector<8x32xf32>
    %125 = arith.addf %123, %124 : vector<8x32xf32>
    %126 = math.tanh %125 : vector<8x32xf32>
    %127 = arith.mulf %120, %126 : vector<8x32xf32>
    %c40_49 = arith.constant 40 : index
    %c0_50 = arith.constant 0 : index
    %128 = vector.load %arg12[%c40_49, %c0_50] : memref<64x32xf32, #tpu.memory_space<vmem>>, vector<8x32xf32>
    tpu.vector_store %arg12[%c40_49, %c0_50], %127 {strides = array<i32>} : memref<64x32xf32, #tpu.memory_space<vmem>>, vector<8x32xf32>,
    %c48 = arith.constant 48 : index
    %c0_51 = arith.constant 0 : index
    %129 = vector.load %arg11[%c48, %c0_51] : memref<64x128xf32, #tpu.memory_space<vmem>>, vector<8x128xf32>
    %cst_52 = arith.constant dense<0.000000e+00> : vector<8x128xf32>
    %130 = tpu.matmul %127, %7, %cst_52 {dimension_numbers = #tpu.dot_dimension_numbers<[1], [0], [0], [1], [0, 0, 1, 1], [], []>} : vector<8x32xf32>, vector<32x128xf32>, vector<8x128xf32> -> vector<8x128xf32>
    %131 = arith.addf %129, %130 : vector<8x128xf32>
    %cst_53 = arith.constant 5.000000e-01 : f32
    %132 = vector.broadcast %cst_53 : f32 to vector<8x128xf32>
    %133 = arith.mulf %131, %132 : vector<8x128xf32>
    %134 = math.tanh %133 : vector<8x128xf32>
    %cst_54 = arith.constant 5.000000e-01 : f32
    %135 = vector.broadcast %cst_54 : f32 to vector<8x128xf32>
    %136 = arith.mulf %134, %135 : vector<8x128xf32>
    %cst_55 = arith.constant 5.000000e-01 : f32
    %137 = vector.broadcast %cst_55 : f32 to vector<8x128xf32>
    %138 = arith.addf %136, %137 : vector<8x128xf32>
    %139 = vector.extract_strided_slice %138 {offsets = [0, 0], sizes = [8, 32], strides = [1, 1]} : vector<8x128xf32> to vector<8x32xf32>
    %140 = vector.extract_strided_slice %138 {offsets = [0, 32], sizes = [8, 32], strides = [1, 1]} : vector<8x128xf32> to vector<8x32xf32>
    %141 = vector.extract_strided_slice %138 {offsets = [0, 96], sizes = [8, 32], strides = [1, 1]} : vector<8x128xf32> to vector<8x32xf32>
    %142 = vector.extract_strided_slice %131 {offsets = [0, 64], sizes = [8, 32], strides = [1, 1]} : vector<8x128xf32> to vector<8x32xf32>
    %143 = math.tanh %142 : vector<8x32xf32>
    %144 = arith.mulf %140, %125 : vector<8x32xf32>
    %145 = arith.mulf %139, %143 : vector<8x32xf32>
    %146 = arith.addf %144, %145 : vector<8x32xf32>
    %147 = math.tanh %146 : vector<8x32xf32>
    %148 = arith.mulf %141, %147 : vector<8x32xf32>
    %c48_56 = arith.constant 48 : index
    %c0_57 = arith.constant 0 : index
    %149 = vector.load %arg12[%c48_56, %c0_57] : memref<64x32xf32, #tpu.memory_space<vmem>>, vector<8x32xf32>
    tpu.vector_store %arg12[%c48_56, %c0_57], %148 {strides = array<i32>} : memref<64x32xf32, #tpu.memory_space<vmem>>, vector<8x32xf32>,
    %c56 = arith.constant 56 : index
    %c0_58 = arith.constant 0 : index
    %150 = vector.load %arg11[%c56, %c0_58] : memref<64x128xf32, #tpu.memory_space<vmem>>, vector<8x128xf32>
    %cst_59 = arith.constant dense<0.000000e+00> : vector<8x128xf32>
    %151 = tpu.matmul %148, %7, %cst_59 {dimension_numbers = #tpu.dot_dimension_numbers<[1], [0], [0], [1], [0, 0, 1, 1], [], []>} : vector<8x32xf32>, vector<32x128xf32>, vector<8x128xf32> -> vector<8x128xf32>
    %152 = arith.addf %150, %151 : vector<8x128xf32>
    %cst_60 = arith.constant 5.000000e-01 : f32
    %153 = vector.broadcast %cst_60 : f32 to vector<8x128xf32>
    %154 = arith.mulf %152, %153 : vector<8x128xf32>
    %155 = math.tanh %154 : vector<8x128xf32>
    %cst_61 = arith.constant 5.000000e-01 : f32
    %156 = vector.broadcast %cst_61 : f32 to vector<8x128xf32>
    %157 = arith.mulf %155, %156 : vector<8x128xf32>
    %cst_62 = arith.constant 5.000000e-01 : f32
    %158 = vector.broadcast %cst_62 : f32 to vector<8x128xf32>
    %159 = arith.addf %157, %158 : vector<8x128xf32>
    %160 = vector.extract_strided_slice %159 {offsets = [0, 0], sizes = [8, 32], strides = [1, 1]} : vector<8x128xf32> to vector<8x32xf32>
    %161 = vector.extract_strided_slice %159 {offsets = [0, 32], sizes = [8, 32], strides = [1, 1]} : vector<8x128xf32> to vector<8x32xf32>
    %162 = vector.extract_strided_slice %159 {offsets = [0, 96], sizes = [8, 32], strides = [1, 1]} : vector<8x128xf32> to vector<8x32xf32>
    %163 = vector.extract_strided_slice %152 {offsets = [0, 64], sizes = [8, 32], strides = [1, 1]} : vector<8x128xf32> to vector<8x32xf32>
    %164 = math.tanh %163 : vector<8x32xf32>
    %165 = arith.mulf %161, %146 : vector<8x32xf32>
    %166 = arith.mulf %160, %164 : vector<8x32xf32>
    %167 = arith.addf %165, %166 : vector<8x32xf32>
    %168 = math.tanh %167 : vector<8x32xf32>
    %169 = arith.mulf %162, %168 : vector<8x32xf32>
    %c56_63 = arith.constant 56 : index
    %c0_64 = arith.constant 0 : index
    %170 = vector.load %arg12[%c56_63, %c0_64] : memref<64x32xf32, #tpu.memory_space<vmem>>, vector<8x32xf32>
    tpu.vector_store %arg12[%c56_63, %c0_64], %169 {strides = array<i32>} : memref<64x32xf32, #tpu.memory_space<vmem>>, vector<8x32xf32>,
    %c0_65 = arith.constant 0 : index
    %c0_66 = arith.constant 0 : index
    %171 = vector.load %arg12[%c0_65, %c0_66] : memref<64x32xf32, #tpu.memory_space<vmem>>, vector<64x32xf32>
    %c0_67 = arith.constant 0 : index
    %c0_68 = arith.constant 0 : index
    %c0_69 = arith.constant 0 : index
    %172 = vector.load %arg5[%c0_67, %c0_68, %c0_69] : memref<3x32x128xf32, #tpu.memory_space<vmem>>, vector<1x32x128xf32>
    %173 = vector.shape_cast %172 : vector<1x32x128xf32> to vector<32x128xf32>
    %c0_70 = arith.constant 0 : index
    %c0_71 = arith.constant 0 : index
    %c0_72 = arith.constant 0 : index
    %174 = vector.load %arg7[%c0_70, %c0_71, %c0_72] : memref<3x1x128xf32, #tpu.memory_space<vmem>>, vector<1x1x128xf32>
    %175 = vector.shape_cast %174 : vector<1x1x128xf32> to vector<1x128xf32>
    %cst_73 = arith.constant dense<0.000000e+00> : vector<64x128xf32>
    %176 = tpu.matmul %171, %173, %cst_73 {dimension_numbers = #tpu.dot_dimension_numbers<[1], [0], [0], [1], [0, 0, 1, 1], [], []>} : vector<64x32xf32>, vector<32x128xf32>, vector<64x128xf32> -> vector<64x128xf32>
    %177 = vector.broadcast %175 : vector<1x128xf32> to vector<64x128xf32>
    %178 = arith.addf %176, %177 : vector<64x128xf32>
    %c0_74 = arith.constant 0 : index
    %c0_75 = arith.constant 0 : index
    %179 = vector.load %arg11[%c0_74, %c0_75] : memref<64x128xf32, #tpu.memory_space<vmem>>, vector<64x128xf32>
    tpu.vector_store %arg11[%c0_74, %c0_75], %178 {strides = array<i32>} : memref<64x128xf32, #tpu.memory_space<vmem>>, vector<64x128xf32>,
    %c0_76 = arith.constant 0 : index
    %c0_77 = arith.constant 0 : index
    %c0_78 = arith.constant 0 : index
    %180 = vector.load %arg6[%c0_76, %c0_77, %c0_78] : memref<3x32x128xf32, #tpu.memory_space<vmem>>, vector<1x32x128xf32>
    %181 = vector.shape_cast %180 : vector<1x32x128xf32> to vector<32x128xf32>
    %c0_79 = arith.constant 0 : index
    %c0_80 = arith.constant 0 : index
    %182 = vector.load %arg11[%c0_79, %c0_80] : memref<64x128xf32, #tpu.memory_space<vmem>>, vector<8x128xf32>
    %cst_81 = arith.constant 5.000000e-01 : f32
    %183 = vector.broadcast %cst_81 : f32 to vector<8x128xf32>
    %184 = arith.mulf %182, %183 : vector<8x128xf32>
    %185 = math.tanh %184 : vector<8x128xf32>
    %cst_82 = arith.constant 5.000000e-01 : f32
    %186 = vector.broadcast %cst_82 : f32 to vector<8x128xf32>
    %187 = arith.mulf %185, %186 : vector<8x128xf32>
    %cst_83 = arith.constant 5.000000e-01 : f32
    %188 = vector.broadcast %cst_83 : f32 to vector<8x128xf32>
    %189 = arith.addf %187, %188 : vector<8x128xf32>
    %190 = vector.extract_strided_slice %189 {offsets = [0, 0], sizes = [8, 32], strides = [1, 1]} : vector<8x128xf32> to vector<8x32xf32>
    %191 = vector.extract_strided_slice %189 {offsets = [0, 96], sizes = [8, 32], strides = [1, 1]} : vector<8x128xf32> to vector<8x32xf32>
    %192 = vector.extract_strided_slice %182 {offsets = [0, 64], sizes = [8, 32], strides = [1, 1]} : vector<8x128xf32> to vector<8x32xf32>
    %193 = math.tanh %192 : vector<8x32xf32>
    %194 = arith.mulf %190, %193 : vector<8x32xf32>
    %195 = math.tanh %194 : vector<8x32xf32>
    %196 = arith.mulf %191, %195 : vector<8x32xf32>
    %c0_84 = arith.constant 0 : index
    %c0_85 = arith.constant 0 : index
    %197 = vector.load %arg12[%c0_84, %c0_85] : memref<64x32xf32, #tpu.memory_space<vmem>>, vector<8x32xf32>
    tpu.vector_store %arg12[%c0_84, %c0_85], %196 {strides = array<i32>} : memref<64x32xf32, #tpu.memory_space<vmem>>, vector<8x32xf32>,
    %c8_86 = arith.constant 8 : index
    %c0_87 = arith.constant 0 : index
    %198 = vector.load %arg11[%c8_86, %c0_87] : memref<64x128xf32, #tpu.memory_space<vmem>>, vector<8x128xf32>
    %cst_88 = arith.constant dense<0.000000e+00> : vector<8x128xf32>
    %199 = tpu.matmul %196, %181, %cst_88 {dimension_numbers = #tpu.dot_dimension_numbers<[1], [0], [0], [1], [0, 0, 1, 1], [], []>} : vector<8x32xf32>, vector<32x128xf32>, vector<8x128xf32> -> vector<8x128xf32>
    %200 = arith.addf %198, %199 : vector<8x128xf32>
    %cst_89 = arith.constant 5.000000e-01 : f32
    %201 = vector.broadcast %cst_89 : f32 to vector<8x128xf32>
    %202 = arith.mulf %200, %201 : vector<8x128xf32>
    %203 = math.tanh %202 : vector<8x128xf32>
    %cst_90 = arith.constant 5.000000e-01 : f32
    %204 = vector.broadcast %cst_90 : f32 to vector<8x128xf32>
    %205 = arith.mulf %203, %204 : vector<8x128xf32>
    %cst_91 = arith.constant 5.000000e-01 : f32
    %206 = vector.broadcast %cst_91 : f32 to vector<8x128xf32>
    %207 = arith.addf %205, %206 : vector<8x128xf32>
    %208 = vector.extract_strided_slice %207 {offsets = [0, 0], sizes = [8, 32], strides = [1, 1]} : vector<8x128xf32> to vector<8x32xf32>
    %209 = vector.extract_strided_slice %207 {offsets = [0, 32], sizes = [8, 32], strides = [1, 1]} : vector<8x128xf32> to vector<8x32xf32>
    %210 = vector.extract_strided_slice %207 {offsets = [0, 96], sizes = [8, 32], strides = [1, 1]} : vector<8x128xf32> to vector<8x32xf32>
    %211 = vector.extract_strided_slice %200 {offsets = [0, 64], sizes = [8, 32], strides = [1, 1]} : vector<8x128xf32> to vector<8x32xf32>
    %212 = math.tanh %211 : vector<8x32xf32>
    %213 = arith.mulf %209, %194 : vector<8x32xf32>
    %214 = arith.mulf %208, %212 : vector<8x32xf32>
    %215 = arith.addf %213, %214 : vector<8x32xf32>
    %216 = math.tanh %215 : vector<8x32xf32>
    %217 = arith.mulf %210, %216 : vector<8x32xf32>
    %c8_92 = arith.constant 8 : index
    %c0_93 = arith.constant 0 : index
    %218 = vector.load %arg12[%c8_92, %c0_93] : memref<64x32xf32, #tpu.memory_space<vmem>>, vector<8x32xf32>
    tpu.vector_store %arg12[%c8_92, %c0_93], %217 {strides = array<i32>} : memref<64x32xf32, #tpu.memory_space<vmem>>, vector<8x32xf32>,
    %c16_94 = arith.constant 16 : index
    %c0_95 = arith.constant 0 : index
    %219 = vector.load %arg11[%c16_94, %c0_95] : memref<64x128xf32, #tpu.memory_space<vmem>>, vector<8x128xf32>
    %cst_96 = arith.constant dense<0.000000e+00> : vector<8x128xf32>
    %220 = tpu.matmul %217, %181, %cst_96 {dimension_numbers = #tpu.dot_dimension_numbers<[1], [0], [0], [1], [0, 0, 1, 1], [], []>} : vector<8x32xf32>, vector<32x128xf32>, vector<8x128xf32> -> vector<8x128xf32>
    %221 = arith.addf %219, %220 : vector<8x128xf32>
    %cst_97 = arith.constant 5.000000e-01 : f32
    %222 = vector.broadcast %cst_97 : f32 to vector<8x128xf32>
    %223 = arith.mulf %221, %222 : vector<8x128xf32>
    %224 = math.tanh %223 : vector<8x128xf32>
    %cst_98 = arith.constant 5.000000e-01 : f32
    %225 = vector.broadcast %cst_98 : f32 to vector<8x128xf32>
    %226 = arith.mulf %224, %225 : vector<8x128xf32>
    %cst_99 = arith.constant 5.000000e-01 : f32
    %227 = vector.broadcast %cst_99 : f32 to vector<8x128xf32>
    %228 = arith.addf %226, %227 : vector<8x128xf32>
    %229 = vector.extract_strided_slice %228 {offsets = [0, 0], sizes = [8, 32], strides = [1, 1]} : vector<8x128xf32> to vector<8x32xf32>
    %230 = vector.extract_strided_slice %228 {offsets = [0, 32], sizes = [8, 32], strides = [1, 1]} : vector<8x128xf32> to vector<8x32xf32>
    %231 = vector.extract_strided_slice %228 {offsets = [0, 96], sizes = [8, 32], strides = [1, 1]} : vector<8x128xf32> to vector<8x32xf32>
    %232 = vector.extract_strided_slice %221 {offsets = [0, 64], sizes = [8, 32], strides = [1, 1]} : vector<8x128xf32> to vector<8x32xf32>
    %233 = math.tanh %232 : vector<8x32xf32>
    %234 = arith.mulf %230, %215 : vector<8x32xf32>
    %235 = arith.mulf %229, %233 : vector<8x32xf32>
    %236 = arith.addf %234, %235 : vector<8x32xf32>
    %237 = math.tanh %236 : vector<8x32xf32>
    %238 = arith.mulf %231, %237 : vector<8x32xf32>
    %c16_100 = arith.constant 16 : index
    %c0_101 = arith.constant 0 : index
    %239 = vector.load %arg12[%c16_100, %c0_101] : memref<64x32xf32, #tpu.memory_space<vmem>>, vector<8x32xf32>
    tpu.vector_store %arg12[%c16_100, %c0_101], %238 {strides = array<i32>} : memref<64x32xf32, #tpu.memory_space<vmem>>, vector<8x32xf32>,
    %c24_102 = arith.constant 24 : index
    %c0_103 = arith.constant 0 : index
    %240 = vector.load %arg11[%c24_102, %c0_103] : memref<64x128xf32, #tpu.memory_space<vmem>>, vector<8x128xf32>
    %cst_104 = arith.constant dense<0.000000e+00> : vector<8x128xf32>
    %241 = tpu.matmul %238, %181, %cst_104 {dimension_numbers = #tpu.dot_dimension_numbers<[1], [0], [0], [1], [0, 0, 1, 1], [], []>} : vector<8x32xf32>, vector<32x128xf32>, vector<8x128xf32> -> vector<8x128xf32>
    %242 = arith.addf %240, %241 : vector<8x128xf32>
    %cst_105 = arith.constant 5.000000e-01 : f32
    %243 = vector.broadcast %cst_105 : f32 to vector<8x128xf32>
    %244 = arith.mulf %242, %243 : vector<8x128xf32>
    %245 = math.tanh %244 : vector<8x128xf32>
    %cst_106 = arith.constant 5.000000e-01 : f32
    %246 = vector.broadcast %cst_106 : f32 to vector<8x128xf32>
    %247 = arith.mulf %245, %246 : vector<8x128xf32>
    %cst_107 = arith.constant 5.000000e-01 : f32
    %248 = vector.broadcast %cst_107 : f32 to vector<8x128xf32>
    %249 = arith.addf %247, %248 : vector<8x128xf32>
    %250 = vector.extract_strided_slice %249 {offsets = [0, 0], sizes = [8, 32], strides = [1, 1]} : vector<8x128xf32> to vector<8x32xf32>
    %251 = vector.extract_strided_slice %249 {offsets = [0, 32], sizes = [8, 32], strides = [1, 1]} : vector<8x128xf32> to vector<8x32xf32>
    %252 = vector.extract_strided_slice %249 {offsets = [0, 96], sizes = [8, 32], strides = [1, 1]} : vector<8x128xf32> to vector<8x32xf32>
    %253 = vector.extract_strided_slice %242 {offsets = [0, 64], sizes = [8, 32], strides = [1, 1]} : vector<8x128xf32> to vector<8x32xf32>
    %254 = math.tanh %253 : vector<8x32xf32>
    %255 = arith.mulf %251, %236 : vector<8x32xf32>
    %256 = arith.mulf %250, %254 : vector<8x32xf32>
    %257 = arith.addf %255, %256 : vector<8x32xf32>
    %258 = math.tanh %257 : vector<8x32xf32>
    %259 = arith.mulf %252, %258 : vector<8x32xf32>
    %c24_108 = arith.constant 24 : index
    %c0_109 = arith.constant 0 : index
    %260 = vector.load %arg12[%c24_108, %c0_109] : memref<64x32xf32, #tpu.memory_space<vmem>>, vector<8x32xf32>
    tpu.vector_store %arg12[%c24_108, %c0_109], %259 {strides = array<i32>} : memref<64x32xf32, #tpu.memory_space<vmem>>, vector<8x32xf32>,
    %c32_110 = arith.constant 32 : index
    %c0_111 = arith.constant 0 : index
    %261 = vector.load %arg11[%c32_110, %c0_111] : memref<64x128xf32, #tpu.memory_space<vmem>>, vector<8x128xf32>
    %cst_112 = arith.constant dense<0.000000e+00> : vector<8x128xf32>
    %262 = tpu.matmul %259, %181, %cst_112 {dimension_numbers = #tpu.dot_dimension_numbers<[1], [0], [0], [1], [0, 0, 1, 1], [], []>} : vector<8x32xf32>, vector<32x128xf32>, vector<8x128xf32> -> vector<8x128xf32>
    %263 = arith.addf %261, %262 : vector<8x128xf32>
    %cst_113 = arith.constant 5.000000e-01 : f32
    %264 = vector.broadcast %cst_113 : f32 to vector<8x128xf32>
    %265 = arith.mulf %263, %264 : vector<8x128xf32>
    %266 = math.tanh %265 : vector<8x128xf32>
    %cst_114 = arith.constant 5.000000e-01 : f32
    %267 = vector.broadcast %cst_114 : f32 to vector<8x128xf32>
    %268 = arith.mulf %266, %267 : vector<8x128xf32>
    %cst_115 = arith.constant 5.000000e-01 : f32
    %269 = vector.broadcast %cst_115 : f32 to vector<8x128xf32>
    %270 = arith.addf %268, %269 : vector<8x128xf32>
    %271 = vector.extract_strided_slice %270 {offsets = [0, 0], sizes = [8, 32], strides = [1, 1]} : vector<8x128xf32> to vector<8x32xf32>
    %272 = vector.extract_strided_slice %270 {offsets = [0, 32], sizes = [8, 32], strides = [1, 1]} : vector<8x128xf32> to vector<8x32xf32>
    %273 = vector.extract_strided_slice %270 {offsets = [0, 96], sizes = [8, 32], strides = [1, 1]} : vector<8x128xf32> to vector<8x32xf32>
    %274 = vector.extract_strided_slice %263 {offsets = [0, 64], sizes = [8, 32], strides = [1, 1]} : vector<8x128xf32> to vector<8x32xf32>
    %275 = math.tanh %274 : vector<8x32xf32>
    %276 = arith.mulf %272, %257 : vector<8x32xf32>
    %277 = arith.mulf %271, %275 : vector<8x32xf32>
    %278 = arith.addf %276, %277 : vector<8x32xf32>
    %279 = math.tanh %278 : vector<8x32xf32>
    %280 = arith.mulf %273, %279 : vector<8x32xf32>
    %c32_116 = arith.constant 32 : index
    %c0_117 = arith.constant 0 : index
    %281 = vector.load %arg12[%c32_116, %c0_117] : memref<64x32xf32, #tpu.memory_space<vmem>>, vector<8x32xf32>
    tpu.vector_store %arg12[%c32_116, %c0_117], %280 {strides = array<i32>} : memref<64x32xf32, #tpu.memory_space<vmem>>, vector<8x32xf32>,
    %c40_118 = arith.constant 40 : index
    %c0_119 = arith.constant 0 : index
    %282 = vector.load %arg11[%c40_118, %c0_119] : memref<64x128xf32, #tpu.memory_space<vmem>>, vector<8x128xf32>
    %cst_120 = arith.constant dense<0.000000e+00> : vector<8x128xf32>
    %283 = tpu.matmul %280, %181, %cst_120 {dimension_numbers = #tpu.dot_dimension_numbers<[1], [0], [0], [1], [0, 0, 1, 1], [], []>} : vector<8x32xf32>, vector<32x128xf32>, vector<8x128xf32> -> vector<8x128xf32>
    %284 = arith.addf %282, %283 : vector<8x128xf32>
    %cst_121 = arith.constant 5.000000e-01 : f32
    %285 = vector.broadcast %cst_121 : f32 to vector<8x128xf32>
    %286 = arith.mulf %284, %285 : vector<8x128xf32>
    %287 = math.tanh %286 : vector<8x128xf32>
    %cst_122 = arith.constant 5.000000e-01 : f32
    %288 = vector.broadcast %cst_122 : f32 to vector<8x128xf32>
    %289 = arith.mulf %287, %288 : vector<8x128xf32>
    %cst_123 = arith.constant 5.000000e-01 : f32
    %290 = vector.broadcast %cst_123 : f32 to vector<8x128xf32>
    %291 = arith.addf %289, %290 : vector<8x128xf32>
    %292 = vector.extract_strided_slice %291 {offsets = [0, 0], sizes = [8, 32], strides = [1, 1]} : vector<8x128xf32> to vector<8x32xf32>
    %293 = vector.extract_strided_slice %291 {offsets = [0, 32], sizes = [8, 32], strides = [1, 1]} : vector<8x128xf32> to vector<8x32xf32>
    %294 = vector.extract_strided_slice %291 {offsets = [0, 96], sizes = [8, 32], strides = [1, 1]} : vector<8x128xf32> to vector<8x32xf32>
    %295 = vector.extract_strided_slice %284 {offsets = [0, 64], sizes = [8, 32], strides = [1, 1]} : vector<8x128xf32> to vector<8x32xf32>
    %296 = math.tanh %295 : vector<8x32xf32>
    %297 = arith.mulf %293, %278 : vector<8x32xf32>
    %298 = arith.mulf %292, %296 : vector<8x32xf32>
    %299 = arith.addf %297, %298 : vector<8x32xf32>
    %300 = math.tanh %299 : vector<8x32xf32>
    %301 = arith.mulf %294, %300 : vector<8x32xf32>
    %c40_124 = arith.constant 40 : index
    %c0_125 = arith.constant 0 : index
    %302 = vector.load %arg12[%c40_124, %c0_125] : memref<64x32xf32, #tpu.memory_space<vmem>>, vector<8x32xf32>
    tpu.vector_store %arg12[%c40_124, %c0_125], %301 {strides = array<i32>} : memref<64x32xf32, #tpu.memory_space<vmem>>, vector<8x32xf32>,
    %c48_126 = arith.constant 48 : index
    %c0_127 = arith.constant 0 : index
    %303 = vector.load %arg11[%c48_126, %c0_127] : memref<64x128xf32, #tpu.memory_space<vmem>>, vector<8x128xf32>
    %cst_128 = arith.constant dense<0.000000e+00> : vector<8x128xf32>
    %304 = tpu.matmul %301, %181, %cst_128 {dimension_numbers = #tpu.dot_dimension_numbers<[1], [0], [0], [1], [0, 0, 1, 1], [], []>} : vector<8x32xf32>, vector<32x128xf32>, vector<8x128xf32> -> vector<8x128xf32>
    %305 = arith.addf %303, %304 : vector<8x128xf32>
    %cst_129 = arith.constant 5.000000e-01 : f32
    %306 = vector.broadcast %cst_129 : f32 to vector<8x128xf32>
    %307 = arith.mulf %305, %306 : vector<8x128xf32>
    %308 = math.tanh %307 : vector<8x128xf32>
    %cst_130 = arith.constant 5.000000e-01 : f32
    %309 = vector.broadcast %cst_130 : f32 to vector<8x128xf32>
    %310 = arith.mulf %308, %309 : vector<8x128xf32>
    %cst_131 = arith.constant 5.000000e-01 : f32
    %311 = vector.broadcast %cst_131 : f32 to vector<8x128xf32>
    %312 = arith.addf %310, %311 : vector<8x128xf32>
    %313 = vector.extract_strided_slice %312 {offsets = [0, 0], sizes = [8, 32], strides = [1, 1]} : vector<8x128xf32> to vector<8x32xf32>
    %314 = vector.extract_strided_slice %312 {offsets = [0, 32], sizes = [8, 32], strides = [1, 1]} : vector<8x128xf32> to vector<8x32xf32>
    %315 = vector.extract_strided_slice %312 {offsets = [0, 96], sizes = [8, 32], strides = [1, 1]} : vector<8x128xf32> to vector<8x32xf32>
    %316 = vector.extract_strided_slice %305 {offsets = [0, 64], sizes = [8, 32], strides = [1, 1]} : vector<8x128xf32> to vector<8x32xf32>
    %317 = math.tanh %316 : vector<8x32xf32>
    %318 = arith.mulf %314, %299 : vector<8x32xf32>
    %319 = arith.mulf %313, %317 : vector<8x32xf32>
    %320 = arith.addf %318, %319 : vector<8x32xf32>
    %321 = math.tanh %320 : vector<8x32xf32>
    %322 = arith.mulf %315, %321 : vector<8x32xf32>
    %c48_132 = arith.constant 48 : index
    %c0_133 = arith.constant 0 : index
    %323 = vector.load %arg12[%c48_132, %c0_133] : memref<64x32xf32, #tpu.memory_space<vmem>>, vector<8x32xf32>
    tpu.vector_store %arg12[%c48_132, %c0_133], %322 {strides = array<i32>} : memref<64x32xf32, #tpu.memory_space<vmem>>, vector<8x32xf32>,
    %c56_134 = arith.constant 56 : index
    %c0_135 = arith.constant 0 : index
    %324 = vector.load %arg11[%c56_134, %c0_135] : memref<64x128xf32, #tpu.memory_space<vmem>>, vector<8x128xf32>
    %cst_136 = arith.constant dense<0.000000e+00> : vector<8x128xf32>
    %325 = tpu.matmul %322, %181, %cst_136 {dimension_numbers = #tpu.dot_dimension_numbers<[1], [0], [0], [1], [0, 0, 1, 1], [], []>} : vector<8x32xf32>, vector<32x128xf32>, vector<8x128xf32> -> vector<8x128xf32>
    %326 = arith.addf %324, %325 : vector<8x128xf32>
    %cst_137 = arith.constant 5.000000e-01 : f32
    %327 = vector.broadcast %cst_137 : f32 to vector<8x128xf32>
    %328 = arith.mulf %326, %327 : vector<8x128xf32>
    %329 = math.tanh %328 : vector<8x128xf32>
    %cst_138 = arith.constant 5.000000e-01 : f32
    %330 = vector.broadcast %cst_138 : f32 to vector<8x128xf32>
    %331 = arith.mulf %329, %330 : vector<8x128xf32>
    %cst_139 = arith.constant 5.000000e-01 : f32
    %332 = vector.broadcast %cst_139 : f32 to vector<8x128xf32>
    %333 = arith.addf %331, %332 : vector<8x128xf32>
    %334 = vector.extract_strided_slice %333 {offsets = [0, 0], sizes = [8, 32], strides = [1, 1]} : vector<8x128xf32> to vector<8x32xf32>
    %335 = vector.extract_strided_slice %333 {offsets = [0, 32], sizes = [8, 32], strides = [1, 1]} : vector<8x128xf32> to vector<8x32xf32>
    %336 = vector.extract_strided_slice %333 {offsets = [0, 96], sizes = [8, 32], strides = [1, 1]} : vector<8x128xf32> to vector<8x32xf32>
    %337 = vector.extract_strided_slice %326 {offsets = [0, 64], sizes = [8, 32], strides = [1, 1]} : vector<8x128xf32> to vector<8x32xf32>
    %338 = math.tanh %337 : vector<8x32xf32>
    %339 = arith.mulf %335, %320 : vector<8x32xf32>
    %340 = arith.mulf %334, %338 : vector<8x32xf32>
    %341 = arith.addf %339, %340 : vector<8x32xf32>
    %342 = math.tanh %341 : vector<8x32xf32>
    %343 = arith.mulf %336, %342 : vector<8x32xf32>
    %c56_140 = arith.constant 56 : index
    %c0_141 = arith.constant 0 : index
    %344 = vector.load %arg12[%c56_140, %c0_141] : memref<64x32xf32, #tpu.memory_space<vmem>>, vector<8x32xf32>
    tpu.vector_store %arg12[%c56_140, %c0_141], %343 {strides = array<i32>} : memref<64x32xf32, #tpu.memory_space<vmem>>, vector<8x32xf32>,
    %c0_142 = arith.constant 0 : index
    %c0_143 = arith.constant 0 : index
    %345 = vector.load %arg12[%c0_142, %c0_143] : memref<64x32xf32, #tpu.memory_space<vmem>>, vector<64x32xf32>
    %c1 = arith.constant 1 : index
    %c0_144 = arith.constant 0 : index
    %c0_145 = arith.constant 0 : index
    %346 = vector.load %arg5[%c1, %c0_144, %c0_145] : memref<3x32x128xf32, #tpu.memory_space<vmem>>, vector<1x32x128xf32>
    %347 = vector.shape_cast %346 : vector<1x32x128xf32> to vector<32x128xf32>
    %c1_146 = arith.constant 1 : index
    %c0_147 = arith.constant 0 : index
    %c0_148 = arith.constant 0 : index
    %348 = vector.load %arg7[%c1_146, %c0_147, %c0_148] : memref<3x1x128xf32, #tpu.memory_space<vmem>>, vector<1x1x128xf32>
    %349 = vector.shape_cast %348 : vector<1x1x128xf32> to vector<1x128xf32>
    %cst_149 = arith.constant dense<0.000000e+00> : vector<64x128xf32>
    %350 = tpu.matmul %345, %347, %cst_149 {dimension_numbers = #tpu.dot_dimension_numbers<[1], [0], [0], [1], [0, 0, 1, 1], [], []>} : vector<64x32xf32>, vector<32x128xf32>, vector<64x128xf32> -> vector<64x128xf32>
    %351 = vector.broadcast %349 : vector<1x128xf32> to vector<64x128xf32>
    %352 = arith.addf %350, %351 : vector<64x128xf32>
    %c0_150 = arith.constant 0 : index
    %c0_151 = arith.constant 0 : index
    %353 = vector.load %arg11[%c0_150, %c0_151] : memref<64x128xf32, #tpu.memory_space<vmem>>, vector<64x128xf32>
    tpu.vector_store %arg11[%c0_150, %c0_151], %352 {strides = array<i32>} : memref<64x128xf32, #tpu.memory_space<vmem>>, vector<64x128xf32>,
    %c1_152 = arith.constant 1 : index
    %c0_153 = arith.constant 0 : index
    %c0_154 = arith.constant 0 : index
    %354 = vector.load %arg6[%c1_152, %c0_153, %c0_154] : memref<3x32x128xf32, #tpu.memory_space<vmem>>, vector<1x32x128xf32>
    %355 = vector.shape_cast %354 : vector<1x32x128xf32> to vector<32x128xf32>
    %c0_155 = arith.constant 0 : index
    %c0_156 = arith.constant 0 : index
    %356 = vector.load %arg11[%c0_155, %c0_156] : memref<64x128xf32, #tpu.memory_space<vmem>>, vector<8x128xf32>
    %cst_157 = arith.constant 5.000000e-01 : f32
    %357 = vector.broadcast %cst_157 : f32 to vector<8x128xf32>
    %358 = arith.mulf %356, %357 : vector<8x128xf32>
    %359 = math.tanh %358 : vector<8x128xf32>
    %cst_158 = arith.constant 5.000000e-01 : f32
    %360 = vector.broadcast %cst_158 : f32 to vector<8x128xf32>
    %361 = arith.mulf %359, %360 : vector<8x128xf32>
    %cst_159 = arith.constant 5.000000e-01 : f32
    %362 = vector.broadcast %cst_159 : f32 to vector<8x128xf32>
    %363 = arith.addf %361, %362 : vector<8x128xf32>
    %364 = vector.extract_strided_slice %363 {offsets = [0, 0], sizes = [8, 32], strides = [1, 1]} : vector<8x128xf32> to vector<8x32xf32>
    %365 = vector.extract_strided_slice %363 {offsets = [0, 96], sizes = [8, 32], strides = [1, 1]} : vector<8x128xf32> to vector<8x32xf32>
    %366 = vector.extract_strided_slice %356 {offsets = [0, 64], sizes = [8, 32], strides = [1, 1]} : vector<8x128xf32> to vector<8x32xf32>
    %367 = math.tanh %366 : vector<8x32xf32>
    %368 = arith.mulf %364, %367 : vector<8x32xf32>
    %369 = math.tanh %368 : vector<8x32xf32>
    %370 = arith.mulf %365, %369 : vector<8x32xf32>
    %c0_160 = arith.constant 0 : index
    %c0_161 = arith.constant 0 : index
    %371 = vector.load %arg12[%c0_160, %c0_161] : memref<64x32xf32, #tpu.memory_space<vmem>>, vector<8x32xf32>
    tpu.vector_store %arg12[%c0_160, %c0_161], %370 {strides = array<i32>} : memref<64x32xf32, #tpu.memory_space<vmem>>, vector<8x32xf32>,
    %c8_162 = arith.constant 8 : index
    %c0_163 = arith.constant 0 : index
    %372 = vector.load %arg11[%c8_162, %c0_163] : memref<64x128xf32, #tpu.memory_space<vmem>>, vector<8x128xf32>
    %cst_164 = arith.constant dense<0.000000e+00> : vector<8x128xf32>
    %373 = tpu.matmul %370, %355, %cst_164 {dimension_numbers = #tpu.dot_dimension_numbers<[1], [0], [0], [1], [0, 0, 1, 1], [], []>} : vector<8x32xf32>, vector<32x128xf32>, vector<8x128xf32> -> vector<8x128xf32>
    %374 = arith.addf %372, %373 : vector<8x128xf32>
    %cst_165 = arith.constant 5.000000e-01 : f32
    %375 = vector.broadcast %cst_165 : f32 to vector<8x128xf32>
    %376 = arith.mulf %374, %375 : vector<8x128xf32>
    %377 = math.tanh %376 : vector<8x128xf32>
    %cst_166 = arith.constant 5.000000e-01 : f32
    %378 = vector.broadcast %cst_166 : f32 to vector<8x128xf32>
    %379 = arith.mulf %377, %378 : vector<8x128xf32>
    %cst_167 = arith.constant 5.000000e-01 : f32
    %380 = vector.broadcast %cst_167 : f32 to vector<8x128xf32>
    %381 = arith.addf %379, %380 : vector<8x128xf32>
    %382 = vector.extract_strided_slice %381 {offsets = [0, 0], sizes = [8, 32], strides = [1, 1]} : vector<8x128xf32> to vector<8x32xf32>
    %383 = vector.extract_strided_slice %381 {offsets = [0, 32], sizes = [8, 32], strides = [1, 1]} : vector<8x128xf32> to vector<8x32xf32>
    %384 = vector.extract_strided_slice %381 {offsets = [0, 96], sizes = [8, 32], strides = [1, 1]} : vector<8x128xf32> to vector<8x32xf32>
    %385 = vector.extract_strided_slice %374 {offsets = [0, 64], sizes = [8, 32], strides = [1, 1]} : vector<8x128xf32> to vector<8x32xf32>
    %386 = math.tanh %385 : vector<8x32xf32>
    %387 = arith.mulf %383, %368 : vector<8x32xf32>
    %388 = arith.mulf %382, %386 : vector<8x32xf32>
    %389 = arith.addf %387, %388 : vector<8x32xf32>
    %390 = math.tanh %389 : vector<8x32xf32>
    %391 = arith.mulf %384, %390 : vector<8x32xf32>
    %c8_168 = arith.constant 8 : index
    %c0_169 = arith.constant 0 : index
    %392 = vector.load %arg12[%c8_168, %c0_169] : memref<64x32xf32, #tpu.memory_space<vmem>>, vector<8x32xf32>
    tpu.vector_store %arg12[%c8_168, %c0_169], %391 {strides = array<i32>} : memref<64x32xf32, #tpu.memory_space<vmem>>, vector<8x32xf32>,
    %c16_170 = arith.constant 16 : index
    %c0_171 = arith.constant 0 : index
    %393 = vector.load %arg11[%c16_170, %c0_171] : memref<64x128xf32, #tpu.memory_space<vmem>>, vector<8x128xf32>
    %cst_172 = arith.constant dense<0.000000e+00> : vector<8x128xf32>
    %394 = tpu.matmul %391, %355, %cst_172 {dimension_numbers = #tpu.dot_dimension_numbers<[1], [0], [0], [1], [0, 0, 1, 1], [], []>} : vector<8x32xf32>, vector<32x128xf32>, vector<8x128xf32> -> vector<8x128xf32>
    %395 = arith.addf %393, %394 : vector<8x128xf32>
    %cst_173 = arith.constant 5.000000e-01 : f32
    %396 = vector.broadcast %cst_173 : f32 to vector<8x128xf32>
    %397 = arith.mulf %395, %396 : vector<8x128xf32>
    %398 = math.tanh %397 : vector<8x128xf32>
    %cst_174 = arith.constant 5.000000e-01 : f32
    %399 = vector.broadcast %cst_174 : f32 to vector<8x128xf32>
    %400 = arith.mulf %398, %399 : vector<8x128xf32>
    %cst_175 = arith.constant 5.000000e-01 : f32
    %401 = vector.broadcast %cst_175 : f32 to vector<8x128xf32>
    %402 = arith.addf %400, %401 : vector<8x128xf32>
    %403 = vector.extract_strided_slice %402 {offsets = [0, 0], sizes = [8, 32], strides = [1, 1]} : vector<8x128xf32> to vector<8x32xf32>
    %404 = vector.extract_strided_slice %402 {offsets = [0, 32], sizes = [8, 32], strides = [1, 1]} : vector<8x128xf32> to vector<8x32xf32>
    %405 = vector.extract_strided_slice %402 {offsets = [0, 96], sizes = [8, 32], strides = [1, 1]} : vector<8x128xf32> to vector<8x32xf32>
    %406 = vector.extract_strided_slice %395 {offsets = [0, 64], sizes = [8, 32], strides = [1, 1]} : vector<8x128xf32> to vector<8x32xf32>
    %407 = math.tanh %406 : vector<8x32xf32>
    %408 = arith.mulf %404, %389 : vector<8x32xf32>
    %409 = arith.mulf %403, %407 : vector<8x32xf32>
    %410 = arith.addf %408, %409 : vector<8x32xf32>
    %411 = math.tanh %410 : vector<8x32xf32>
    %412 = arith.mulf %405, %411 : vector<8x32xf32>
    %c16_176 = arith.constant 16 : index
    %c0_177 = arith.constant 0 : index
    %413 = vector.load %arg12[%c16_176, %c0_177] : memref<64x32xf32, #tpu.memory_space<vmem>>, vector<8x32xf32>
    tpu.vector_store %arg12[%c16_176, %c0_177], %412 {strides = array<i32>} : memref<64x32xf32, #tpu.memory_space<vmem>>, vector<8x32xf32>,
    %c24_178 = arith.constant 24 : index
    %c0_179 = arith.constant 0 : index
    %414 = vector.load %arg11[%c24_178, %c0_179] : memref<64x128xf32, #tpu.memory_space<vmem>>, vector<8x128xf32>
    %cst_180 = arith.constant dense<0.000000e+00> : vector<8x128xf32>
    %415 = tpu.matmul %412, %355, %cst_180 {dimension_numbers = #tpu.dot_dimension_numbers<[1], [0], [0], [1], [0, 0, 1, 1], [], []>} : vector<8x32xf32>, vector<32x128xf32>, vector<8x128xf32> -> vector<8x128xf32>
    %416 = arith.addf %414, %415 : vector<8x128xf32>
    %cst_181 = arith.constant 5.000000e-01 : f32
    %417 = vector.broadcast %cst_181 : f32 to vector<8x128xf32>
    %418 = arith.mulf %416, %417 : vector<8x128xf32>
    %419 = math.tanh %418 : vector<8x128xf32>
    %cst_182 = arith.constant 5.000000e-01 : f32
    %420 = vector.broadcast %cst_182 : f32 to vector<8x128xf32>
    %421 = arith.mulf %419, %420 : vector<8x128xf32>
    %cst_183 = arith.constant 5.000000e-01 : f32
    %422 = vector.broadcast %cst_183 : f32 to vector<8x128xf32>
    %423 = arith.addf %421, %422 : vector<8x128xf32>
    %424 = vector.extract_strided_slice %423 {offsets = [0, 0], sizes = [8, 32], strides = [1, 1]} : vector<8x128xf32> to vector<8x32xf32>
    %425 = vector.extract_strided_slice %423 {offsets = [0, 32], sizes = [8, 32], strides = [1, 1]} : vector<8x128xf32> to vector<8x32xf32>
    %426 = vector.extract_strided_slice %423 {offsets = [0, 96], sizes = [8, 32], strides = [1, 1]} : vector<8x128xf32> to vector<8x32xf32>
    %427 = vector.extract_strided_slice %416 {offsets = [0, 64], sizes = [8, 32], strides = [1, 1]} : vector<8x128xf32> to vector<8x32xf32>
    %428 = math.tanh %427 : vector<8x32xf32>
    %429 = arith.mulf %425, %410 : vector<8x32xf32>
    %430 = arith.mulf %424, %428 : vector<8x32xf32>
    %431 = arith.addf %429, %430 : vector<8x32xf32>
    %432 = math.tanh %431 : vector<8x32xf32>
    %433 = arith.mulf %426, %432 : vector<8x32xf32>
    %c24_184 = arith.constant 24 : index
    %c0_185 = arith.constant 0 : index
    %434 = vector.load %arg12[%c24_184, %c0_185] : memref<64x32xf32, #tpu.memory_space<vmem>>, vector<8x32xf32>
    tpu.vector_store %arg12[%c24_184, %c0_185], %433 {strides = array<i32>} : memref<64x32xf32, #tpu.memory_space<vmem>>, vector<8x32xf32>,
    %c32_186 = arith.constant 32 : index
    %c0_187 = arith.constant 0 : index
    %435 = vector.load %arg11[%c32_186, %c0_187] : memref<64x128xf32, #tpu.memory_space<vmem>>, vector<8x128xf32>
    %cst_188 = arith.constant dense<0.000000e+00> : vector<8x128xf32>
    %436 = tpu.matmul %433, %355, %cst_188 {dimension_numbers = #tpu.dot_dimension_numbers<[1], [0], [0], [1], [0, 0, 1, 1], [], []>} : vector<8x32xf32>, vector<32x128xf32>, vector<8x128xf32> -> vector<8x128xf32>
    %437 = arith.addf %435, %436 : vector<8x128xf32>
    %cst_189 = arith.constant 5.000000e-01 : f32
    %438 = vector.broadcast %cst_189 : f32 to vector<8x128xf32>
    %439 = arith.mulf %437, %438 : vector<8x128xf32>
    %440 = math.tanh %439 : vector<8x128xf32>
    %cst_190 = arith.constant 5.000000e-01 : f32
    %441 = vector.broadcast %cst_190 : f32 to vector<8x128xf32>
    %442 = arith.mulf %440, %441 : vector<8x128xf32>
    %cst_191 = arith.constant 5.000000e-01 : f32
    %443 = vector.broadcast %cst_191 : f32 to vector<8x128xf32>
    %444 = arith.addf %442, %443 : vector<8x128xf32>
    %445 = vector.extract_strided_slice %444 {offsets = [0, 0], sizes = [8, 32], strides = [1, 1]} : vector<8x128xf32> to vector<8x32xf32>
    %446 = vector.extract_strided_slice %444 {offsets = [0, 32], sizes = [8, 32], strides = [1, 1]} : vector<8x128xf32> to vector<8x32xf32>
    %447 = vector.extract_strided_slice %444 {offsets = [0, 96], sizes = [8, 32], strides = [1, 1]} : vector<8x128xf32> to vector<8x32xf32>
    %448 = vector.extract_strided_slice %437 {offsets = [0, 64], sizes = [8, 32], strides = [1, 1]} : vector<8x128xf32> to vector<8x32xf32>
    %449 = math.tanh %448 : vector<8x32xf32>
    %450 = arith.mulf %446, %431 : vector<8x32xf32>
    %451 = arith.mulf %445, %449 : vector<8x32xf32>
    %452 = arith.addf %450, %451 : vector<8x32xf32>
    %453 = math.tanh %452 : vector<8x32xf32>
    %454 = arith.mulf %447, %453 : vector<8x32xf32>
    %c32_192 = arith.constant 32 : index
    %c0_193 = arith.constant 0 : index
    %455 = vector.load %arg12[%c32_192, %c0_193] : memref<64x32xf32, #tpu.memory_space<vmem>>, vector<8x32xf32>
    tpu.vector_store %arg12[%c32_192, %c0_193], %454 {strides = array<i32>} : memref<64x32xf32, #tpu.memory_space<vmem>>, vector<8x32xf32>,
    %c40_194 = arith.constant 40 : index
    %c0_195 = arith.constant 0 : index
    %456 = vector.load %arg11[%c40_194, %c0_195] : memref<64x128xf32, #tpu.memory_space<vmem>>, vector<8x128xf32>
    %cst_196 = arith.constant dense<0.000000e+00> : vector<8x128xf32>
    %457 = tpu.matmul %454, %355, %cst_196 {dimension_numbers = #tpu.dot_dimension_numbers<[1], [0], [0], [1], [0, 0, 1, 1], [], []>} : vector<8x32xf32>, vector<32x128xf32>, vector<8x128xf32> -> vector<8x128xf32>
    %458 = arith.addf %456, %457 : vector<8x128xf32>
    %cst_197 = arith.constant 5.000000e-01 : f32
    %459 = vector.broadcast %cst_197 : f32 to vector<8x128xf32>
    %460 = arith.mulf %458, %459 : vector<8x128xf32>
    %461 = math.tanh %460 : vector<8x128xf32>
    %cst_198 = arith.constant 5.000000e-01 : f32
    %462 = vector.broadcast %cst_198 : f32 to vector<8x128xf32>
    %463 = arith.mulf %461, %462 : vector<8x128xf32>
    %cst_199 = arith.constant 5.000000e-01 : f32
    %464 = vector.broadcast %cst_199 : f32 to vector<8x128xf32>
    %465 = arith.addf %463, %464 : vector<8x128xf32>
    %466 = vector.extract_strided_slice %465 {offsets = [0, 0], sizes = [8, 32], strides = [1, 1]} : vector<8x128xf32> to vector<8x32xf32>
    %467 = vector.extract_strided_slice %465 {offsets = [0, 32], sizes = [8, 32], strides = [1, 1]} : vector<8x128xf32> to vector<8x32xf32>
    %468 = vector.extract_strided_slice %465 {offsets = [0, 96], sizes = [8, 32], strides = [1, 1]} : vector<8x128xf32> to vector<8x32xf32>
    %469 = vector.extract_strided_slice %458 {offsets = [0, 64], sizes = [8, 32], strides = [1, 1]} : vector<8x128xf32> to vector<8x32xf32>
    %470 = math.tanh %469 : vector<8x32xf32>
    %471 = arith.mulf %467, %452 : vector<8x32xf32>
    %472 = arith.mulf %466, %470 : vector<8x32xf32>
    %473 = arith.addf %471, %472 : vector<8x32xf32>
    %474 = math.tanh %473 : vector<8x32xf32>
    %475 = arith.mulf %468, %474 : vector<8x32xf32>
    %c40_200 = arith.constant 40 : index
    %c0_201 = arith.constant 0 : index
    %476 = vector.load %arg12[%c40_200, %c0_201] : memref<64x32xf32, #tpu.memory_space<vmem>>, vector<8x32xf32>
    tpu.vector_store %arg12[%c40_200, %c0_201], %475 {strides = array<i32>} : memref<64x32xf32, #tpu.memory_space<vmem>>, vector<8x32xf32>,
    %c48_202 = arith.constant 48 : index
    %c0_203 = arith.constant 0 : index
    %477 = vector.load %arg11[%c48_202, %c0_203] : memref<64x128xf32, #tpu.memory_space<vmem>>, vector<8x128xf32>
    %cst_204 = arith.constant dense<0.000000e+00> : vector<8x128xf32>
    %478 = tpu.matmul %475, %355, %cst_204 {dimension_numbers = #tpu.dot_dimension_numbers<[1], [0], [0], [1], [0, 0, 1, 1], [], []>} : vector<8x32xf32>, vector<32x128xf32>, vector<8x128xf32> -> vector<8x128xf32>
    %479 = arith.addf %477, %478 : vector<8x128xf32>
    %cst_205 = arith.constant 5.000000e-01 : f32
    %480 = vector.broadcast %cst_205 : f32 to vector<8x128xf32>
    %481 = arith.mulf %479, %480 : vector<8x128xf32>
    %482 = math.tanh %481 : vector<8x128xf32>
    %cst_206 = arith.constant 5.000000e-01 : f32
    %483 = vector.broadcast %cst_206 : f32 to vector<8x128xf32>
    %484 = arith.mulf %482, %483 : vector<8x128xf32>
    %cst_207 = arith.constant 5.000000e-01 : f32
    %485 = vector.broadcast %cst_207 : f32 to vector<8x128xf32>
    %486 = arith.addf %484, %485 : vector<8x128xf32>
    %487 = vector.extract_strided_slice %486 {offsets = [0, 0], sizes = [8, 32], strides = [1, 1]} : vector<8x128xf32> to vector<8x32xf32>
    %488 = vector.extract_strided_slice %486 {offsets = [0, 32], sizes = [8, 32], strides = [1, 1]} : vector<8x128xf32> to vector<8x32xf32>
    %489 = vector.extract_strided_slice %486 {offsets = [0, 96], sizes = [8, 32], strides = [1, 1]} : vector<8x128xf32> to vector<8x32xf32>
    %490 = vector.extract_strided_slice %479 {offsets = [0, 64], sizes = [8, 32], strides = [1, 1]} : vector<8x128xf32> to vector<8x32xf32>
    %491 = math.tanh %490 : vector<8x32xf32>
    %492 = arith.mulf %488, %473 : vector<8x32xf32>
    %493 = arith.mulf %487, %491 : vector<8x32xf32>
    %494 = arith.addf %492, %493 : vector<8x32xf32>
    %495 = math.tanh %494 : vector<8x32xf32>
    %496 = arith.mulf %489, %495 : vector<8x32xf32>
    %c48_208 = arith.constant 48 : index
    %c0_209 = arith.constant 0 : index
    %497 = vector.load %arg12[%c48_208, %c0_209] : memref<64x32xf32, #tpu.memory_space<vmem>>, vector<8x32xf32>
    tpu.vector_store %arg12[%c48_208, %c0_209], %496 {strides = array<i32>} : memref<64x32xf32, #tpu.memory_space<vmem>>, vector<8x32xf32>,
    %c56_210 = arith.constant 56 : index
    %c0_211 = arith.constant 0 : index
    %498 = vector.load %arg11[%c56_210, %c0_211] : memref<64x128xf32, #tpu.memory_space<vmem>>, vector<8x128xf32>
    %cst_212 = arith.constant dense<0.000000e+00> : vector<8x128xf32>
    %499 = tpu.matmul %496, %355, %cst_212 {dimension_numbers = #tpu.dot_dimension_numbers<[1], [0], [0], [1], [0, 0, 1, 1], [], []>} : vector<8x32xf32>, vector<32x128xf32>, vector<8x128xf32> -> vector<8x128xf32>
    %500 = arith.addf %498, %499 : vector<8x128xf32>
    %cst_213 = arith.constant 5.000000e-01 : f32
    %501 = vector.broadcast %cst_213 : f32 to vector<8x128xf32>
    %502 = arith.mulf %500, %501 : vector<8x128xf32>
    %503 = math.tanh %502 : vector<8x128xf32>
    %cst_214 = arith.constant 5.000000e-01 : f32
    %504 = vector.broadcast %cst_214 : f32 to vector<8x128xf32>
    %505 = arith.mulf %503, %504 : vector<8x128xf32>
    %cst_215 = arith.constant 5.000000e-01 : f32
    %506 = vector.broadcast %cst_215 : f32 to vector<8x128xf32>
    %507 = arith.addf %505, %506 : vector<8x128xf32>
    %508 = vector.extract_strided_slice %507 {offsets = [0, 0], sizes = [8, 32], strides = [1, 1]} : vector<8x128xf32> to vector<8x32xf32>
    %509 = vector.extract_strided_slice %507 {offsets = [0, 32], sizes = [8, 32], strides = [1, 1]} : vector<8x128xf32> to vector<8x32xf32>
    %510 = vector.extract_strided_slice %507 {offsets = [0, 96], sizes = [8, 32], strides = [1, 1]} : vector<8x128xf32> to vector<8x32xf32>
    %511 = vector.extract_strided_slice %500 {offsets = [0, 64], sizes = [8, 32], strides = [1, 1]} : vector<8x128xf32> to vector<8x32xf32>
    %512 = math.tanh %511 : vector<8x32xf32>
    %513 = arith.mulf %509, %494 : vector<8x32xf32>
    %514 = arith.mulf %508, %512 : vector<8x32xf32>
    %515 = arith.addf %513, %514 : vector<8x32xf32>
    %516 = math.tanh %515 : vector<8x32xf32>
    %517 = arith.mulf %510, %516 : vector<8x32xf32>
    %c56_216 = arith.constant 56 : index
    %c0_217 = arith.constant 0 : index
    %518 = vector.load %arg12[%c56_216, %c0_217] : memref<64x32xf32, #tpu.memory_space<vmem>>, vector<8x32xf32>
    tpu.vector_store %arg12[%c56_216, %c0_217], %517 {strides = array<i32>} : memref<64x32xf32, #tpu.memory_space<vmem>>, vector<8x32xf32>,
    %c0_218 = arith.constant 0 : index
    %c0_219 = arith.constant 0 : index
    %519 = vector.load %arg12[%c0_218, %c0_219] : memref<64x32xf32, #tpu.memory_space<vmem>>, vector<64x32xf32>
    %c2 = arith.constant 2 : index
    %c0_220 = arith.constant 0 : index
    %c0_221 = arith.constant 0 : index
    %520 = vector.load %arg5[%c2, %c0_220, %c0_221] : memref<3x32x128xf32, #tpu.memory_space<vmem>>, vector<1x32x128xf32>
    %521 = vector.shape_cast %520 : vector<1x32x128xf32> to vector<32x128xf32>
    %c2_222 = arith.constant 2 : index
    %c0_223 = arith.constant 0 : index
    %c0_224 = arith.constant 0 : index
    %522 = vector.load %arg7[%c2_222, %c0_223, %c0_224] : memref<3x1x128xf32, #tpu.memory_space<vmem>>, vector<1x1x128xf32>
    %523 = vector.shape_cast %522 : vector<1x1x128xf32> to vector<1x128xf32>
    %cst_225 = arith.constant dense<0.000000e+00> : vector<64x128xf32>
    %524 = tpu.matmul %519, %521, %cst_225 {dimension_numbers = #tpu.dot_dimension_numbers<[1], [0], [0], [1], [0, 0, 1, 1], [], []>} : vector<64x32xf32>, vector<32x128xf32>, vector<64x128xf32> -> vector<64x128xf32>
    %525 = vector.broadcast %523 : vector<1x128xf32> to vector<64x128xf32>
    %526 = arith.addf %524, %525 : vector<64x128xf32>
    %c0_226 = arith.constant 0 : index
    %c0_227 = arith.constant 0 : index
    %527 = vector.load %arg11[%c0_226, %c0_227] : memref<64x128xf32, #tpu.memory_space<vmem>>, vector<64x128xf32>
    tpu.vector_store %arg11[%c0_226, %c0_227], %526 {strides = array<i32>} : memref<64x128xf32, #tpu.memory_space<vmem>>, vector<64x128xf32>,
    %c2_228 = arith.constant 2 : index
    %c0_229 = arith.constant 0 : index
    %c0_230 = arith.constant 0 : index
    %528 = vector.load %arg6[%c2_228, %c0_229, %c0_230] : memref<3x32x128xf32, #tpu.memory_space<vmem>>, vector<1x32x128xf32>
    %529 = vector.shape_cast %528 : vector<1x32x128xf32> to vector<32x128xf32>
    %c0_231 = arith.constant 0 : index
    %c0_232 = arith.constant 0 : index
    %530 = vector.load %arg11[%c0_231, %c0_232] : memref<64x128xf32, #tpu.memory_space<vmem>>, vector<8x128xf32>
    %cst_233 = arith.constant 5.000000e-01 : f32
    %531 = vector.broadcast %cst_233 : f32 to vector<8x128xf32>
    %532 = arith.mulf %530, %531 : vector<8x128xf32>
    %533 = math.tanh %532 : vector<8x128xf32>
    %cst_234 = arith.constant 5.000000e-01 : f32
    %534 = vector.broadcast %cst_234 : f32 to vector<8x128xf32>
    %535 = arith.mulf %533, %534 : vector<8x128xf32>
    %cst_235 = arith.constant 5.000000e-01 : f32
    %536 = vector.broadcast %cst_235 : f32 to vector<8x128xf32>
    %537 = arith.addf %535, %536 : vector<8x128xf32>
    %538 = vector.extract_strided_slice %537 {offsets = [0, 0], sizes = [8, 32], strides = [1, 1]} : vector<8x128xf32> to vector<8x32xf32>
    %539 = vector.extract_strided_slice %537 {offsets = [0, 96], sizes = [8, 32], strides = [1, 1]} : vector<8x128xf32> to vector<8x32xf32>
    %540 = vector.extract_strided_slice %530 {offsets = [0, 64], sizes = [8, 32], strides = [1, 1]} : vector<8x128xf32> to vector<8x32xf32>
    %541 = math.tanh %540 : vector<8x32xf32>
    %542 = arith.mulf %538, %541 : vector<8x32xf32>
    %543 = math.tanh %542 : vector<8x32xf32>
    %544 = arith.mulf %539, %543 : vector<8x32xf32>
    %c8_236 = arith.constant 8 : index
    %c0_237 = arith.constant 0 : index
    %545 = vector.load %arg11[%c8_236, %c0_237] : memref<64x128xf32, #tpu.memory_space<vmem>>, vector<8x128xf32>
    %cst_238 = arith.constant dense<0.000000e+00> : vector<8x128xf32>
    %546 = tpu.matmul %544, %529, %cst_238 {dimension_numbers = #tpu.dot_dimension_numbers<[1], [0], [0], [1], [0, 0, 1, 1], [], []>} : vector<8x32xf32>, vector<32x128xf32>, vector<8x128xf32> -> vector<8x128xf32>
    %547 = arith.addf %545, %546 : vector<8x128xf32>
    %cst_239 = arith.constant 5.000000e-01 : f32
    %548 = vector.broadcast %cst_239 : f32 to vector<8x128xf32>
    %549 = arith.mulf %547, %548 : vector<8x128xf32>
    %550 = math.tanh %549 : vector<8x128xf32>
    %cst_240 = arith.constant 5.000000e-01 : f32
    %551 = vector.broadcast %cst_240 : f32 to vector<8x128xf32>
    %552 = arith.mulf %550, %551 : vector<8x128xf32>
    %cst_241 = arith.constant 5.000000e-01 : f32
    %553 = vector.broadcast %cst_241 : f32 to vector<8x128xf32>
    %554 = arith.addf %552, %553 : vector<8x128xf32>
    %555 = vector.extract_strided_slice %554 {offsets = [0, 0], sizes = [8, 32], strides = [1, 1]} : vector<8x128xf32> to vector<8x32xf32>
    %556 = vector.extract_strided_slice %554 {offsets = [0, 32], sizes = [8, 32], strides = [1, 1]} : vector<8x128xf32> to vector<8x32xf32>
    %557 = vector.extract_strided_slice %554 {offsets = [0, 96], sizes = [8, 32], strides = [1, 1]} : vector<8x128xf32> to vector<8x32xf32>
    %558 = vector.extract_strided_slice %547 {offsets = [0, 64], sizes = [8, 32], strides = [1, 1]} : vector<8x128xf32> to vector<8x32xf32>
    %559 = math.tanh %558 : vector<8x32xf32>
    %560 = arith.mulf %556, %542 : vector<8x32xf32>
    %561 = arith.mulf %555, %559 : vector<8x32xf32>
    %562 = arith.addf %560, %561 : vector<8x32xf32>
    %563 = math.tanh %562 : vector<8x32xf32>
    %564 = arith.mulf %557, %563 : vector<8x32xf32>
    %c16_242 = arith.constant 16 : index
    %c0_243 = arith.constant 0 : index
    %565 = vector.load %arg11[%c16_242, %c0_243] : memref<64x128xf32, #tpu.memory_space<vmem>>, vector<8x128xf32>
    %cst_244 = arith.constant dense<0.000000e+00> : vector<8x128xf32>
    %566 = tpu.matmul %564, %529, %cst_244 {dimension_numbers = #tpu.dot_dimension_numbers<[1], [0], [0], [1], [0, 0, 1, 1], [], []>} : vector<8x32xf32>, vector<32x128xf32>, vector<8x128xf32> -> vector<8x128xf32>
    %567 = arith.addf %565, %566 : vector<8x128xf32>
    %cst_245 = arith.constant 5.000000e-01 : f32
    %568 = vector.broadcast %cst_245 : f32 to vector<8x128xf32>
    %569 = arith.mulf %567, %568 : vector<8x128xf32>
    %570 = math.tanh %569 : vector<8x128xf32>
    %cst_246 = arith.constant 5.000000e-01 : f32
    %571 = vector.broadcast %cst_246 : f32 to vector<8x128xf32>
    %572 = arith.mulf %570, %571 : vector<8x128xf32>
    %cst_247 = arith.constant 5.000000e-01 : f32
    %573 = vector.broadcast %cst_247 : f32 to vector<8x128xf32>
    %574 = arith.addf %572, %573 : vector<8x128xf32>
    %575 = vector.extract_strided_slice %574 {offsets = [0, 0], sizes = [8, 32], strides = [1, 1]} : vector<8x128xf32> to vector<8x32xf32>
    %576 = vector.extract_strided_slice %574 {offsets = [0, 32], sizes = [8, 32], strides = [1, 1]} : vector<8x128xf32> to vector<8x32xf32>
    %577 = vector.extract_strided_slice %574 {offsets = [0, 96], sizes = [8, 32], strides = [1, 1]} : vector<8x128xf32> to vector<8x32xf32>
    %578 = vector.extract_strided_slice %567 {offsets = [0, 64], sizes = [8, 32], strides = [1, 1]} : vector<8x128xf32> to vector<8x32xf32>
    %579 = math.tanh %578 : vector<8x32xf32>
    %580 = arith.mulf %576, %562 : vector<8x32xf32>
    %581 = arith.mulf %575, %579 : vector<8x32xf32>
    %582 = arith.addf %580, %581 : vector<8x32xf32>
    %583 = math.tanh %582 : vector<8x32xf32>
    %584 = arith.mulf %577, %583 : vector<8x32xf32>
    %c24_248 = arith.constant 24 : index
    %c0_249 = arith.constant 0 : index
    %585 = vector.load %arg11[%c24_248, %c0_249] : memref<64x128xf32, #tpu.memory_space<vmem>>, vector<8x128xf32>
    %cst_250 = arith.constant dense<0.000000e+00> : vector<8x128xf32>
    %586 = tpu.matmul %584, %529, %cst_250 {dimension_numbers = #tpu.dot_dimension_numbers<[1], [0], [0], [1], [0, 0, 1, 1], [], []>} : vector<8x32xf32>, vector<32x128xf32>, vector<8x128xf32> -> vector<8x128xf32>
    %587 = arith.addf %585, %586 : vector<8x128xf32>
    %cst_251 = arith.constant 5.000000e-01 : f32
    %588 = vector.broadcast %cst_251 : f32 to vector<8x128xf32>
    %589 = arith.mulf %587, %588 : vector<8x128xf32>
    %590 = math.tanh %589 : vector<8x128xf32>
    %cst_252 = arith.constant 5.000000e-01 : f32
    %591 = vector.broadcast %cst_252 : f32 to vector<8x128xf32>
    %592 = arith.mulf %590, %591 : vector<8x128xf32>
    %cst_253 = arith.constant 5.000000e-01 : f32
    %593 = vector.broadcast %cst_253 : f32 to vector<8x128xf32>
    %594 = arith.addf %592, %593 : vector<8x128xf32>
    %595 = vector.extract_strided_slice %594 {offsets = [0, 0], sizes = [8, 32], strides = [1, 1]} : vector<8x128xf32> to vector<8x32xf32>
    %596 = vector.extract_strided_slice %594 {offsets = [0, 32], sizes = [8, 32], strides = [1, 1]} : vector<8x128xf32> to vector<8x32xf32>
    %597 = vector.extract_strided_slice %594 {offsets = [0, 96], sizes = [8, 32], strides = [1, 1]} : vector<8x128xf32> to vector<8x32xf32>
    %598 = vector.extract_strided_slice %587 {offsets = [0, 64], sizes = [8, 32], strides = [1, 1]} : vector<8x128xf32> to vector<8x32xf32>
    %599 = math.tanh %598 : vector<8x32xf32>
    %600 = arith.mulf %596, %582 : vector<8x32xf32>
    %601 = arith.mulf %595, %599 : vector<8x32xf32>
    %602 = arith.addf %600, %601 : vector<8x32xf32>
    %603 = math.tanh %602 : vector<8x32xf32>
    %604 = arith.mulf %597, %603 : vector<8x32xf32>
    %c32_254 = arith.constant 32 : index
    %c0_255 = arith.constant 0 : index
    %605 = vector.load %arg11[%c32_254, %c0_255] : memref<64x128xf32, #tpu.memory_space<vmem>>, vector<8x128xf32>
    %cst_256 = arith.constant dense<0.000000e+00> : vector<8x128xf32>
    %606 = tpu.matmul %604, %529, %cst_256 {dimension_numbers = #tpu.dot_dimension_numbers<[1], [0], [0], [1], [0, 0, 1, 1], [], []>} : vector<8x32xf32>, vector<32x128xf32>, vector<8x128xf32> -> vector<8x128xf32>
    %607 = arith.addf %605, %606 : vector<8x128xf32>
    %cst_257 = arith.constant 5.000000e-01 : f32
    %608 = vector.broadcast %cst_257 : f32 to vector<8x128xf32>
    %609 = arith.mulf %607, %608 : vector<8x128xf32>
    %610 = math.tanh %609 : vector<8x128xf32>
    %cst_258 = arith.constant 5.000000e-01 : f32
    %611 = vector.broadcast %cst_258 : f32 to vector<8x128xf32>
    %612 = arith.mulf %610, %611 : vector<8x128xf32>
    %cst_259 = arith.constant 5.000000e-01 : f32
    %613 = vector.broadcast %cst_259 : f32 to vector<8x128xf32>
    %614 = arith.addf %612, %613 : vector<8x128xf32>
    %615 = vector.extract_strided_slice %614 {offsets = [0, 0], sizes = [8, 32], strides = [1, 1]} : vector<8x128xf32> to vector<8x32xf32>
    %616 = vector.extract_strided_slice %614 {offsets = [0, 32], sizes = [8, 32], strides = [1, 1]} : vector<8x128xf32> to vector<8x32xf32>
    %617 = vector.extract_strided_slice %614 {offsets = [0, 96], sizes = [8, 32], strides = [1, 1]} : vector<8x128xf32> to vector<8x32xf32>
    %618 = vector.extract_strided_slice %607 {offsets = [0, 64], sizes = [8, 32], strides = [1, 1]} : vector<8x128xf32> to vector<8x32xf32>
    %619 = math.tanh %618 : vector<8x32xf32>
    %620 = arith.mulf %616, %602 : vector<8x32xf32>
    %621 = arith.mulf %615, %619 : vector<8x32xf32>
    %622 = arith.addf %620, %621 : vector<8x32xf32>
    %623 = math.tanh %622 : vector<8x32xf32>
    %624 = arith.mulf %617, %623 : vector<8x32xf32>
    %c40_260 = arith.constant 40 : index
    %c0_261 = arith.constant 0 : index
    %625 = vector.load %arg11[%c40_260, %c0_261] : memref<64x128xf32, #tpu.memory_space<vmem>>, vector<8x128xf32>
    %cst_262 = arith.constant dense<0.000000e+00> : vector<8x128xf32>
    %626 = tpu.matmul %624, %529, %cst_262 {dimension_numbers = #tpu.dot_dimension_numbers<[1], [0], [0], [1], [0, 0, 1, 1], [], []>} : vector<8x32xf32>, vector<32x128xf32>, vector<8x128xf32> -> vector<8x128xf32>
    %627 = arith.addf %625, %626 : vector<8x128xf32>
    %cst_263 = arith.constant 5.000000e-01 : f32
    %628 = vector.broadcast %cst_263 : f32 to vector<8x128xf32>
    %629 = arith.mulf %627, %628 : vector<8x128xf32>
    %630 = math.tanh %629 : vector<8x128xf32>
    %cst_264 = arith.constant 5.000000e-01 : f32
    %631 = vector.broadcast %cst_264 : f32 to vector<8x128xf32>
    %632 = arith.mulf %630, %631 : vector<8x128xf32>
    %cst_265 = arith.constant 5.000000e-01 : f32
    %633 = vector.broadcast %cst_265 : f32 to vector<8x128xf32>
    %634 = arith.addf %632, %633 : vector<8x128xf32>
    %635 = vector.extract_strided_slice %634 {offsets = [0, 0], sizes = [8, 32], strides = [1, 1]} : vector<8x128xf32> to vector<8x32xf32>
    %636 = vector.extract_strided_slice %634 {offsets = [0, 32], sizes = [8, 32], strides = [1, 1]} : vector<8x128xf32> to vector<8x32xf32>
    %637 = vector.extract_strided_slice %634 {offsets = [0, 96], sizes = [8, 32], strides = [1, 1]} : vector<8x128xf32> to vector<8x32xf32>
    %638 = vector.extract_strided_slice %627 {offsets = [0, 64], sizes = [8, 32], strides = [1, 1]} : vector<8x128xf32> to vector<8x32xf32>
    %639 = math.tanh %638 : vector<8x32xf32>
    %640 = arith.mulf %636, %622 : vector<8x32xf32>
    %641 = arith.mulf %635, %639 : vector<8x32xf32>
    %642 = arith.addf %640, %641 : vector<8x32xf32>
    %643 = math.tanh %642 : vector<8x32xf32>
    %644 = arith.mulf %637, %643 : vector<8x32xf32>
    %c48_266 = arith.constant 48 : index
    %c0_267 = arith.constant 0 : index
    %645 = vector.load %arg11[%c48_266, %c0_267] : memref<64x128xf32, #tpu.memory_space<vmem>>, vector<8x128xf32>
    %cst_268 = arith.constant dense<0.000000e+00> : vector<8x128xf32>
    %646 = tpu.matmul %644, %529, %cst_268 {dimension_numbers = #tpu.dot_dimension_numbers<[1], [0], [0], [1], [0, 0, 1, 1], [], []>} : vector<8x32xf32>, vector<32x128xf32>, vector<8x128xf32> -> vector<8x128xf32>
    %647 = arith.addf %645, %646 : vector<8x128xf32>
    %cst_269 = arith.constant 5.000000e-01 : f32
    %648 = vector.broadcast %cst_269 : f32 to vector<8x128xf32>
    %649 = arith.mulf %647, %648 : vector<8x128xf32>
    %650 = math.tanh %649 : vector<8x128xf32>
    %cst_270 = arith.constant 5.000000e-01 : f32
    %651 = vector.broadcast %cst_270 : f32 to vector<8x128xf32>
    %652 = arith.mulf %650, %651 : vector<8x128xf32>
    %cst_271 = arith.constant 5.000000e-01 : f32
    %653 = vector.broadcast %cst_271 : f32 to vector<8x128xf32>
    %654 = arith.addf %652, %653 : vector<8x128xf32>
    %655 = vector.extract_strided_slice %654 {offsets = [0, 0], sizes = [8, 32], strides = [1, 1]} : vector<8x128xf32> to vector<8x32xf32>
    %656 = vector.extract_strided_slice %654 {offsets = [0, 32], sizes = [8, 32], strides = [1, 1]} : vector<8x128xf32> to vector<8x32xf32>
    %657 = vector.extract_strided_slice %654 {offsets = [0, 96], sizes = [8, 32], strides = [1, 1]} : vector<8x128xf32> to vector<8x32xf32>
    %658 = vector.extract_strided_slice %647 {offsets = [0, 64], sizes = [8, 32], strides = [1, 1]} : vector<8x128xf32> to vector<8x32xf32>
    %659 = math.tanh %658 : vector<8x32xf32>
    %660 = arith.mulf %656, %642 : vector<8x32xf32>
    %661 = arith.mulf %655, %659 : vector<8x32xf32>
    %662 = arith.addf %660, %661 : vector<8x32xf32>
    %663 = math.tanh %662 : vector<8x32xf32>
    %664 = arith.mulf %657, %663 : vector<8x32xf32>
    %c56_272 = arith.constant 56 : index
    %c0_273 = arith.constant 0 : index
    %665 = vector.load %arg11[%c56_272, %c0_273] : memref<64x128xf32, #tpu.memory_space<vmem>>, vector<8x128xf32>
    %cst_274 = arith.constant dense<0.000000e+00> : vector<8x128xf32>
    %666 = tpu.matmul %664, %529, %cst_274 {dimension_numbers = #tpu.dot_dimension_numbers<[1], [0], [0], [1], [0, 0, 1, 1], [], []>} : vector<8x32xf32>, vector<32x128xf32>, vector<8x128xf32> -> vector<8x128xf32>
    %667 = arith.addf %665, %666 : vector<8x128xf32>
    %cst_275 = arith.constant 5.000000e-01 : f32
    %668 = vector.broadcast %cst_275 : f32 to vector<8x128xf32>
    %669 = arith.mulf %667, %668 : vector<8x128xf32>
    %670 = math.tanh %669 : vector<8x128xf32>
    %cst_276 = arith.constant 5.000000e-01 : f32
    %671 = vector.broadcast %cst_276 : f32 to vector<8x128xf32>
    %672 = arith.mulf %670, %671 : vector<8x128xf32>
    %cst_277 = arith.constant 5.000000e-01 : f32
    %673 = vector.broadcast %cst_277 : f32 to vector<8x128xf32>
    %674 = arith.addf %672, %673 : vector<8x128xf32>
    %675 = vector.extract_strided_slice %674 {offsets = [0, 0], sizes = [8, 32], strides = [1, 1]} : vector<8x128xf32> to vector<8x32xf32>
    %676 = vector.extract_strided_slice %674 {offsets = [0, 32], sizes = [8, 32], strides = [1, 1]} : vector<8x128xf32> to vector<8x32xf32>
    %677 = vector.extract_strided_slice %674 {offsets = [0, 96], sizes = [8, 32], strides = [1, 1]} : vector<8x128xf32> to vector<8x32xf32>
    %678 = vector.extract_strided_slice %667 {offsets = [0, 64], sizes = [8, 32], strides = [1, 1]} : vector<8x128xf32> to vector<8x32xf32>
    %679 = math.tanh %678 : vector<8x32xf32>
    %680 = arith.mulf %676, %662 : vector<8x32xf32>
    %681 = arith.mulf %675, %679 : vector<8x32xf32>
    %682 = arith.addf %680, %681 : vector<8x32xf32>
    %683 = math.tanh %682 : vector<8x32xf32>
    %684 = arith.mulf %677, %683 : vector<8x32xf32>
    %c0_278 = arith.constant 0 : index
    %c0_279 = arith.constant 0 : index
    %685 = vector.load %arg8[%c0_278, %c0_279] : memref<1x32xf32, #tpu.memory_space<vmem>>, vector<1x32xf32>
    %cst_280 = arith.constant dense<0.000000e+00> : vector<1x8xf32>
    %686 = tpu.matmul %685, %684, %cst_280 {dimension_numbers = #tpu.dot_dimension_numbers<[1], [1], [0], [0], [0, 0, 1, 0], [], []>} : vector<1x32xf32>, vector<8x32xf32>, vector<1x8xf32> -> vector<1x8xf32>
    %c0_281 = arith.constant 0 : index
    %c0_282 = arith.constant 0 : index
    %687 = vector.load %arg9[%c0_281, %c0_282] : memref<1x1xf32, #tpu.memory_space<vmem>>, vector<1x1xf32>
    %688 = vector.broadcast %687 : vector<1x1xf32> to vector<1x8xf32>
    %689 = arith.addf %686, %688 : vector<1x8xf32>
    %c0_283 = arith.constant 0 : index
    %c0_284 = arith.constant 0 : index
    %690 = vector.load %arg10[%c0_283, %c0_284] : memref<1x8xf32, #tpu.memory_space<vmem>>, vector<1x8xf32>
    tpu.vector_store %arg10[%c0_283, %c0_284], %689 {strides = array<i32>} : memref<1x8xf32, #tpu.memory_space<vmem>>, vector<1x8xf32>,
    return
  }
  func.func @transform_0(%arg0: i32) -> (i32, i32) {
    %c0_i32 = arith.constant 0 : i32
    %c0_i32_0 = arith.constant 0 : i32
    return %arg0, %c0_i32 : i32, i32
  }
  func.func @transform_1(%arg0: i32) -> (i32, i32) {
    %c0_i32 = arith.constant 0 : i32
    %c0_i32_0 = arith.constant 0 : i32
    %c0_i32_1 = arith.constant 0 : i32
    return %c0_i32, %c0_i32_0 : i32, i32
  }
  func.func @transform_2(%arg0: i32) -> (i32, i32) {
    %c0_i32 = arith.constant 0 : i32
    %c0_i32_0 = arith.constant 0 : i32
    %c0_i32_1 = arith.constant 0 : i32
    return %c0_i32, %c0_i32_0 : i32, i32
  }
  func.func @transform_3(%arg0: i32) -> (i32, i32) {
    %c0_i32 = arith.constant 0 : i32
    %c0_i32_0 = arith.constant 0 : i32
    %c0_i32_1 = arith.constant 0 : i32
    return %c0_i32, %c0_i32_0 : i32, i32
  }
  func.func @transform_4(%arg0: i32) -> (i32, i32, i32) {
    %c0_i32 = arith.constant 0 : i32
    %c0_i32_0 = arith.constant 0 : i32
    %c0_i32_1 = arith.constant 0 : i32
    %c0_i32_2 = arith.constant 0 : i32
    return %c0_i32, %c0_i32_0, %c0_i32_1 : i32, i32, i32
  }
  func.func @transform_5(%arg0: i32) -> (i32, i32, i32) {
    %c0_i32 = arith.constant 0 : i32
    %c0_i32_0 = arith.constant 0 : i32
    %c0_i32_1 = arith.constant 0 : i32
    %c0_i32_2 = arith.constant 0 : i32
    return %c0_i32, %c0_i32_0, %c0_i32_1 : i32, i32, i32
  }
  func.func @transform_6(%arg0: i32) -> (i32, i32, i32) {
    %c0_i32 = arith.constant 0 : i32
    %c0_i32_0 = arith.constant 0 : i32
    %c0_i32_1 = arith.constant 0 : i32
    %c0_i32_2 = arith.constant 0 : i32
    return %c0_i32, %c0_i32_0, %c0_i32_1 : i32, i32, i32
  }
  func.func @transform_7(%arg0: i32) -> (i32, i32) {
    %c0_i32 = arith.constant 0 : i32
    %c0_i32_0 = arith.constant 0 : i32
    %c0_i32_1 = arith.constant 0 : i32
    return %c0_i32, %c0_i32_0 : i32, i32
  }
  func.func @transform_8(%arg0: i32) -> (i32, i32) {
    %c0_i32 = arith.constant 0 : i32
    %c0_i32_0 = arith.constant 0 : i32
    %c0_i32_1 = arith.constant 0 : i32
    return %c0_i32, %c0_i32_0 : i32, i32
  }
  func.func @transform_9(%arg0: i32) -> (i32, i32) {
    %c0_i32 = arith.constant 0 : i32
    %c0_i32_0 = arith.constant 0 : i32
    return %c0_i32, %arg0 : i32, i32
  }
}

</mosaic_0001>

<llo_original>
// kernel: lstm_model_forward.1
$region0: #{lstm_model_forward.1}
  #allocation0 [shape = 'u32[]', space=smem, size = 0x4, offset = 0x4, fixed_abs, tag = 'smem constant byte address 0x4 - core index']
  #allocation1 [shape = 'u32[144,128]{1,0:T(1,128)}', space=vmem, size = 0x12000, scoped, tag = 'internal scratch']
  #allocation2 [shape = 'f32[64,128]{1,0:T(8,128)}', space=vmem, size = 0x8000, scoped, tag = 'scratch operand']
  #allocation3 [shape = 'f32[64,32]{1,0:T(8,128)}', space=vmem, size = 0x8000, scoped, tag = 'scratch operand']
  #allocation4 [shape = 'f32[1,1]{1,0:T(1,128)S(1)}', space=vmem, size = 0x200, scoped, tag = 'scoped memory for lstm_model_forward.1']
  %s0 = inlined_call_operand.vmem [shape: f32[64,16], index: 0, kind: input, shape index: {}]
  %s1 = inlined_call_operand.vmem [shape: f32[16,128], index: 1, kind: input, shape index: {}]
  %s2 = inlined_call_operand.hbm [shape: f32[32,128], index: 2, kind: input, shape index: {}]
  %s3 = inlined_call_operand.vmem [shape: f32[1,128], index: 3, kind: input, shape index: {}]
  %s4 = inlined_call_operand.vmem [shape: f32[3,32,128], index: 4, kind: input, shape index: {}]
  %s5 = inlined_call_operand.vmem [shape: f32[3,32,128], index: 5, kind: input, shape index: {}]
  %s6 = inlined_call_operand.vmem [shape: f32[3,1,128], index: 6, kind: input, shape index: {}]
  %s7 = inlined_call_operand.vmem [shape: f32[1,32], index: 7, kind: input, shape index: {}]
  %s8 = inlined_call_operand.<no memory space> [shape: f32[1,1], index: 8, kind: input, shape index: {}]
  %s9 = inlined_call_operand.vmem [shape: f32[1,8], index: 9, kind: output, shape index: {}]
  %s10 = sld [smem:[#allocation0]]
  $region50: #{lstm_model_forward.1} parent=0
    _
  %s12 = ssub.s32 1, %s10
  %s13 = scalar_select 0, %s12, %s10
  %v14 = vstv %s8
  %15 = vst [vmem:[#allocation4] sm:$0x1] %v14
  $region1: #{lstm_model_forward.1} parent=0
    #allocation5 [shape = 'u8[16384]{0}', space=vmem, size = 0x4000, scoped, tag = 'input window, operand 2, single buffered']
    #allocation6 [shape = 's32[1]{0}', space=sflag, size = 0x4, scoped, tag = 'scoped memory for lstm_model_forward.1']
    %16 = vsyncpa [#allocation6], 0
    // Predicated region
    $region2: #{lstm_model_forward.1} parent=1 // pred_check
      _
    $region3: #{lstm_model_forward.1} parent=1 // pred_check_branch
      %18 = sbr.rel (0) target = $region5
    $region4: #{lstm_model_forward.1} parent=1 // pred_region
      _
    $region5: #{lstm_model_forward.1} parent=1 // pred_fallthru
      _
    // Predicated region
    $region6: #{lstm_model_forward.1} parent=1 // pred_check
      _
    $region7: #{lstm_model_forward.1} parent=1 // pred_check_branch
      %20 = sbr.rel (0) target = $region9
    $region8: #{lstm_model_forward.1} parent=1 // pred_region
      _
    $region9: #{lstm_model_forward.1} parent=1 // pred_fallthru
      _
    // Predicated region
    $region10: #{lstm_model_forward.1} parent=1 // pred_check
      _
    $region11: #{lstm_model_forward.1} parent=1 // pred_check_branch
      %22 = sbr.rel (0) target = $region13
    $region12: #{lstm_model_forward.1} parent=1 // pred_region
      %s24 = ssub.s32 512, 512
      %25 = vsyncadd [#allocation6], %s24
      %s26 = sshll.u32 [#allocation5], 4
      %s27 = int_to_ptr.vmem [resolvable:$true] %s26
      %32 = dma.hbm_to_vmem [thread:$0]  %s2, 512, %s27, [#allocation6], 128, 128, 8
    $region13: #{lstm_model_forward.1} parent=1 // pred_fallthru
      _
    // Predicated region
    $region14: #{lstm_model_forward.1} parent=1 // pred_check
      _
    $region15: #{lstm_model_forward.1} parent=1 // pred_check_branch
      %34 = sbr.rel (0) target = $region17
    $region16: #{lstm_model_forward.1} parent=1 // pred_region
      _
    $region17: #{lstm_model_forward.1} parent=1 // pred_fallthru
      _
    // Predicated region
    $region18: #{lstm_model_forward.1} parent=1 // pred_check
      _
    $region19: #{lstm_model_forward.1} parent=1 // pred_check_branch
      %36 = sbr.rel (0) target = $region21
    $region20: #{lstm_model_forward.1} parent=1 // pred_region
      _
    $region21: #{lstm_model_forward.1} parent=1 // pred_fallthru
      _
    // Predicated region
    $region22: #{lstm_model_forward.1} parent=1 // pred_check
      _
    $region23: #{lstm_model_forward.1} parent=1 // pred_check_branch
      %38 = sbr.rel (0) target = $region25
    $region24: #{lstm_model_forward.1} parent=1 // pred_region
      _
    $region25: #{lstm_model_forward.1} parent=1 // pred_fallthru
      _
    // Predicated region
    $region26: #{lstm_model_forward.1} parent=1 // pred_check
      _
    $region27: #{lstm_model_forward.1} parent=1 // pred_check_branch
      %40 = sbr.rel (0) target = $region29
    $region28: #{lstm_model_forward.1} parent=1 // pred_region
      _
    $region29: #{lstm_model_forward.1} parent=1 // pred_fallthru
      _
    // Predicated region
    $region30: #{lstm_model_forward.1} parent=1 // pred_check
      _
    $region31: #{lstm_model_forward.1} parent=1 // pred_check_branch
      %42 = sbr.rel (0) target = $region33
    $region32: #{lstm_model_forward.1} parent=1 // pred_region
      _
    $region33: #{lstm_model_forward.1} parent=1 // pred_fallthru
      _
    // Predicated region
    $region34: #{lstm_model_forward.1} parent=1 // pred_check
      _
    $region35: #{lstm_model_forward.1} parent=1 // pred_check_branch
      %44 = sbr.rel (0) target = $region37
    $region36: #{lstm_model_forward.1} parent=1 // pred_region
      _
    $region37: #{lstm_model_forward.1} parent=1 // pred_fallthru
      _
    // Predicated region
    $region38: #{lstm_model_forward.1} parent=1 // pred_check
      _
    $region39: #{lstm_model_forward.1} parent=1 // pred_check_branch
      %46 = sbr.rel (0) target = $region41
    $region40: #{lstm_model_forward.1} parent=1 // pred_region
      %47 = dma.done [#allocation6], 512
    $region41: #{lstm_model_forward.1} parent=1 // pred_fallthru
      _
    %v48 = vld [vmem:[%s0] sm:$0xff]
    %v49 = vld [vmem:[%s0 + $0x8] sm:$0xff]
    %v50 = vld [vmem:[%s0 + $0x10] sm:$0xff]
    %v51 = vld [vmem:[%s0 + $0x18] sm:$0xff]
    %v52 = vld [vmem:[%s0 + $0x20] sm:$0xff]
    %v53 = vld [vmem:[%s0 + $0x28] sm:$0xff]
    %v54 = vld [vmem:[%s0 + $0x30] sm:$0xff]
    %v55 = vld [vmem:[%s0 + $0x38] sm:$0xff]
    %v56 = vld [vmem:[%s1] sm:$0xff]
    %v57 = vld [vmem:[%s1 + $0x8] sm:$0xff]
    %v58 = vld [vmem:[%s3] sm:$0x1]
    %v60 = vlaneseq
    %v61 = vshrl.u32 %v60, 7
    %v62 = vsub.s32 0, %v61
    %v63 = vrot.slane %v58, %v62
    %vm65 = vcmask 130048
    %v67 = vsel %vm65, %v48, 0
    %v70 = vsel %vm65, %v49, 0
    %v73 = vsel %vm65, %v50, 0
    %v76 = vsel %vm65, %v51, 0
    %v79 = vsel %vm65, %v52, 0
    %v82 = vsel %vm65, %v53, 0
    %v85 = vsel %vm65, %v54, 0
    %v88 = vsel %vm65, %v55, 0
    %90 = vmatprep.subr.mxu0 0.0
    %91 = vmatpush1.msra.mxu0 0.0
    %92 = vmatprep.subr.mxu0 0.0
    %93 = vmatpush1.msra.mxu0 0.0
    %94 = vmatprep.subr.mxu0 0.0
    %95 = vmatpush1.msra.mxu0 0.0
    %96 = vmatprep.subr.mxu0 0.0
    %97 = vmatpush1.msra.mxu0 0.0
    %98 = vmatprep.subr.mxu0 0.0
    %99 = vmatpush1.msra.mxu0 0.0
    %100 = vmatprep.subr.mxu0 0.0
    %101 = vmatpush1.msra.mxu0 0.0
    %102 = vmatprep.subr.mxu0 0.0
    %103 = vmatpush1.msra.mxu0 0.0
    %104 = vmatprep.subr.mxu0 0.0
    %105 = vmatpush1.msra.mxu0 0.0
    %106 = vmatprep.subr.mxu0 0.0
    %107 = vmatpush1.msra.mxu0 0.0
    %108 = vmatprep.subr.mxu0 0.0
    %109 = vmatpush1.msra.mxu0 0.0
    %110 = vmatprep.subr.mxu0 0.0
    %111 = vmatpush1.msra.mxu0 0.0
    %112 = vmatprep.subr.mxu0 0.0
    %113 = vmatpush1.msra.mxu0 0.0
    %114 = vmatprep.subr.mxu0 0.0
    %115 = vmatpush1.msra.mxu0 0.0
    %116 = vmatprep.subr.mxu0 0.0
    %117 = vmatpush1.msra.mxu0 0.0
    %118 = vmatprep.subr.mxu0 0.0
    %119 = vmatpush1.msra.mxu0 %v57
    %120 = vmatprep.subr.mxu0 0.0
    %121 = vmatpush1.msra.mxu0 %v56
    %122 = vmatprep.subr.mxu0 0.0
    %123 = vmatpush2.msra.mxu0 0.0
    %124 = vmatprep.subr.mxu0 0.0
    %125 = vmatpush2.msra.mxu0 0.0
    %126 = vmatprep.subr.mxu0 0.0
    %127 = vmatpush2.msra.mxu0 0.0
    %128 = vmatprep.subr.mxu0 0.0
    %129 = vmatpush2.msra.mxu0 0.0
    %130 = vmatprep.subr.mxu0 0.0
    %131 = vmatpush2.msra.mxu0 0.0
    %132 = vmatprep.subr.mxu0 0.0
    %133 = vmatpush2.msra.mxu0 0.0
    %134 = vmatprep.subr.mxu0 0.0
    %135 = vmatpush2.msra.mxu0 0.0
    %136 = vmatprep.subr.mxu0 0.0
    %137 = vmatpush2.msra.mxu0 0.0
    %138 = vmatprep.subr.mxu0 0.0
    %139 = vmatpush2.msra.mxu0 0.0
    %140 = vmatprep.subr.mxu0 0.0
    %141 = vmatpush2.msra.mxu0 0.0
    %142 = vmatprep.subr.mxu0 0.0
    %143 = vmatpush2.msra.mxu0 0.0
    %144 = vmatprep.subr.mxu0 0.0
    %145 = vmatpush2.msra.mxu0 0.0
    %146 = vmatprep.subr.mxu0 0.0
    %147 = vmatpush2.msra.mxu0 0.0
    %148 = vmatprep.subr.mxu0 0.0
    %149 = vmatpush2.msra.mxu0 0.0
    %150 = vmatprep.subr.mxu0 0.0
    %151 = vmatpush2.msra.mxu0 0.0
    %152 = vmatprep.subr.mxu0 0.0
    %153 = vmatpush2.msra.mxu0 0.0
    %154 = vmatprep.mubr.f32.mxu0 0.0
    %155 = vmatmul.mubr.f32.gmra.mxu0 %v67
    %v156 = vpop.f32.mrf.mxu0
    %v157 = vadd.f32 %v63, %v156
    %v158 = vpop.f32.mrf.mxu0
    %159 = vmatprep.mubr.f32.mxu0 0.0
    %160 = vmatmul.mubr.f32.gmra.mxu0 %v70
    %v161 = vpop.f32.mrf.mxu0
    %v162 = vadd.f32 %v63, %v161
    %v163 = vpop.f32.mrf.mxu0
    %164 = vmatprep.mubr.f32.mxu0 0.0
    %165 = vmatmul.mubr.f32.gmra.mxu0 %v73
    %v166 = vpop.f32.mrf.mxu0
    %v167 = vadd.f32 %v63, %v166
    %v168 = vpop.f32.mrf.mxu0
    %169 = vmatprep.mubr.f32.mxu0 0.0
    %170 = vmatmul.mubr.f32.gmra.mxu0 %v76
    %v171 = vpop.f32.mrf.mxu0
    %v172 = vadd.f32 %v63, %v171
    %v173 = vpop.f32.mrf.mxu0
    %174 = vmatprep.mubr.f32.mxu0 0.0
    %175 = vmatmul.mubr.f32.gmra.mxu0 %v79
    %v176 = vpop.f32.mrf.mxu0
    %v177 = vadd.f32 %v63, %v176
    %v178 = vpop.f32.mrf.mxu0
    %179 = vmatprep.mubr.f32.mxu0 0.0
    %180 = vmatmul.mubr.f32.gmra.mxu0 %v82
    %v181 = vpop.f32.mrf.mxu0
    %v182 = vadd.f32 %v63, %v181
    %v183 = vpop.f32.mrf.mxu0
    %184 = vmatprep.mubr.f32.mxu0 0.0
    %185 = vmatmul.mubr.f32.gmra.mxu0 %v85
    %v186 = vpop.f32.mrf.mxu0
    %v187 = vadd.f32 %v63, %v186
    %v188 = vpop.f32.mrf.mxu0
    %189 = vmatprep.mubr.f32.mxu0 0.0
    %190 = vmatmul.mubr.f32.gmra.mxu0 %v88
    %v191 = vpop.f32.mrf.mxu0
    %v192 = vadd.f32 %v63, %v191
    %v193 = vpop.f32.mrf.mxu0
    %194 = vdwg.mxu0
    %195 = vst [vmem:[#allocation2] sm:$0xff] %v157
    %196 = vst [vmem:[#allocation2 + $0x8] sm:$0xff] %v162
    %197 = vst [vmem:[#allocation2 + $0x10] sm:$0xff] %v167
    %198 = vst [vmem:[#allocation2 + $0x18] sm:$0xff] %v172
    %199 = vst [vmem:[#allocation2 + $0x20] sm:$0xff] %v177
    %200 = vst [vmem:[#allocation2 + $0x28] sm:$0xff] %v182
    %201 = vst [vmem:[#allocation2 + $0x30] sm:$0xff] %v187
    %202 = vst [vmem:[#allocation2 + $0x38] sm:$0xff] %v192
    %v203 = vld [vmem:[#allocation5] sm:$0xff]
    %v204 = vld [vmem:[#allocation5 + $0x8] sm:$0xff]
    %v205 = vld [vmem:[#allocation5 + $0x10] sm:$0xff]
    %v206 = vld [vmem:[#allocation5 + $0x18] sm:$0xff]
    %v207 = vld [vmem:[#allocation2] sm:$0xff]
    %v208 = vmul.f32 %v207, 0.5
    %v209 = vtanh.pop %v208
    %v210 = vmul.f32 %v209, 0.5
    %v211 = vadd.f32 %v210, 0.5
    %v212 = vtanh.pop %v207
    %214 = vrot.lane.b32.xlu0 %v212, 64
    %v215 = vpop.permute.xlu0 %214
    %v217 = vmul.f32 %v211, %v215
    %v218 = vtanh.pop %v217
    %220 = vrot.lane.b32.xlu0 %v218, 96
    %v221 = vpop.permute.xlu0 %220
    %v223 = vmul.f32 %v211, %v221
    %225 = vrot.lane.b32.xlu0 %v223, 32
    %v226 = vpop.permute.xlu0 %225
    %vm228 = vcmask 261120
    %229 = vst.msk [vmem:[#allocation3] sm:$0xff] %vm228, %v226
    %v230 = vld [vmem:[#allocation2 + $0x8] sm:$0xff]
    %v231 = vsel %vm228, %v226, 0
    %233 = vmatprep.subr.mxu0 0.0
    %234 = vmatpush1.msra.mxu0 0.0
    %235 = vmatprep.subr.mxu0 0.0
    %236 = vmatpush1.msra.mxu0 0.0
    %237 = vmatprep.subr.mxu0 0.0
    %238 = vmatpush1.msra.mxu0 0.0
    %239 = vmatprep.subr.mxu0 0.0
    %240 = vmatpush1.msra.mxu0 0.0
    %241 = vmatprep.subr.mxu0 0.0
    %242 = vmatpush1.msra.mxu0 0.0
    %243 = vmatprep.subr.mxu0 0.0
    %244 = vmatpush1.msra.mxu0 0.0
    %245 = vmatprep.subr.mxu0 0.0
    %246 = vmatpush1.msra.mxu0 0.0
    %247 = vmatprep.subr.mxu0 0.0
    %248 = vmatpush1.msra.mxu0 0.0
    %249 = vmatprep.subr.mxu0 0.0
    %250 = vmatpush1.msra.mxu0 0.0
    %251 = vmatprep.subr.mxu0 0.0
    %252 = vmatpush1.msra.mxu0 0.0
    %253 = vmatprep.subr.mxu0 0.0
    %254 = vmatpush1.msra.mxu0 0.0
    %255 = vmatprep.subr.mxu0 0.0
    %256 = vmatpush1.msra.mxu0 0.0
    %257 = vmatprep.subr.mxu0 0.0
    %258 = vmatpush1.msra.mxu0 %v206
    %259 = vmatprep.subr.mxu0 0.0
    %260 = vmatpush1.msra.mxu0 %v205
    %261 = vmatprep.subr.mxu0 0.0
    %262 = vmatpush1.msra.mxu0 %v204
    %263 = vmatprep.subr.mxu0 0.0
    %264 = vmatpush1.msra.mxu0 %v203
    %265 = vmatprep.subr.mxu0 0.0
    %266 = vmatpush2.msra.mxu0 0.0
    %267 = vmatprep.subr.mxu0 0.0
    %268 = vmatpush2.msra.mxu0 0.0
    %269 = vmatprep.subr.mxu0 0.0
    %270 = vmatpush2.msra.mxu0 0.0
    %271 = vmatprep.subr.mxu0 0.0
    %272 = vmatpush2.msra.mxu0 0.0
    %273 = vmatprep.subr.mxu0 0.0
    %274 = vmatpush2.msra.mxu0 0.0
    %275 = vmatprep.subr.mxu0 0.0
    %276 = vmatpush2.msra.mxu0 0.0
    %277 = vmatprep.subr.mxu0 0.0
    %278 = vmatpush2.msra.mxu0 0.0
    %279 = vmatprep.subr.mxu0 0.0
    %280 = vmatpush2.msra.mxu0 0.0
    %281 = vmatprep.subr.mxu0 0.0
    %282 = vmatpush2.msra.mxu0 0.0
    %283 = vmatprep.subr.mxu0 0.0
    %284 = vmatpush2.msra.mxu0 0.0
    %285 = vmatprep.subr.mxu0 0.0
    %286 = vmatpush2.msra.mxu0 0.0
    %287 = vmatprep.subr.mxu0 0.0
    %288 = vmatpush2.msra.mxu0 0.0
    %289 = vmatprep.subr.mxu0 0.0
    %290 = vmatpush2.msra.mxu0 0.0
    %291 = vmatprep.subr.mxu0 0.0
    %292 = vmatpush2.msra.mxu0 0.0
    %293 = vmatprep.subr.mxu0 0.0
    %294 = vmatpush2.msra.mxu0 0.0
    %295 = vmatprep.subr.mxu0 0.0
    %296 = vmatpush2.msra.mxu0 0.0
    %297 = vmatprep.mubr.f32.mxu0 0.0
    %298 = vmatmul.mubr.f32.gmra.mxu0 %v231
    %v299 = vpop.f32.mrf.mxu0
    %v300 = vadd.f32 0.0, %v299
    %v301 = vpop.f32.mrf.mxu0
    %302 = vdwg.mxu0
    %v303 = vadd.f32 %v230, %v300
    %v304 = vmul.f32 %v303, 0.5
    %v305 = vtanh.pop %v304
    %v306 = vmul.f32 %v305, 0.5
    %v307 = vadd.f32 %v306, 0.5
    %v308 = vtanh.pop %v303
    %310 = vrot.lane.b32.xlu0 %v217, 32
    %v311 = vpop.permute.xlu0 %310
    %v313 = vmul.f32 %v307, %v311
    %315 = vrot.lane.b32.xlu0 %v308, 64
    %v316 = vpop.permute.xlu0 %315
    %v318 = vmul.f32 %v307, %v316
    %320 = vrot.lane.b32.xlu0 %v318, 32
    %v321 = vpop.permute.xlu0 %320
    %v323 = vadd.f32 %v313, %v321
    %v324 = vtanh.pop %v323
    %326 = vrot.lane.b32.xlu0 %v324, 64
    %v327 = vpop.permute.xlu0 %326
    %v329 = vmul.f32 %v307, %v327
    %331 = vrot.lane.b32.xlu0 %v329, 32
    %v332 = vpop.permute.xlu0 %331
    %334 = vst.msk [vmem:[#allocation3 + $0x8] sm:$0xff] %vm228, %v332
    %v335 = vld [vmem:[#allocation2 + $0x10] sm:$0xff]
    %v336 = vsel %vm228, %v332, 0
    %338 = vmatprep.subr.mxu0 0.0
    %339 = vmatpush1.msra.mxu0 0.0
    %340 = vmatprep.subr.mxu0 0.0
    %341 = vmatpush1.msra.mxu0 0.0
    %342 = vmatprep.subr.mxu0 0.0
    %343 = vmatpush1.msra.mxu0 0.0
    %344 = vmatprep.subr.mxu0 0.0
    %345 = vmatpush1.msra.mxu0 0.0
    %346 = vmatprep.subr.mxu0 0.0
    %347 = vmatpush1.msra.mxu0 0.0
    %348 = vmatprep.subr.mxu0 0.0
    %349 = vmatpush1.msra.mxu0 0.0
    %350 = vmatprep.subr.mxu0 0.0
    %351 = vmatpush1.msra.mxu0 0.0
    %352 = vmatprep.subr.mxu0 0.0
    %353 = vmatpush1.msra.mxu0 0.0
    %354 = vmatprep.subr.mxu0 0.0
    %355 = vmatpush1.msra.mxu0 0.0
    %356 = vmatprep.subr.mxu0 0.0
    %357 = vmatpush1.msra.mxu0 0.0
    %358 = vmatprep.subr.mxu0 0.0
    %359 = vmatpush1.msra.mxu0 0.0
    %360 = vmatprep.subr.mxu0 0.0
    %361 = vmatpush1.msra.mxu0 0.0
    %362 = vmatprep.subr.mxu0 0.0
    %363 = vmatpush1.msra.mxu0 %v206
    %364 = vmatprep.subr.mxu0 0.0
    %365 = vmatpush1.msra.mxu0 %v205
    %366 = vmatprep.subr.mxu0 0.0
    %367 = vmatpush1.msra.mxu0 %v204
    %368 = vmatprep.subr.mxu0 0.0
    %369 = vmatpush1.msra.mxu0 %v203
    %370 = vmatprep.subr.mxu0 0.0
    %371 = vmatpush2.msra.mxu0 0.0
    %372 = vmatprep.subr.mxu0 0.0
    %373 = vmatpush2.msra.mxu0 0.0
    %374 = vmatprep.subr.mxu0 0.0
    %375 = vmatpush2.msra.mxu0 0.0
    %376 = vmatprep.subr.mxu0 0.0
    %377 = vmatpush2.msra.mxu0 0.0
    %378 = vmatprep.subr.mxu0 0.0
    %379 = vmatpush2.msra.mxu0 0.0
    %380 = vmatprep.subr.mxu0 0.0
    %381 = vmatpush2.msra.mxu0 0.0
    %382 = vmatprep.subr.mxu0 0.0
    %383 = vmatpush2.msra.mxu0 0.0
    %384 = vmatprep.subr.mxu0 0.0
    %385 = vmatpush2.msra.mxu0 0.0
    %386 = vmatprep.subr.mxu0 0.0
    %387 = vmatpush2.msra.mxu0 0.0
    %388 = vmatprep.subr.mxu0 0.0
    %389 = vmatpush2.msra.mxu0 0.0
    %390 = vmatprep.subr.mxu0 0.0
    %391 = vmatpush2.msra.mxu0 0.0
    %392 = vmatprep.subr.mxu0 0.0
    %393 = vmatpush2.msra.mxu0 0.0
    %394 = vmatprep.subr.mxu0 0.0
    %395 = vmatpush2.msra.mxu0 0.0
    %396 = vmatprep.subr.mxu0 0.0
    %397 = vmatpush2.msra.mxu0 0.0
    %398 = vmatprep.subr.mxu0 0.0
    %399 = vmatpush2.msra.mxu0 0.0
    %400 = vmatprep.subr.mxu0 0.0
    %401 = vmatpush2.msra.mxu0 0.0
    %402 = vmatprep.mubr.f32.mxu0 0.0
    %403 = vmatmul.mubr.f32.gmra.mxu0 %v336
    %v404 = vpop.f32.mrf.mxu0
    %v405 = vadd.f32 0.0, %v404
    %v406 = vpop.f32.mrf.mxu0
    %407 = vdwg.mxu0
    %v408 = vadd.f32 %v335, %v405
    %v409 = vmul.f32 %v408, 0.5
    %v410 = vtanh.pop %v409
    %v411 = vmul.f32 %v410, 0.5
    %v412 = vadd.f32 %v411, 0.5
    %v413 = vtanh.pop %v408
    %v414 = vmul.f32 %v412, %v323
    %416 = vrot.lane.b32.xlu0 %v413, 64
    %v417 = vpop.permute.xlu0 %416
    %v419 = vmul.f32 %v412, %v417
    %421 = vrot.lane.b32.xlu0 %v419, 32
    %v422 = vpop.permute.xlu0 %421
    %v424 = vadd.f32 %v414, %v422
    %v425 = vtanh.pop %v424
    %427 = vrot.lane.b32.xlu0 %v425, 64
    %v428 = vpop.permute.xlu0 %427
    %v430 = vmul.f32 %v412, %v428
    %432 = vrot.lane.b32.xlu0 %v430, 32
    %v433 = vpop.permute.xlu0 %432
    %435 = vst.msk [vmem:[#allocation3 + $0x10] sm:$0xff] %vm228, %v433
    %v436 = vld [vmem:[#allocation2 + $0x18] sm:$0xff]
    %v437 = vsel %vm228, %v433, 0
    %439 = vmatprep.subr.mxu0 0.0
    %440 = vmatpush1.msra.mxu0 0.0
    %441 = vmatprep.subr.mxu0 0.0
    %442 = vmatpush1.msra.mxu0 0.0
    %443 = vmatprep.subr.mxu0 0.0
    %444 = vmatpush1.msra.mxu0 0.0
    %445 = vmatprep.subr.mxu0 0.0
    %446 = vmatpush1.msra.mxu0 0.0
    %447 = vmatprep.subr.mxu0 0.0
    %448 = vmatpush1.msra.mxu0 0.0
    %449 = vmatprep.subr.mxu0 0.0
    %450 = vmatpush1.msra.mxu0 0.0
    %451 = vmatprep.subr.mxu0 0.0
    %452 = vmatpush1.msra.mxu0 0.0
    %453 = vmatprep.subr.mxu0 0.0
    %454 = vmatpush1.msra.mxu0 0.0
    %455 = vmatprep.subr.mxu0 0.0
    %456 = vmatpush1.msra.mxu0 0.0
    %457 = vmatprep.subr.mxu0 0.0
    %458 = vmatpush1.msra.mxu0 0.0
    %459 = vmatprep.subr.mxu0 0.0
    %460 = vmatpush1.msra.mxu0 0.0
    %461 = vmatprep.subr.mxu0 0.0
    %462 = vmatpush1.msra.mxu0 0.0
    %463 = vmatprep.subr.mxu0 0.0
    %464 = vmatpush1.msra.mxu0 %v206
    %465 = vmatprep.subr.mxu0 0.0
    %466 = vmatpush1.msra.mxu0 %v205
    %467 = vmatprep.subr.mxu0 0.0
    %468 = vmatpush1.msra.mxu0 %v204
    %469 = vmatprep.subr.mxu0 0.0
    %470 = vmatpush1.msra.mxu0 %v203
    %471 = vmatprep.subr.mxu0 0.0
    %472 = vmatpush2.msra.mxu0 0.0
    %473 = vmatprep.subr.mxu0 0.0
    %474 = vmatpush2.msra.mxu0 0.0
    %475 = vmatprep.subr.mxu0 0.0
    %476 = vmatpush2.msra.mxu0 0.0
    %477 = vmatprep.subr.mxu0 0.0
    %478 = vmatpush2.msra.mxu0 0.0
    %479 = vmatprep.subr.mxu0 0.0
    %480 = vmatpush2.msra.mxu0 0.0
    %481 = vmatprep.subr.mxu0 0.0
    %482 = vmatpush2.msra.mxu0 0.0
    %483 = vmatprep.subr.mxu0 0.0
    %484 = vmatpush2.msra.mxu0 0.0
    %485 = vmatprep.subr.mxu0 0.0
    %486 = vmatpush2.msra.mxu0 0.0
    %487 = vmatprep.subr.mxu0 0.0
    %488 = vmatpush2.msra.mxu0 0.0
    %489 = vmatprep.subr.mxu0 0.0
    %490 = vmatpush2.msra.mxu0 0.0
    %491 = vmatprep.subr.mxu0 0.0
    %492 = vmatpush2.msra.mxu0 0.0
    %493 = vmatprep.subr.mxu0 0.0
    %494 = vmatpush2.msra.mxu0 0.0
    %495 = vmatprep.subr.mxu0 0.0
    %496 = vmatpush2.msra.mxu0 0.0
    %497 = vmatprep.subr.mxu0 0.0
    %498 = vmatpush2.msra.mxu0 0.0
    %499 = vmatprep.subr.mxu0 0.0
    %500 = vmatpush2.msra.mxu0 0.0
    %501 = vmatprep.subr.mxu0 0.0
    %502 = vmatpush2.msra.mxu0 0.0
    %503 = vmatprep.mubr.f32.mxu0 0.0
    %504 = vmatmul.mubr.f32.gmra.mxu0 %v437
    %v505 = vpop.f32.mrf.mxu0
    %v506 = vadd.f32 0.0, %v505
    %v507 = vpop.f32.mrf.mxu0
    %508 = vdwg.mxu0
    %v509 = vadd.f32 %v436, %v506
    %v510 = vmul.f32 %v509, 0.5
    %v511 = vtanh.pop %v510
    %v512 = vmul.f32 %v511, 0.5
    %v513 = vadd.f32 %v512, 0.5
    %v514 = vtanh.pop %v509
    %v515 = vmul.f32 %v513, %v424
    %517 = vrot.lane.b32.xlu0 %v514, 64
    %v518 = vpop.permute.xlu0 %517
    %v520 = vmul.f32 %v513, %v518
    %522 = vrot.lane.b32.xlu0 %v520, 32
    %v523 = vpop.permute.xlu0 %522
    %v525 = vadd.f32 %v515, %v523
    %v526 = vtanh.pop %v525
    %528 = vrot.lane.b32.xlu0 %v526, 64
    %v529 = vpop.permute.xlu0 %528
    %v531 = vmul.f32 %v513, %v529
    %533 = vrot.lane.b32.xlu0 %v531, 32
    %v534 = vpop.permute.xlu0 %533
    %536 = vst.msk [vmem:[#allocation3 + $0x18] sm:$0xff] %vm228, %v534
    %v537 = vld [vmem:[#allocation2 + $0x20] sm:$0xff]
    %v538 = vsel %vm228, %v534, 0
    %540 = vmatprep.subr.mxu0 0.0
    %541 = vmatpush1.msra.mxu0 0.0
    %542 = vmatprep.subr.mxu0 0.0
    %543 = vmatpush1.msra.mxu0 0.0
    %544 = vmatprep.subr.mxu0 0.0
    %545 = vmatpush1.msra.mxu0 0.0
    %546 = vmatprep.subr.mxu0 0.0
    %547 = vmatpush1.msra.mxu0 0.0
    %548 = vmatprep.subr.mxu0 0.0
    %549 = vmatpush1.msra.mxu0 0.0
    %550 = vmatprep.subr.mxu0 0.0
    %551 = vmatpush1.msra.mxu0 0.0
    %552 = vmatprep.subr.mxu0 0.0
    %553 = vmatpush1.msra.mxu0 0.0
    %554 = vmatprep.subr.mxu0 0.0
    %555 = vmatpush1.msra.mxu0 0.0
    %556 = vmatprep.subr.mxu0 0.0
    %557 = vmatpush1.msra.mxu0 0.0
    %558 = vmatprep.subr.mxu0 0.0
    %559 = vmatpush1.msra.mxu0 0.0
    %560 = vmatprep.subr.mxu0 0.0
    %561 = vmatpush1.msra.mxu0 0.0
    %562 = vmatprep.subr.mxu0 0.0
    %563 = vmatpush1.msra.mxu0 0.0
    %564 = vmatprep.subr.mxu0 0.0
    %565 = vmatpush1.msra.mxu0 %v206
    %566 = vmatprep.subr.mxu0 0.0
    %567 = vmatpush1.msra.mxu0 %v205
    %568 = vmatprep.subr.mxu0 0.0
    %569 = vmatpush1.msra.mxu0 %v204
    %570 = vmatprep.subr.mxu0 0.0
    %571 = vmatpush1.msra.mxu0 %v203
    %572 = vmatprep.subr.mxu0 0.0
    %573 = vmatpush2.msra.mxu0 0.0
    %574 = vmatprep.subr.mxu0 0.0
    %575 = vmatpush2.msra.mxu0 0.0
    %576 = vmatprep.subr.mxu0 0.0
    %577 = vmatpush2.msra.mxu0 0.0
    %578 = vmatprep.subr.mxu0 0.0
    %579 = vmatpush2.msra.mxu0 0.0
    %580 = vmatprep.subr.mxu0 0.0
    %581 = vmatpush2.msra.mxu0 0.0
    %582 = vmatprep.subr.mxu0 0.0
    %583 = vmatpush2.msra.mxu0 0.0
    %584 = vmatprep.subr.mxu0 0.0
    %585 = vmatpush2.msra.mxu0 0.0
    %586 = vmatprep.subr.mxu0 0.0
    %587 = vmatpush2.msra.mxu0 0.0
    %588 = vmatprep.subr.mxu0 0.0
    %589 = vmatpush2.msra.mxu0 0.0
    %590 = vmatprep.subr.mxu0 0.0
    %591 = vmatpush2.msra.mxu0 0.0
    %592 = vmatprep.subr.mxu0 0.0
    %593 = vmatpush2.msra.mxu0 0.0
    %594 = vmatprep.subr.mxu0 0.0
    %595 = vmatpush2.msra.mxu0 0.0
    %596 = vmatprep.subr.mxu0 0.0
    %597 = vmatpush2.msra.mxu0 0.0
    %598 = vmatprep.subr.mxu0 0.0
    %599 = vmatpush2.msra.mxu0 0.0
    %600 = vmatprep.subr.mxu0 0.0
    %601 = vmatpush2.msra.mxu0 0.0
    %602 = vmatprep.subr.mxu0 0.0
    %603 = vmatpush2.msra.mxu0 0.0
    %604 = vmatprep.mubr.f32.mxu0 0.0
    %605 = vmatmul.mubr.f32.gmra.mxu0 %v538
    %v606 = vpop.f32.mrf.mxu0
    %v607 = vadd.f32 0.0, %v606
    %v608 = vpop.f32.mrf.mxu0
    %609 = vdwg.mxu0
    %v610 = vadd.f32 %v537, %v607
    %v611 = vmul.f32 %v610, 0.5
    %v612 = vtanh.pop %v611
    %v613 = vmul.f32 %v612, 0.5
    %v614 = vadd.f32 %v613, 0.5
    %v615 = vtanh.pop %v610
    %v616 = vmul.f32 %v614, %v525
    %618 = vrot.lane.b32.xlu0 %v615, 64
    %v619 = vpop.permute.xlu0 %618
    %v621 = vmul.f32 %v614, %v619
    %623 = vrot.lane.b32.xlu0 %v621, 32
    %v624 = vpop.permute.xlu0 %623
    %v626 = vadd.f32 %v616, %v624
    %v627 = vtanh.pop %v626
    %629 = vrot.lane.b32.xlu0 %v627, 64
    %v630 = vpop.permute.xlu0 %629
    %v632 = vmul.f32 %v614, %v630
    %634 = vrot.lane.b32.xlu0 %v632, 32
    %v635 = vpop.permute.xlu0 %634
    %637 = vst.msk [vmem:[#allocation3 + $0x20] sm:$0xff] %vm228, %v635
    %v638 = vld [vmem:[#allocation2 + $0x28] sm:$0xff]
    %v639 = vsel %vm228, %v635, 0
    %641 = vmatprep.subr.mxu0 0.0
    %642 = vmatpush1.msra.mxu0 0.0
    %643 = vmatprep.subr.mxu0 0.0
    %644 = vmatpush1.msra.mxu0 0.0
    %645 = vmatprep.subr.mxu0 0.0
    %646 = vmatpush1.msra.mxu0 0.0
    %647 = vmatprep.subr.mxu0 0.0
    %648 = vmatpush1.msra.mxu0 0.0
    %649 = vmatprep.subr.mxu0 0.0
    %650 = vmatpush1.msra.mxu0 0.0
    %651 = vmatprep.subr.mxu0 0.0
    %652 = vmatpush1.msra.mxu0 0.0
    %653 = vmatprep.subr.mxu0 0.0
    %654 = vmatpush1.msra.mxu0 0.0
    %655 = vmatprep.subr.mxu0 0.0
    %656 = vmatpush1.msra.mxu0 0.0
    %657 = vmatprep.subr.mxu0 0.0
    %658 = vmatpush1.msra.mxu0 0.0
    %659 = vmatprep.subr.mxu0 0.0
    %660 = vmatpush1.msra.mxu0 0.0
    %661 = vmatprep.subr.mxu0 0.0
    %662 = vmatpush1.msra.mxu0 0.0
    %663 = vmatprep.subr.mxu0 0.0
    %664 = vmatpush1.msra.mxu0 0.0
    %665 = vmatprep.subr.mxu0 0.0
    %666 = vmatpush1.msra.mxu0 %v206
    %667 = vmatprep.subr.mxu0 0.0
    %668 = vmatpush1.msra.mxu0 %v205
    %669 = vmatprep.subr.mxu0 0.0
    %670 = vmatpush1.msra.mxu0 %v204
    %671 = vmatprep.subr.mxu0 0.0
    %672 = vmatpush1.msra.mxu0 %v203
    %673 = vmatprep.subr.mxu0 0.0
    %674 = vmatpush2.msra.mxu0 0.0
    %675 = vmatprep.subr.mxu0 0.0
    %676 = vmatpush2.msra.mxu0 0.0
    %677 = vmatprep.subr.mxu0 0.0
    %678 = vmatpush2.msra.mxu0 0.0
    %679 = vmatprep.subr.mxu0 0.0
    %680 = vmatpush2.msra.mxu0 0.0
    %681 = vmatprep.subr.mxu0 0.0
    %682 = vmatpush2.msra.mxu0 0.0
    %683 = vmatprep.subr.mxu0 0.0
    %684 = vmatpush2.msra.mxu0 0.0
    %685 = vmatprep.subr.mxu0 0.0
    %686 = vmatpush2.msra.mxu0 0.0
    %687 = vmatprep.subr.mxu0 0.0
    %688 = vmatpush2.msra.mxu0 0.0
    %689 = vmatprep.subr.mxu0 0.0
    %690 = vmatpush2.msra.mxu0 0.0
    %691 = vmatprep.subr.mxu0 0.0
    %692 = vmatpush2.msra.mxu0 0.0
    %693 = vmatprep.subr.mxu0 0.0
    %694 = vmatpush2.msra.mxu0 0.0
    %695 = vmatprep.subr.mxu0 0.0
    %696 = vmatpush2.msra.mxu0 0.0
    %697 = vmatprep.subr.mxu0 0.0
    %698 = vmatpush2.msra.mxu0 0.0
    %699 = vmatprep.subr.mxu0 0.0
    %700 = vmatpush2.msra.mxu0 0.0
    %701 = vmatprep.subr.mxu0 0.0
    %702 = vmatpush2.msra.mxu0 0.0
    %703 = vmatprep.subr.mxu0 0.0
    %704 = vmatpush2.msra.mxu0 0.0
    %705 = vmatprep.mubr.f32.mxu0 0.0
    %706 = vmatmul.mubr.f32.gmra.mxu0 %v639
    %v707 = vpop.f32.mrf.mxu0
    %v708 = vadd.f32 0.0, %v707
    %v709 = vpop.f32.mrf.mxu0
    %710 = vdwg.mxu0
    %v711 = vadd.f32 %v638, %v708
    %v712 = vmul.f32 %v711, 0.5
    %v713 = vtanh.pop %v712
    %v714 = vmul.f32 %v713, 0.5
    %v715 = vadd.f32 %v714, 0.5
    %v716 = vtanh.pop %v711
    %v717 = vmul.f32 %v715, %v626
    %719 = vrot.lane.b32.xlu0 %v716, 64
    %v720 = vpop.permute.xlu0 %719
    %v722 = vmul.f32 %v715, %v720
    %724 = vrot.lane.b32.xlu0 %v722, 32
    %v725 = vpop.permute.xlu0 %724
    %v727 = vadd.f32 %v717, %v725
    %v728 = vtanh.pop %v727
    %730 = vrot.lane.b32.xlu0 %v728, 64
    %v731 = vpop.permute.xlu0 %730
    %v733 = vmul.f32 %v715, %v731
    %735 = vrot.lane.b32.xlu0 %v733, 32
    %v736 = vpop.permute.xlu0 %735
    %738 = vst.msk [vmem:[#allocation3 + $0x28] sm:$0xff] %vm228, %v736
    %v739 = vld [vmem:[#allocation2 + $0x30] sm:$0xff]
    %v740 = vsel %vm228, %v736, 0
    %742 = vmatprep.subr.mxu0 0.0
    %743 = vmatpush1.msra.mxu0 0.0
    %744 = vmatprep.subr.mxu0 0.0
    %745 = vmatpush1.msra.mxu0 0.0
    %746 = vmatprep.subr.mxu0 0.0
    %747 = vmatpush1.msra.mxu0 0.0
    %748 = vmatprep.subr.mxu0 0.0
    %749 = vmatpush1.msra.mxu0 0.0
    %750 = vmatprep.subr.mxu0 0.0
    %751 = vmatpush1.msra.mxu0 0.0
    %752 = vmatprep.subr.mxu0 0.0
    %753 = vmatpush1.msra.mxu0 0.0
    %754 = vmatprep.subr.mxu0 0.0
    %755 = vmatpush1.msra.mxu0 0.0
    %756 = vmatprep.subr.mxu0 0.0
    %757 = vmatpush1.msra.mxu0 0.0
    %758 = vmatprep.subr.mxu0 0.0
    %759 = vmatpush1.msra.mxu0 0.0
    %760 = vmatprep.subr.mxu0 0.0
    %761 = vmatpush1.msra.mxu0 0.0
    %762 = vmatprep.subr.mxu0 0.0
    %763 = vmatpush1.msra.mxu0 0.0
    %764 = vmatprep.subr.mxu0 0.0
    %765 = vmatpush1.msra.mxu0 0.0
    %766 = vmatprep.subr.mxu0 0.0
    %767 = vmatpush1.msra.mxu0 %v206
    %768 = vmatprep.subr.mxu0 0.0
    %769 = vmatpush1.msra.mxu0 %v205
    %770 = vmatprep.subr.mxu0 0.0
    %771 = vmatpush1.msra.mxu0 %v204
    %772 = vmatprep.subr.mxu0 0.0
    %773 = vmatpush1.msra.mxu0 %v203
    %774 = vmatprep.subr.mxu0 0.0
    %775 = vmatpush2.msra.mxu0 0.0
    %776 = vmatprep.subr.mxu0 0.0
    %777 = vmatpush2.msra.mxu0 0.0
    %778 = vmatprep.subr.mxu0 0.0
    %779 = vmatpush2.msra.mxu0 0.0
    %780 = vmatprep.subr.mxu0 0.0
    %781 = vmatpush2.msra.mxu0 0.0
    %782 = vmatprep.subr.mxu0 0.0
    %783 = vmatpush2.msra.mxu0 0.0
    %784 = vmatprep.subr.mxu0 0.0
    %785 = vmatpush2.msra.mxu0 0.0
    %786 = vmatprep.subr.mxu0 0.0
    %787 = vmatpush2.msra.mxu0 0.0
    %788 = vmatprep.subr.mxu0 0.0
    %789 = vmatpush2.msra.mxu0 0.0
    %790 = vmatprep.subr.mxu0 0.0
    %791 = vmatpush2.msra.mxu0 0.0
    %792 = vmatprep.subr.mxu0 0.0
    %793 = vmatpush2.msra.mxu0 0.0
    %794 = vmatprep.subr.mxu0 0.0
    %795 = vmatpush2.msra.mxu0 0.0
    %796 = vmatprep.subr.mxu0 0.0
    %797 = vmatpush2.msra.mxu0 0.0
    %798 = vmatprep.subr.mxu0 0.0
    %799 = vmatpush2.msra.mxu0 0.0
    %800 = vmatprep.subr.mxu0 0.0
    %801 = vmatpush2.msra.mxu0 0.0
    %802 = vmatprep.subr.mxu0 0.0
    %803 = vmatpush2.msra.mxu0 0.0
    %804 = vmatprep.subr.mxu0 0.0
    %805 = vmatpush2.msra.mxu0 0.0
    %806 = vmatprep.mubr.f32.mxu0 0.0
    %807 = vmatmul.mubr.f32.gmra.mxu0 %v740
    %v808 = vpop.f32.mrf.mxu0
    %v809 = vadd.f32 0.0, %v808
    %v810 = vpop.f32.mrf.mxu0
    %811 = vdwg.mxu0
    %v812 = vadd.f32 %v739, %v809
    %v813 = vmul.f32 %v812, 0.5
    %v814 = vtanh.pop %v813
    %v815 = vmul.f32 %v814, 0.5
    %v816 = vadd.f32 %v815, 0.5
    %v817 = vtanh.pop %v812
    %v818 = vmul.f32 %v816, %v727
    %820 = vrot.lane.b32.xlu0 %v817, 64
    %v821 = vpop.permute.xlu0 %820
    %v823 = vmul.f32 %v816, %v821
    %825 = vrot.lane.b32.xlu0 %v823, 32
    %v826 = vpop.permute.xlu0 %825
    %v828 = vadd.f32 %v818, %v826
    %v829 = vtanh.pop %v828
    %831 = vrot.lane.b32.xlu0 %v829, 64
    %v832 = vpop.permute.xlu0 %831
    %v834 = vmul.f32 %v816, %v832
    %836 = vrot.lane.b32.xlu0 %v834, 32
    %v837 = vpop.permute.xlu0 %836
    %839 = vst.msk [vmem:[#allocation3 + $0x30] sm:$0xff] %vm228, %v837
    %v840 = vld [vmem:[#allocation2 + $0x38] sm:$0xff]
    %v841 = vsel %vm228, %v837, 0
    %843 = vmatprep.subr.mxu0 0.0
    %844 = vmatpush1.msra.mxu0 0.0
    %845 = vmatprep.subr.mxu0 0.0
    %846 = vmatpush1.msra.mxu0 0.0
    %847 = vmatprep.subr.mxu0 0.0
    %848 = vmatpush1.msra.mxu0 0.0
    %849 = vmatprep.subr.mxu0 0.0
    %850 = vmatpush1.msra.mxu0 0.0
    %851 = vmatprep.subr.mxu0 0.0
    %852 = vmatpush1.msra.mxu0 0.0
    %853 = vmatprep.subr.mxu0 0.0
    %854 = vmatpush1.msra.mxu0 0.0
    %855 = vmatprep.subr.mxu0 0.0
    %856 = vmatpush1.msra.mxu0 0.0
    %857 = vmatprep.subr.mxu0 0.0
    %858 = vmatpush1.msra.mxu0 0.0
    %859 = vmatprep.subr.mxu0 0.0
    %860 = vmatpush1.msra.mxu0 0.0
    %861 = vmatprep.subr.mxu0 0.0
    %862 = vmatpush1.msra.mxu0 0.0
    %863 = vmatprep.subr.mxu0 0.0
    %864 = vmatpush1.msra.mxu0 0.0
    %865 = vmatprep.subr.mxu0 0.0
    %866 = vmatpush1.msra.mxu0 0.0
    %867 = vmatprep.subr.mxu0 0.0
    %868 = vmatpush1.msra.mxu0 %v206
    %869 = vmatprep.subr.mxu0 0.0
    %870 = vmatpush1.msra.mxu0 %v205
    %871 = vmatprep.subr.mxu0 0.0
    %872 = vmatpush1.msra.mxu0 %v204
    %873 = vmatprep.subr.mxu0 0.0
    %874 = vmatpush1.msra.mxu0 %v203
    %875 = vmatprep.subr.mxu0 0.0
    %876 = vmatpush2.msra.mxu0 0.0
    %877 = vmatprep.subr.mxu0 0.0
    %878 = vmatpush2.msra.mxu0 0.0
    %879 = vmatprep.subr.mxu0 0.0
    %880 = vmatpush2.msra.mxu0 0.0
    %881 = vmatprep.subr.mxu0 0.0
    %882 = vmatpush2.msra.mxu0 0.0
    %883 = vmatprep.subr.mxu0 0.0
    %884 = vmatpush2.msra.mxu0 0.0
    %885 = vmatprep.subr.mxu0 0.0
    %886 = vmatpush2.msra.mxu0 0.0
    %887 = vmatprep.subr.mxu0 0.0
    %888 = vmatpush2.msra.mxu0 0.0
    %889 = vmatprep.subr.mxu0 0.0
    %890 = vmatpush2.msra.mxu0 0.0
    %891 = vmatprep.subr.mxu0 0.0
    %892 = vmatpush2.msra.mxu0 0.0
    %893 = vmatprep.subr.mxu0 0.0
    %894 = vmatpush2.msra.mxu0 0.0
    %895 = vmatprep.subr.mxu0 0.0
    %896 = vmatpush2.msra.mxu0 0.0
    %897 = vmatprep.subr.mxu0 0.0
    %898 = vmatpush2.msra.mxu0 0.0
    %899 = vmatprep.subr.mxu0 0.0
    %900 = vmatpush2.msra.mxu0 0.0
    %901 = vmatprep.subr.mxu0 0.0
    %902 = vmatpush2.msra.mxu0 0.0
    %903 = vmatprep.subr.mxu0 0.0
    %904 = vmatpush2.msra.mxu0 0.0
    %905 = vmatprep.subr.mxu0 0.0
    %906 = vmatpush2.msra.mxu0 0.0
    %907 = vmatprep.mubr.f32.mxu0 0.0
    %908 = vmatmul.mubr.f32.gmra.mxu0 %v841
    %v909 = vpop.f32.mrf.mxu0
    %v910 = vadd.f32 0.0, %v909
    %v911 = vpop.f32.mrf.mxu0
    %912 = vdwg.mxu0
    %v913 = vadd.f32 %v840, %v910
    %v914 = vmul.f32 %v913, 0.5
    %v915 = vtanh.pop %v914
    %v916 = vmul.f32 %v915, 0.5
    %v917 = vadd.f32 %v916, 0.5
    %v918 = vtanh.pop %v913
    %v919 = vmul.f32 %v917, %v828
    %921 = vrot.lane.b32.xlu0 %v918, 64
    %v922 = vpop.permute.xlu0 %921
    %v924 = vmul.f32 %v917, %v922
    %926 = vrot.lane.b32.xlu0 %v924, 32
    %v927 = vpop.permute.xlu0 %926
    %v929 = vadd.f32 %v919, %v927
    %v930 = vtanh.pop %v929
    %932 = vrot.lane.b32.xlu0 %v930, 64
    %v933 = vpop.permute.xlu0 %932
    %v935 = vmul.f32 %v917, %v933
    %937 = vrot.lane.b32.xlu0 %v935, 32
    %v938 = vpop.permute.xlu0 %937
    %940 = vst.msk [vmem:[#allocation3 + $0x38] sm:$0xff] %vm228, %v938
    %v941 = vld [vmem:[#allocation3] sm:$0xff]
    %v942 = vld [vmem:[#allocation3 + $0x8] sm:$0xff]
    %v943 = vld [vmem:[#allocation3 + $0x10] sm:$0xff]
    %v944 = vld [vmem:[#allocation3 + $0x18] sm:$0xff]
    %v945 = vld [vmem:[#allocation3 + $0x20] sm:$0xff]
    %v946 = vld [vmem:[#allocation3 + $0x28] sm:$0xff]
    %v947 = vld [vmem:[#allocation3 + $0x30] sm:$0xff]
    %v948 = vld [vmem:[#allocation3 + $0x38] sm:$0xff]
    %v949 = vld [vmem:[%s4] sm:$0xff]
    %v950 = vld [vmem:[%s4 + $0x8] sm:$0xff]
    %v951 = vld [vmem:[%s4 + $0x10] sm:$0xff]
    %v952 = vld [vmem:[%s4 + $0x18] sm:$0xff]
    %v953 = vld [vmem:[%s6] sm:$0x1]
    %v955 = vlaneseq
    %v956 = vshrl.u32 %v955, 7
    %v957 = vsub.s32 0, %v956
    %v958 = vrot.slane %v953, %v957
    %v961 = vsel %vm228, %v941, 0
    %v964 = vsel %vm228, %v942, 0
    %v967 = vsel %vm228, %v943, 0
    %v970 = vsel %vm228, %v944, 0
    %v973 = vsel %vm228, %v945, 0
    %v976 = vsel %vm228, %v946, 0
    %v979 = vsel %vm228, %v947, 0
    %v982 = vsel %vm228, %v948, 0
    %984 = vmatprep.subr.mxu0 0.0
    %985 = vmatpush1.msra.mxu0 0.0
    %986 = vmatprep.subr.mxu0 0.0
    %987 = vmatpush1.msra.mxu0 0.0
    %988 = vmatprep.subr.mxu0 0.0
    %989 = vmatpush1.msra.mxu0 0.0
    %990 = vmatprep.subr.mxu0 0.0
    %991 = vmatpush1.msra.mxu0 0.0
    %992 = vmatprep.subr.mxu0 0.0
    %993 = vmatpush1.msra.mxu0 0.0
    %994 = vmatprep.subr.mxu0 0.0
    %995 = vmatpush1.msra.mxu0 0.0
    %996 = vmatprep.subr.mxu0 0.0
    %997 = vmatpush1.msra.mxu0 0.0
    %998 = vmatprep.subr.mxu0 0.0
    %999 = vmatpush1.msra.mxu0 0.0
    %1000 = vmatprep.subr.mxu0 0.0
    %1001 = vmatpush1.msra.mxu0 0.0
    %1002 = vmatprep.subr.mxu0 0.0
    %1003 = vmatpush1.msra.mxu0 0.0
    %1004 = vmatprep.subr.mxu0 0.0
    %1005 = vmatpush1.msra.mxu0 0.0
    %1006 = vmatprep.subr.mxu0 0.0
    %1007 = vmatpush1.msra.mxu0 0.0
    %1008 = vmatprep.subr.mxu0 0.0
    %1009 = vmatpush1.msra.mxu0 %v952
    %1010 = vmatprep.subr.mxu0 0.0
    %1011 = vmatpush1.msra.mxu0 %v951
    %1012 = vmatprep.subr.mxu0 0.0
    %1013 = vmatpush1.msra.mxu0 %v950
    %1014 = vmatprep.subr.mxu0 0.0
    %1015 = vmatpush1.msra.mxu0 %v949
    %1016 = vmatprep.subr.mxu0 0.0
    %1017 = vmatpush2.msra.mxu0 0.0
    %1018 = vmatprep.subr.mxu0 0.0
    %1019 = vmatpush2.msra.mxu0 0.0
    %1020 = vmatprep.subr.mxu0 0.0
    %1021 = vmatpush2.msra.mxu0 0.0
    %1022 = vmatprep.subr.mxu0 0.0
    %1023 = vmatpush2.msra.mxu0 0.0
    %1024 = vmatprep.subr.mxu0 0.0
    %1025 = vmatpush2.msra.mxu0 0.0
    %1026 = vmatprep.subr.mxu0 0.0
    %1027 = vmatpush2.msra.mxu0 0.0
    %1028 = vmatprep.subr.mxu0 0.0
    %1029 = vmatpush2.msra.mxu0 0.0
    %1030 = vmatprep.subr.mxu0 0.0
    %1031 = vmatpush2.msra.mxu0 0.0
    %1032 = vmatprep.subr.mxu0 0.0
    %1033 = vmatpush2.msra.mxu0 0.0
    %1034 = vmatprep.subr.mxu0 0.0
    %1035 = vmatpush2.msra.mxu0 0.0
    %1036 = vmatprep.subr.mxu0 0.0
    %1037 = vmatpush2.msra.mxu0 0.0
    %1038 = vmatprep.subr.mxu0 0.0
    %1039 = vmatpush2.msra.mxu0 0.0
    %1040 = vmatprep.subr.mxu0 0.0
    %1041 = vmatpush2.msra.mxu0 0.0
    %1042 = vmatprep.subr.mxu0 0.0
    %1043 = vmatpush2.msra.mxu0 0.0
    %1044 = vmatprep.subr.mxu0 0.0
    %1045 = vmatpush2.msra.mxu0 0.0
    %1046 = vmatprep.subr.mxu0 0.0
    %1047 = vmatpush2.msra.mxu0 0.0
    %1048 = vmatprep.mubr.f32.mxu0 0.0
    %1049 = vmatmul.mubr.f32.gmra.mxu0 %v961
    %v1050 = vpop.f32.mrf.mxu0
    %v1051 = vadd.f32 %v958, %v1050
    %v1052 = vpop.f32.mrf.mxu0
    %1053 = vmatprep.mubr.f32.mxu0 0.0
    %1054 = vmatmul.mubr.f32.gmra.mxu0 %v964
    %v1055 = vpop.f32.mrf.mxu0
    %v1056 = vadd.f32 %v958, %v1055
    %v1057 = vpop.f32.mrf.mxu0
    %1058 = vmatprep.mubr.f32.mxu0 0.0
    %1059 = vmatmul.mubr.f32.gmra.mxu0 %v967
    %v1060 = vpop.f32.mrf.mxu0
    %v1061 = vadd.f32 %v958, %v1060
    %v1062 = vpop.f32.mrf.mxu0
    %1063 = vmatprep.mubr.f32.mxu0 0.0
    %1064 = vmatmul.mubr.f32.gmra.mxu0 %v970
    %v1065 = vpop.f32.mrf.mxu0
    %v1066 = vadd.f32 %v958, %v1065
    %v1067 = vpop.f32.mrf.mxu0
    %1068 = vmatprep.mubr.f32.mxu0 0.0
    %1069 = vmatmul.mubr.f32.gmra.mxu0 %v973
    %v1070 = vpop.f32.mrf.mxu0
    %v1071 = vadd.f32 %v958, %v1070
    %v1072 = vpop.f32.mrf.mxu0
    %1073 = vmatprep.mubr.f32.mxu0 0.0
    %1074 = vmatmul.mubr.f32.gmra.mxu0 %v976
    %v1075 = vpop.f32.mrf.mxu0
    %v1076 = vadd.f32 %v958, %v1075
    %v1077 = vpop.f32.mrf.mxu0
    %1078 = vmatprep.mubr.f32.mxu0 0.0
    %1079 = vmatmul.mubr.f32.gmra.mxu0 %v979
    %v1080 = vpop.f32.mrf.mxu0
    %v1081 = vadd.f32 %v958, %v1080
    %v1082 = vpop.f32.mrf.mxu0
    %1083 = vmatprep.mubr.f32.mxu0 0.0
    %1084 = vmatmul.mubr.f32.gmra.mxu0 %v982
    %v1085 = vpop.f32.mrf.mxu0
    %v1086 = vadd.f32 %v958, %v1085
    %v1087 = vpop.f32.mrf.mxu0
    %1088 = vdwg.mxu0
    %1089 = vst [vmem:[#allocation2] sm:$0xff] %v1051
    %1090 = vst [vmem:[#allocation2 + $0x8] sm:$0xff] %v1056
    %1091 = vst [vmem:[#allocation2 + $0x10] sm:$0xff] %v1061
    %1092 = vst [vmem:[#allocation2 + $0x18] sm:$0xff] %v1066
    %1093 = vst [vmem:[#allocation2 + $0x20] sm:$0xff] %v1071
    %1094 = vst [vmem:[#allocation2 + $0x28] sm:$0xff] %v1076
    %1095 = vst [vmem:[#allocation2 + $0x30] sm:$0xff] %v1081
    %1096 = vst [vmem:[#allocation2 + $0x38] sm:$0xff] %v1086
    %v1097 = vld [vmem:[%s5] sm:$0xff]
    %v1098 = vld [vmem:[%s5 + $0x8] sm:$0xff]
    %v1099 = vld [vmem:[%s5 + $0x10] sm:$0xff]
    %v1100 = vld [vmem:[%s5 + $0x18] sm:$0xff]
    %v1101 = vld [vmem:[#allocation2] sm:$0xff]
    %v1102 = vmul.f32 %v1101, 0.5
    %v1103 = vtanh.pop %v1102
    %v1104 = vmul.f32 %v1103, 0.5
    %v1105 = vadd.f32 %v1104, 0.5
    %v1106 = vtanh.pop %v1101
    %1108 = vrot.lane.b32.xlu0 %v1106, 64
    %v1109 = vpop.permute.xlu0 %1108
    %v1111 = vmul.f32 %v1105, %v1109
    %v1112 = vtanh.pop %v1111
    %1114 = vrot.lane.b32.xlu0 %v1112, 96
    %v1115 = vpop.permute.xlu0 %1114
    %v1117 = vmul.f32 %v1105, %v1115
    %1119 = vrot.lane.b32.xlu0 %v1117, 32
    %v1120 = vpop.permute.xlu0 %1119
    %1122 = vst.msk [vmem:[#allocation3] sm:$0xff] %vm228, %v1120
    %v1123 = vld [vmem:[#allocation2 + $0x8] sm:$0xff]
    %v1124 = vsel %vm228, %v1120, 0
    %1126 = vmatprep.subr.mxu0 0.0
    %1127 = vmatpush1.msra.mxu0 0.0
    %1128 = vmatprep.subr.mxu0 0.0
    %1129 = vmatpush1.msra.mxu0 0.0
    %1130 = vmatprep.subr.mxu0 0.0
    %1131 = vmatpush1.msra.mxu0 0.0
    %1132 = vmatprep.subr.mxu0 0.0
    %1133 = vmatpush1.msra.mxu0 0.0
    %1134 = vmatprep.subr.mxu0 0.0
    %1135 = vmatpush1.msra.mxu0 0.0
    %1136 = vmatprep.subr.mxu0 0.0
    %1137 = vmatpush1.msra.mxu0 0.0
    %1138 = vmatprep.subr.mxu0 0.0
    %1139 = vmatpush1.msra.mxu0 0.0
    %1140 = vmatprep.subr.mxu0 0.0
    %1141 = vmatpush1.msra.mxu0 0.0
    %1142 = vmatprep.subr.mxu0 0.0
    %1143 = vmatpush1.msra.mxu0 0.0
    %1144 = vmatprep.subr.mxu0 0.0
    %1145 = vmatpush1.msra.mxu0 0.0
    %1146 = vmatprep.subr.mxu0 0.0
    %1147 = vmatpush1.msra.mxu0 0.0
    %1148 = vmatprep.subr.mxu0 0.0
    %1149 = vmatpush1.msra.mxu0 0.0
    %1150 = vmatprep.subr.mxu0 0.0
    %1151 = vmatpush1.msra.mxu0 %v1100
    %1152 = vmatprep.subr.mxu0 0.0
    %1153 = vmatpush1.msra.mxu0 %v1099
    %1154 = vmatprep.subr.mxu0 0.0
    %1155 = vmatpush1.msra.mxu0 %v1098
    %1156 = vmatprep.subr.mxu0 0.0
    %1157 = vmatpush1.msra.mxu0 %v1097
    %1158 = vmatprep.subr.mxu0 0.0
    %1159 = vmatpush2.msra.mxu0 0.0
    %1160 = vmatprep.subr.mxu0 0.0
    %1161 = vmatpush2.msra.mxu0 0.0
    %1162 = vmatprep.subr.mxu0 0.0
    %1163 = vmatpush2.msra.mxu0 0.0
    %1164 = vmatprep.subr.mxu0 0.0
    %1165 = vmatpush2.msra.mxu0 0.0
    %1166 = vmatprep.subr.mxu0 0.0
    %1167 = vmatpush2.msra.mxu0 0.0
    %1168 = vmatprep.subr.mxu0 0.0
    %1169 = vmatpush2.msra.mxu0 0.0
    %1170 = vmatprep.subr.mxu0 0.0
    %1171 = vmatpush2.msra.mxu0 0.0
    %1172 = vmatprep.subr.mxu0 0.0
    %1173 = vmatpush2.msra.mxu0 0.0
    %1174 = vmatprep.subr.mxu0 0.0
    %1175 = vmatpush2.msra.mxu0 0.0
    %1176 = vmatprep.subr.mxu0 0.0
    %1177 = vmatpush2.msra.mxu0 0.0
    %1178 = vmatprep.subr.mxu0 0.0
    %1179 = vmatpush2.msra.mxu0 0.0
    %1180 = vmatprep.subr.mxu0 0.0
    %1181 = vmatpush2.msra.mxu0 0.0
    %1182 = vmatprep.subr.mxu0 0.0
    %1183 = vmatpush2.msra.mxu0 0.0
    %1184 = vmatprep.subr.mxu0 0.0
    %1185 = vmatpush2.msra.mxu0 0.0
    %1186 = vmatprep.subr.mxu0 0.0
    %1187 = vmatpush2.msra.mxu0 0.0
    %1188 = vmatprep.subr.mxu0 0.0
    %1189 = vmatpush2.msra.mxu0 0.0
    %1190 = vmatprep.mubr.f32.mxu0 0.0
    %1191 = vmatmul.mubr.f32.gmra.mxu0 %v1124
    %v1192 = vpop.f32.mrf.mxu0
    %v1193 = vadd.f32 0.0, %v1192
    %v1194 = vpop.f32.mrf.mxu0
    %1195 = vdwg.mxu0
    %v1196 = vadd.f32 %v1123, %v1193
    %v1197 = vmul.f32 %v1196, 0.5
    %v1198 = vtanh.pop %v1197
    %v1199 = vmul.f32 %v1198, 0.5
    %v1200 = vadd.f32 %v1199, 0.5
    %v1201 = vtanh.pop %v1196
    %1203 = vrot.lane.b32.xlu0 %v1111, 32
    %v1204 = vpop.permute.xlu0 %1203
    %v1206 = vmul.f32 %v1200, %v1204
    %1208 = vrot.lane.b32.xlu0 %v1201, 64
    %v1209 = vpop.permute.xlu0 %1208
    %v1211 = vmul.f32 %v1200, %v1209
    %1213 = vrot.lane.b32.xlu0 %v1211, 32
    %v1214 = vpop.permute.xlu0 %1213
    %v1216 = vadd.f32 %v1206, %v1214
    %v1217 = vtanh.pop %v1216
    %1219 = vrot.lane.b32.xlu0 %v1217, 64
    %v1220 = vpop.permute.xlu0 %1219
    %v1222 = vmul.f32 %v1200, %v1220
    %1224 = vrot.lane.b32.xlu0 %v1222, 32
    %v1225 = vpop.permute.xlu0 %1224
    %1227 = vst.msk [vmem:[#allocation3 + $0x8] sm:$0xff] %vm228, %v1225
    %v1228 = vld [vmem:[#allocation2 + $0x10] sm:$0xff]
    %v1229 = vsel %vm228, %v1225, 0
    %1231 = vmatprep.subr.mxu0 0.0
    %1232 = vmatpush1.msra.mxu0 0.0
    %1233 = vmatprep.subr.mxu0 0.0
    %1234 = vmatpush1.msra.mxu0 0.0
    %1235 = vmatprep.subr.mxu0 0.0
    %1236 = vmatpush1.msra.mxu0 0.0
    %1237 = vmatprep.subr.mxu0 0.0
    %1238 = vmatpush1.msra.mxu0 0.0
    %1239 = vmatprep.subr.mxu0 0.0
    %1240 = vmatpush1.msra.mxu0 0.0
    %1241 = vmatprep.subr.mxu0 0.0
    %1242 = vmatpush1.msra.mxu0 0.0
    %1243 = vmatprep.subr.mxu0 0.0
    %1244 = vmatpush1.msra.mxu0 0.0
    %1245 = vmatprep.subr.mxu0 0.0
    %1246 = vmatpush1.msra.mxu0 0.0
    %1247 = vmatprep.subr.mxu0 0.0
    %1248 = vmatpush1.msra.mxu0 0.0
    %1249 = vmatprep.subr.mxu0 0.0
    %1250 = vmatpush1.msra.mxu0 0.0
    %1251 = vmatprep.subr.mxu0 0.0
    %1252 = vmatpush1.msra.mxu0 0.0
    %1253 = vmatprep.subr.mxu0 0.0
    %1254 = vmatpush1.msra.mxu0 0.0
    %1255 = vmatprep.subr.mxu0 0.0
    %1256 = vmatpush1.msra.mxu0 %v1100
    %1257 = vmatprep.subr.mxu0 0.0
    %1258 = vmatpush1.msra.mxu0 %v1099
    %1259 = vmatprep.subr.mxu0 0.0
    %1260 = vmatpush1.msra.mxu0 %v1098
    %1261 = vmatprep.subr.mxu0 0.0
    %1262 = vmatpush1.msra.mxu0 %v1097
    %1263 = vmatprep.subr.mxu0 0.0
    %1264 = vmatpush2.msra.mxu0 0.0
    %1265 = vmatprep.subr.mxu0 0.0
    %1266 = vmatpush2.msra.mxu0 0.0
    %1267 = vmatprep.subr.mxu0 0.0
    %1268 = vmatpush2.msra.mxu0 0.0
    %1269 = vmatprep.subr.mxu0 0.0
    %1270 = vmatpush2.msra.mxu0 0.0
    %1271 = vmatprep.subr.mxu0 0.0
    %1272 = vmatpush2.msra.mxu0 0.0
    %1273 = vmatprep.subr.mxu0 0.0
    %1274 = vmatpush2.msra.mxu0 0.0
    %1275 = vmatprep.subr.mxu0 0.0
    %1276 = vmatpush2.msra.mxu0 0.0
    %1277 = vmatprep.subr.mxu0 0.0
    %1278 = vmatpush2.msra.mxu0 0.0
    %1279 = vmatprep.subr.mxu0 0.0
    %1280 = vmatpush2.msra.mxu0 0.0
    %1281 = vmatprep.subr.mxu0 0.0
    %1282 = vmatpush2.msra.mxu0 0.0
    %1283 = vmatprep.subr.mxu0 0.0
    %1284 = vmatpush2.msra.mxu0 0.0
    %1285 = vmatprep.subr.mxu0 0.0
    %1286 = vmatpush2.msra.mxu0 0.0
    %1287 = vmatprep.subr.mxu0 0.0
    %1288 = vmatpush2.msra.mxu0 0.0
    %1289 = vmatprep.subr.mxu0 0.0
    %1290 = vmatpush2.msra.mxu0 0.0
    %1291 = vmatprep.subr.mxu0 0.0
    %1292 = vmatpush2.msra.mxu0 0.0
    %1293 = vmatprep.subr.mxu0 0.0
    %1294 = vmatpush2.msra.mxu0 0.0
    %1295 = vmatprep.mubr.f32.mxu0 0.0
    %1296 = vmatmul.mubr.f32.gmra.mxu0 %v1229
    %v1297 = vpop.f32.mrf.mxu0
    %v1298 = vadd.f32 0.0, %v1297
    %v1299 = vpop.f32.mrf.mxu0
    %1300 = vdwg.mxu0
    %v1301 = vadd.f32 %v1228, %v1298
    %v1302 = vmul.f32 %v1301, 0.5
    %v1303 = vtanh.pop %v1302
    %v1304 = vmul.f32 %v1303, 0.5
    %v1305 = vadd.f32 %v1304, 0.5
    %v1306 = vtanh.pop %v1301
    %v1307 = vmul.f32 %v1305, %v1216
    %1309 = vrot.lane.b32.xlu0 %v1306, 64
    %v1310 = vpop.permute.xlu0 %1309
    %v1312 = vmul.f32 %v1305, %v1310
    %1314 = vrot.lane.b32.xlu0 %v1312, 32
    %v1315 = vpop.permute.xlu0 %1314
    %v1317 = vadd.f32 %v1307, %v1315
    %v1318 = vtanh.pop %v1317
    %1320 = vrot.lane.b32.xlu0 %v1318, 64
    %v1321 = vpop.permute.xlu0 %1320
    %v1323 = vmul.f32 %v1305, %v1321
    %1325 = vrot.lane.b32.xlu0 %v1323, 32
    %v1326 = vpop.permute.xlu0 %1325
    %1328 = vst.msk [vmem:[#allocation3 + $0x10] sm:$0xff] %vm228, %v1326
    %v1329 = vld [vmem:[#allocation2 + $0x18] sm:$0xff]
    %v1330 = vsel %vm228, %v1326, 0
    %1332 = vmatprep.subr.mxu0 0.0
    %1333 = vmatpush1.msra.mxu0 0.0
    %1334 = vmatprep.subr.mxu0 0.0
    %1335 = vmatpush1.msra.mxu0 0.0
    %1336 = vmatprep.subr.mxu0 0.0
    %1337 = vmatpush1.msra.mxu0 0.0
    %1338 = vmatprep.subr.mxu0 0.0
    %1339 = vmatpush1.msra.mxu0 0.0
    %1340 = vmatprep.subr.mxu0 0.0
    %1341 = vmatpush1.msra.mxu0 0.0
    %1342 = vmatprep.subr.mxu0 0.0
    %1343 = vmatpush1.msra.mxu0 0.0
    %1344 = vmatprep.subr.mxu0 0.0
    %1345 = vmatpush1.msra.mxu0 0.0
    %1346 = vmatprep.subr.mxu0 0.0
    %1347 = vmatpush1.msra.mxu0 0.0
    %1348 = vmatprep.subr.mxu0 0.0
    %1349 = vmatpush1.msra.mxu0 0.0
    %1350 = vmatprep.subr.mxu0 0.0
    %1351 = vmatpush1.msra.mxu0 0.0
    %1352 = vmatprep.subr.mxu0 0.0
    %1353 = vmatpush1.msra.mxu0 0.0
    %1354 = vmatprep.subr.mxu0 0.0
    %1355 = vmatpush1.msra.mxu0 0.0
    %1356 = vmatprep.subr.mxu0 0.0
    %1357 = vmatpush1.msra.mxu0 %v1100
    %1358 = vmatprep.subr.mxu0 0.0
    %1359 = vmatpush1.msra.mxu0 %v1099
    %1360 = vmatprep.subr.mxu0 0.0
    %1361 = vmatpush1.msra.mxu0 %v1098
    %1362 = vmatprep.subr.mxu0 0.0
    %1363 = vmatpush1.msra.mxu0 %v1097
    %1364 = vmatprep.subr.mxu0 0.0
    %1365 = vmatpush2.msra.mxu0 0.0
    %1366 = vmatprep.subr.mxu0 0.0
    %1367 = vmatpush2.msra.mxu0 0.0
    %1368 = vmatprep.subr.mxu0 0.0
    %1369 = vmatpush2.msra.mxu0 0.0
    %1370 = vmatprep.subr.mxu0 0.0
    %1371 = vmatpush2.msra.mxu0 0.0
    %1372 = vmatprep.subr.mxu0 0.0
    %1373 = vmatpush2.msra.mxu0 0.0
    %1374 = vmatprep.subr.mxu0 0.0
    %1375 = vmatpush2.msra.mxu0 0.0
    %1376 = vmatprep.subr.mxu0 0.0
    %1377 = vmatpush2.msra.mxu0 0.0
    %1378 = vmatprep.subr.mxu0 0.0
    %1379 = vmatpush2.msra.mxu0 0.0
    %1380 = vmatprep.subr.mxu0 0.0
    %1381 = vmatpush2.msra.mxu0 0.0
    %1382 = vmatprep.subr.mxu0 0.0
    %1383 = vmatpush2.msra.mxu0 0.0
    %1384 = vmatprep.subr.mxu0 0.0
    %1385 = vmatpush2.msra.mxu0 0.0
    %1386 = vmatprep.subr.mxu0 0.0
    %1387 = vmatpush2.msra.mxu0 0.0
    %1388 = vmatprep.subr.mxu0 0.0
    %1389 = vmatpush2.msra.mxu0 0.0
    %1390 = vmatprep.subr.mxu0 0.0
    %1391 = vmatpush2.msra.mxu0 0.0
    %1392 = vmatprep.subr.mxu0 0.0
    %1393 = vmatpush2.msra.mxu0 0.0
    %1394 = vmatprep.subr.mxu0 0.0
    %1395 = vmatpush2.msra.mxu0 0.0
    %1396 = vmatprep.mubr.f32.mxu0 0.0
    %1397 = vmatmul.mubr.f32.gmra.mxu0 %v1330
    %v1398 = vpop.f32.mrf.mxu0
    %v1399 = vadd.f32 0.0, %v1398
    %v1400 = vpop.f32.mrf.mxu0
    %1401 = vdwg.mxu0
    %v1402 = vadd.f32 %v1329, %v1399
    %v1403 = vmul.f32 %v1402, 0.5
    %v1404 = vtanh.pop %v1403
    %v1405 = vmul.f32 %v1404, 0.5
    %v1406 = vadd.f32 %v1405, 0.5
    %v1407 = vtanh.pop %v1402
    %v1408 = vmul.f32 %v1406, %v1317
    %1410 = vrot.lane.b32.xlu0 %v1407, 64
    %v1411 = vpop.permute.xlu0 %1410
    %v1413 = vmul.f32 %v1406, %v1411
    %1415 = vrot.lane.b32.xlu0 %v1413, 32
    %v1416 = vpop.permute.xlu0 %1415
    %v1418 = vadd.f32 %v1408, %v1416
    %v1419 = vtanh.pop %v1418
    %1421 = vrot.lane.b32.xlu0 %v1419, 64
    %v1422 = vpop.permute.xlu0 %1421
    %v1424 = vmul.f32 %v1406, %v1422
    %1426 = vrot.lane.b32.xlu0 %v1424, 32
    %v1427 = vpop.permute.xlu0 %1426
    %1429 = vst.msk [vmem:[#allocation3 + $0x18] sm:$0xff] %vm228, %v1427
    %v1430 = vld [vmem:[#allocation2 + $0x20] sm:$0xff]
    %v1431 = vsel %vm228, %v1427, 0
    %1433 = vmatprep.subr.mxu0 0.0
    %1434 = vmatpush1.msra.mxu0 0.0
    %1435 = vmatprep.subr.mxu0 0.0
    %1436 = vmatpush1.msra.mxu0 0.0
    %1437 = vmatprep.subr.mxu0 0.0
    %1438 = vmatpush1.msra.mxu0 0.0
    %1439 = vmatprep.subr.mxu0 0.0
    %1440 = vmatpush1.msra.mxu0 0.0
    %1441 = vmatprep.subr.mxu0 0.0
    %1442 = vmatpush1.msra.mxu0 0.0
    %1443 = vmatprep.subr.mxu0 0.0
    %1444 = vmatpush1.msra.mxu0 0.0
    %1445 = vmatprep.subr.mxu0 0.0
    %1446 = vmatpush1.msra.mxu0 0.0
    %1447 = vmatprep.subr.mxu0 0.0
    %1448 = vmatpush1.msra.mxu0 0.0
    %1449 = vmatprep.subr.mxu0 0.0
    %1450 = vmatpush1.msra.mxu0 0.0
    %1451 = vmatprep.subr.mxu0 0.0
    %1452 = vmatpush1.msra.mxu0 0.0
    %1453 = vmatprep.subr.mxu0 0.0
    %1454 = vmatpush1.msra.mxu0 0.0
    %1455 = vmatprep.subr.mxu0 0.0
    %1456 = vmatpush1.msra.mxu0 0.0
    %1457 = vmatprep.subr.mxu0 0.0
    %1458 = vmatpush1.msra.mxu0 %v1100
    %1459 = vmatprep.subr.mxu0 0.0
    %1460 = vmatpush1.msra.mxu0 %v1099
    %1461 = vmatprep.subr.mxu0 0.0
    %1462 = vmatpush1.msra.mxu0 %v1098
    %1463 = vmatprep.subr.mxu0 0.0
    %1464 = vmatpush1.msra.mxu0 %v1097
    %1465 = vmatprep.subr.mxu0 0.0
    %1466 = vmatpush2.msra.mxu0 0.0
    %1467 = vmatprep.subr.mxu0 0.0
    %1468 = vmatpush2.msra.mxu0 0.0
    %1469 = vmatprep.subr.mxu0 0.0
    %1470 = vmatpush2.msra.mxu0 0.0
    %1471 = vmatprep.subr.mxu0 0.0
    %1472 = vmatpush2.msra.mxu0 0.0
    %1473 = vmatprep.subr.mxu0 0.0
    %1474 = vmatpush2.msra.mxu0 0.0
    %1475 = vmatprep.subr.mxu0 0.0
    %1476 = vmatpush2.msra.mxu0 0.0
    %1477 = vmatprep.subr.mxu0 0.0
    %1478 = vmatpush2.msra.mxu0 0.0
    %1479 = vmatprep.subr.mxu0 0.0
    %1480 = vmatpush2.msra.mxu0 0.0
    %1481 = vmatprep.subr.mxu0 0.0
    %1482 = vmatpush2.msra.mxu0 0.0
    %1483 = vmatprep.subr.mxu0 0.0
    %1484 = vmatpush2.msra.mxu0 0.0
    %1485 = vmatprep.subr.mxu0 0.0
    %1486 = vmatpush2.msra.mxu0 0.0
    %1487 = vmatprep.subr.mxu0 0.0
    %1488 = vmatpush2.msra.mxu0 0.0
    %1489 = vmatprep.subr.mxu0 0.0
    %1490 = vmatpush2.msra.mxu0 0.0
    %1491 = vmatprep.subr.mxu0 0.0
    %1492 = vmatpush2.msra.mxu0 0.0
    %1493 = vmatprep.subr.mxu0 0.0
    %1494 = vmatpush2.msra.mxu0 0.0
    %1495 = vmatprep.subr.mxu0 0.0
    %1496 = vmatpush2.msra.mxu0 0.0
    %1497 = vmatprep.mubr.f32.mxu0 0.0
    %1498 = vmatmul.mubr.f32.gmra.mxu0 %v1431
    %v1499 = vpop.f32.mrf.mxu0
    %v1500 = vadd.f32 0.0, %v1499
    %v1501 = vpop.f32.mrf.mxu0
    %1502 = vdwg.mxu0
    %v1503 = vadd.f32 %v1430, %v1500
    %v1504 = vmul.f32 %v1503, 0.5
    %v1505 = vtanh.pop %v1504
    %v1506 = vmul.f32 %v1505, 0.5
    %v1507 = vadd.f32 %v1506, 0.5
    %v1508 = vtanh.pop %v1503
    %v1509 = vmul.f32 %v1507, %v1418
    %1511 = vrot.lane.b32.xlu0 %v1508, 64
    %v1512 = vpop.permute.xlu0 %1511
    %v1514 = vmul.f32 %v1507, %v1512
    %1516 = vrot.lane.b32.xlu0 %v1514, 32
    %v1517 = vpop.permute.xlu0 %1516
    %v1519 = vadd.f32 %v1509, %v1517
    %v1520 = vtanh.pop %v1519
    %1522 = vrot.lane.b32.xlu0 %v1520, 64
    %v1523 = vpop.permute.xlu0 %1522
    %v1525 = vmul.f32 %v1507, %v1523
    %1527 = vrot.lane.b32.xlu0 %v1525, 32
    %v1528 = vpop.permute.xlu0 %1527
    %1530 = vst.msk [vmem:[#allocation3 + $0x20] sm:$0xff] %vm228, %v1528
    %v1531 = vld [vmem:[#allocation2 + $0x28] sm:$0xff]
    %v1532 = vsel %vm228, %v1528, 0
    %1534 = vmatprep.subr.mxu0 0.0
    %1535 = vmatpush1.msra.mxu0 0.0
    %1536 = vmatprep.subr.mxu0 0.0
    %1537 = vmatpush1.msra.mxu0 0.0
    %1538 = vmatprep.subr.mxu0 0.0
    %1539 = vmatpush1.msra.mxu0 0.0
    %1540 = vmatprep.subr.mxu0 0.0
    %1541 = vmatpush1.msra.mxu0 0.0
    %1542 = vmatprep.subr.mxu0 0.0
    %1543 = vmatpush1.msra.mxu0 0.0
    %1544 = vmatprep.subr.mxu0 0.0
    %1545 = vmatpush1.msra.mxu0 0.0
    %1546 = vmatprep.subr.mxu0 0.0
    %1547 = vmatpush1.msra.mxu0 0.0
    %1548 = vmatprep.subr.mxu0 0.0
    %1549 = vmatpush1.msra.mxu0 0.0
    %1550 = vmatprep.subr.mxu0 0.0
    %1551 = vmatpush1.msra.mxu0 0.0
    %1552 = vmatprep.subr.mxu0 0.0
    %1553 = vmatpush1.msra.mxu0 0.0
    %1554 = vmatprep.subr.mxu0 0.0
    %1555 = vmatpush1.msra.mxu0 0.0
    %1556 = vmatprep.subr.mxu0 0.0
    %1557 = vmatpush1.msra.mxu0 0.0
    %1558 = vmatprep.subr.mxu0 0.0
    %1559 = vmatpush1.msra.mxu0 %v1100
    %1560 = vmatprep.subr.mxu0 0.0
    %1561 = vmatpush1.msra.mxu0 %v1099
    %1562 = vmatprep.subr.mxu0 0.0
    %1563 = vmatpush1.msra.mxu0 %v1098
    %1564 = vmatprep.subr.mxu0 0.0
    %1565 = vmatpush1.msra.mxu0 %v1097
    %1566 = vmatprep.subr.mxu0 0.0
    %1567 = vmatpush2.msra.mxu0 0.0
    %1568 = vmatprep.subr.mxu0 0.0
    %1569 = vmatpush2.msra.mxu0 0.0
    %1570 = vmatprep.subr.mxu0 0.0
    %1571 = vmatpush2.msra.mxu0 0.0
    %1572 = vmatprep.subr.mxu0 0.0
    %1573 = vmatpush2.msra.mxu0 0.0
    %1574 = vmatprep.subr.mxu0 0.0
    %1575 = vmatpush2.msra.mxu0 0.0
    %1576 = vmatprep.subr.mxu0 0.0
    %1577 = vmatpush2.msra.mxu0 0.0
    %1578 = vmatprep.subr.mxu0 0.0
    %1579 = vmatpush2.msra.mxu0 0.0
    %1580 = vmatprep.subr.mxu0 0.0
    %1581 = vmatpush2.msra.mxu0 0.0
    %1582 = vmatprep.subr.mxu0 0.0
    %1583 = vmatpush2.msra.mxu0 0.0
    %1584 = vmatprep.subr.mxu0 0.0
    %1585 = vmatpush2.msra.mxu0 0.0
    %1586 = vmatprep.subr.mxu0 0.0
    %1587 = vmatpush2.msra.mxu0 0.0
    %1588 = vmatprep.subr.mxu0 0.0
    %1589 = vmatpush2.msra.mxu0 0.0
    %1590 = vmatprep.subr.mxu0 0.0
    %1591 = vmatpush2.msra.mxu0 0.0
    %1592 = vmatprep.subr.mxu0 0.0
    %1593 = vmatpush2.msra.mxu0 0.0
    %1594 = vmatprep.subr.mxu0 0.0
    %1595 = vmatpush2.msra.mxu0 0.0
    %1596 = vmatprep.subr.mxu0 0.0
    %1597 = vmatpush2.msra.mxu0 0.0
    %1598 = vmatprep.mubr.f32.mxu0 0.0
    %1599 = vmatmul.mubr.f32.gmra.mxu0 %v1532
    %v1600 = vpop.f32.mrf.mxu0
    %v1601 = vadd.f32 0.0, %v1600
    %v1602 = vpop.f32.mrf.mxu0
    %1603 = vdwg.mxu0
    %v1604 = vadd.f32 %v1531, %v1601
    %v1605 = vmul.f32 %v1604, 0.5
    %v1606 = vtanh.pop %v1605
    %v1607 = vmul.f32 %v1606, 0.5
    %v1608 = vadd.f32 %v1607, 0.5
    %v1609 = vtanh.pop %v1604
    %v1610 = vmul.f32 %v1608, %v1519
    %1612 = vrot.lane.b32.xlu0 %v1609, 64
    %v1613 = vpop.permute.xlu0 %1612
    %v1615 = vmul.f32 %v1608, %v1613
    %1617 = vrot.lane.b32.xlu0 %v1615, 32
    %v1618 = vpop.permute.xlu0 %1617
    %v1620 = vadd.f32 %v1610, %v1618
    %v1621 = vtanh.pop %v1620
    %1623 = vrot.lane.b32.xlu0 %v1621, 64
    %v1624 = vpop.permute.xlu0 %1623
    %v1626 = vmul.f32 %v1608, %v1624
    %1628 = vrot.lane.b32.xlu0 %v1626, 32
    %v1629 = vpop.permute.xlu0 %1628
    %1631 = vst.msk [vmem:[#allocation3 + $0x28] sm:$0xff] %vm228, %v1629
    %v1632 = vld [vmem:[#allocation2 + $0x30] sm:$0xff]
    %v1633 = vsel %vm228, %v1629, 0
    %1635 = vmatprep.subr.mxu0 0.0
    %1636 = vmatpush1.msra.mxu0 0.0
    %1637 = vmatprep.subr.mxu0 0.0
    %1638 = vmatpush1.msra.mxu0 0.0
    %1639 = vmatprep.subr.mxu0 0.0
    %1640 = vmatpush1.msra.mxu0 0.0
    %1641 = vmatprep.subr.mxu0 0.0
    %1642 = vmatpush1.msra.mxu0 0.0
    %1643 = vmatprep.subr.mxu0 0.0
    %1644 = vmatpush1.msra.mxu0 0.0
    %1645 = vmatprep.subr.mxu0 0.0
    %1646 = vmatpush1.msra.mxu0 0.0
    %1647 = vmatprep.subr.mxu0 0.0
    %1648 = vmatpush1.msra.mxu0 0.0
    %1649 = vmatprep.subr.mxu0 0.0
    %1650 = vmatpush1.msra.mxu0 0.0
    %1651 = vmatprep.subr.mxu0 0.0
    %1652 = vmatpush1.msra.mxu0 0.0
    %1653 = vmatprep.subr.mxu0 0.0
    %1654 = vmatpush1.msra.mxu0 0.0
    %1655 = vmatprep.subr.mxu0 0.0
    %1656 = vmatpush1.msra.mxu0 0.0
    %1657 = vmatprep.subr.mxu0 0.0
    %1658 = vmatpush1.msra.mxu0 0.0
    %1659 = vmatprep.subr.mxu0 0.0
    %1660 = vmatpush1.msra.mxu0 %v1100
    %1661 = vmatprep.subr.mxu0 0.0
    %1662 = vmatpush1.msra.mxu0 %v1099
    %1663 = vmatprep.subr.mxu0 0.0
    %1664 = vmatpush1.msra.mxu0 %v1098
    %1665 = vmatprep.subr.mxu0 0.0
    %1666 = vmatpush1.msra.mxu0 %v1097
    %1667 = vmatprep.subr.mxu0 0.0
    %1668 = vmatpush2.msra.mxu0 0.0
    %1669 = vmatprep.subr.mxu0 0.0
    %1670 = vmatpush2.msra.mxu0 0.0
    %1671 = vmatprep.subr.mxu0 0.0
    %1672 = vmatpush2.msra.mxu0 0.0
    %1673 = vmatprep.subr.mxu0 0.0
    %1674 = vmatpush2.msra.mxu0 0.0
    %1675 = vmatprep.subr.mxu0 0.0
    %1676 = vmatpush2.msra.mxu0 0.0
    %1677 = vmatprep.subr.mxu0 0.0
    %1678 = vmatpush2.msra.mxu0 0.0
    %1679 = vmatprep.subr.mxu0 0.0
    %1680 = vmatpush2.msra.mxu0 0.0
    %1681 = vmatprep.subr.mxu0 0.0
    %1682 = vmatpush2.msra.mxu0 0.0
    %1683 = vmatprep.subr.mxu0 0.0
    %1684 = vmatpush2.msra.mxu0 0.0
    %1685 = vmatprep.subr.mxu0 0.0
    %1686 = vmatpush2.msra.mxu0 0.0
    %1687 = vmatprep.subr.mxu0 0.0
    %1688 = vmatpush2.msra.mxu0 0.0
    %1689 = vmatprep.subr.mxu0 0.0
    %1690 = vmatpush2.msra.mxu0 0.0
    %1691 = vmatprep.subr.mxu0 0.0
    %1692 = vmatpush2.msra.mxu0 0.0
    %1693 = vmatprep.subr.mxu0 0.0
    %1694 = vmatpush2.msra.mxu0 0.0
    %1695 = vmatprep.subr.mxu0 0.0
    %1696 = vmatpush2.msra.mxu0 0.0
    %1697 = vmatprep.subr.mxu0 0.0
    %1698 = vmatpush2.msra.mxu0 0.0
    %1699 = vmatprep.mubr.f32.mxu0 0.0
    %1700 = vmatmul.mubr.f32.gmra.mxu0 %v1633
    %v1701 = vpop.f32.mrf.mxu0
    %v1702 = vadd.f32 0.0, %v1701
    %v1703 = vpop.f32.mrf.mxu0
    %1704 = vdwg.mxu0
    %v1705 = vadd.f32 %v1632, %v1702
    %v1706 = vmul.f32 %v1705, 0.5
    %v1707 = vtanh.pop %v1706
    %v1708 = vmul.f32 %v1707, 0.5
    %v1709 = vadd.f32 %v1708, 0.5
    %v1710 = vtanh.pop %v1705
    %v1711 = vmul.f32 %v1709, %v1620
    %1713 = vrot.lane.b32.xlu0 %v1710, 64
    %v1714 = vpop.permute.xlu0 %1713
    %v1716 = vmul.f32 %v1709, %v1714
    %1718 = vrot.lane.b32.xlu0 %v1716, 32
    %v1719 = vpop.permute.xlu0 %1718
    %v1721 = vadd.f32 %v1711, %v1719
    %v1722 = vtanh.pop %v1721
    %1724 = vrot.lane.b32.xlu0 %v1722, 64
    %v1725 = vpop.permute.xlu0 %1724
    %v1727 = vmul.f32 %v1709, %v1725
    %1729 = vrot.lane.b32.xlu0 %v1727, 32
    %v1730 = vpop.permute.xlu0 %1729
    %1732 = vst.msk [vmem:[#allocation3 + $0x30] sm:$0xff] %vm228, %v1730
    %v1733 = vld [vmem:[#allocation2 + $0x38] sm:$0xff]
    %v1734 = vsel %vm228, %v1730, 0
    %1736 = vmatprep.subr.mxu0 0.0
    %1737 = vmatpush1.msra.mxu0 0.0
    %1738 = vmatprep.subr.mxu0 0.0
    %1739 = vmatpush1.msra.mxu0 0.0
    %1740 = vmatprep.subr.mxu0 0.0
    %1741 = vmatpush1.msra.mxu0 0.0
    %1742 = vmatprep.subr.mxu0 0.0
    %1743 = vmatpush1.msra.mxu0 0.0
    %1744 = vmatprep.subr.mxu0 0.0
    %1745 = vmatpush1.msra.mxu0 0.0
    %1746 = vmatprep.subr.mxu0 0.0
    %1747 = vmatpush1.msra.mxu0 0.0
    %1748 = vmatprep.subr.mxu0 0.0
    %1749 = vmatpush1.msra.mxu0 0.0
    %1750 = vmatprep.subr.mxu0 0.0
    %1751 = vmatpush1.msra.mxu0 0.0
    %1752 = vmatprep.subr.mxu0 0.0
    %1753 = vmatpush1.msra.mxu0 0.0
    %1754 = vmatprep.subr.mxu0 0.0
    %1755 = vmatpush1.msra.mxu0 0.0
    %1756 = vmatprep.subr.mxu0 0.0
    %1757 = vmatpush1.msra.mxu0 0.0
    %1758 = vmatprep.subr.mxu0 0.0
    %1759 = vmatpush1.msra.mxu0 0.0
    %1760 = vmatprep.subr.mxu0 0.0
    %1761 = vmatpush1.msra.mxu0 %v1100
    %1762 = vmatprep.subr.mxu0 0.0
    %1763 = vmatpush1.msra.mxu0 %v1099
    %1764 = vmatprep.subr.mxu0 0.0
    %1765 = vmatpush1.msra.mxu0 %v1098
    %1766 = vmatprep.subr.mxu0 0.0
    %1767 = vmatpush1.msra.mxu0 %v1097
    %1768 = vmatprep.subr.mxu0 0.0
    %1769 = vmatpush2.msra.mxu0 0.0
    %1770 = vmatprep.subr.mxu0 0.0
    %1771 = vmatpush2.msra.mxu0 0.0
    %1772 = vmatprep.subr.mxu0 0.0
    %1773 = vmatpush2.msra.mxu0 0.0
    %1774 = vmatprep.subr.mxu0 0.0
    %1775 = vmatpush2.msra.mxu0 0.0
    %1776 = vmatprep.subr.mxu0 0.0
    %1777 = vmatpush2.msra.mxu0 0.0
    %1778 = vmatprep.subr.mxu0 0.0
    %1779 = vmatpush2.msra.mxu0 0.0
    %1780 = vmatprep.subr.mxu0 0.0
    %1781 = vmatpush2.msra.mxu0 0.0
    %1782 = vmatprep.subr.mxu0 0.0
    %1783 = vmatpush2.msra.mxu0 0.0
    %1784 = vmatprep.subr.mxu0 0.0
    %1785 = vmatpush2.msra.mxu0 0.0
    %1786 = vmatprep.subr.mxu0 0.0
    %1787 = vmatpush2.msra.mxu0 0.0
    %1788 = vmatprep.subr.mxu0 0.0
    %1789 = vmatpush2.msra.mxu0 0.0
    %1790 = vmatprep.subr.mxu0 0.0
    %1791 = vmatpush2.msra.mxu0 0.0
    %1792 = vmatprep.subr.mxu0 0.0
    %1793 = vmatpush2.msra.mxu0 0.0
    %1794 = vmatprep.subr.mxu0 0.0
    %1795 = vmatpush2.msra.mxu0 0.0
    %1796 = vmatprep.subr.mxu0 0.0
    %1797 = vmatpush2.msra.mxu0 0.0
    %1798 = vmatprep.subr.mxu0 0.0
    %1799 = vmatpush2.msra.mxu0 0.0
    %1800 = vmatprep.mubr.f32.mxu0 0.0
    %1801 = vmatmul.mubr.f32.gmra.mxu0 %v1734
    %v1802 = vpop.f32.mrf.mxu0
    %v1803 = vadd.f32 0.0, %v1802
    %v1804 = vpop.f32.mrf.mxu0
    %1805 = vdwg.mxu0
    %v1806 = vadd.f32 %v1733, %v1803
    %v1807 = vmul.f32 %v1806, 0.5
    %v1808 = vtanh.pop %v1807
    %v1809 = vmul.f32 %v1808, 0.5
    %v1810 = vadd.f32 %v1809, 0.5
    %v1811 = vtanh.pop %v1806
    %v1812 = vmul.f32 %v1810, %v1721
    %1814 = vrot.lane.b32.xlu0 %v1811, 64
    %v1815 = vpop.permute.xlu0 %1814
    %v1817 = vmul.f32 %v1810, %v1815
    %1819 = vrot.lane.b32.xlu0 %v1817, 32
    %v1820 = vpop.permute.xlu0 %1819
    %v1822 = vadd.f32 %v1812, %v1820
    %v1823 = vtanh.pop %v1822
    %1825 = vrot.lane.b32.xlu0 %v1823, 64
    %v1826 = vpop.permute.xlu0 %1825
    %v1828 = vmul.f32 %v1810, %v1826
    %1830 = vrot.lane.b32.xlu0 %v1828, 32
    %v1831 = vpop.permute.xlu0 %1830
    %1833 = vst.msk [vmem:[#allocation3 + $0x38] sm:$0xff] %vm228, %v1831
    %v1834 = vld [vmem:[#allocation3] sm:$0xff]
    %v1835 = vld [vmem:[#allocation3 + $0x8] sm:$0xff]
    %v1836 = vld [vmem:[#allocation3 + $0x10] sm:$0xff]
    %v1837 = vld [vmem:[#allocation3 + $0x18] sm:$0xff]
    %v1838 = vld [vmem:[#allocation3 + $0x20] sm:$0xff]
    %v1839 = vld [vmem:[#allocation3 + $0x28] sm:$0xff]
    %v1840 = vld [vmem:[#allocation3 + $0x30] sm:$0xff]
    %v1841 = vld [vmem:[#allocation3 + $0x38] sm:$0xff]
    %s1842 = scalar_lea.vmem %s4, 32
    %v1843 = vld [vmem:[%s1842] sm:$0xff]
    %v1844 = vld [vmem:[%s1842 + $0x8] sm:$0xff]
    %v1845 = vld [vmem:[%s1842 + $0x10] sm:$0xff]
    %v1846 = vld [vmem:[%s1842 + $0x18] sm:$0xff]
    %s1847 = scalar_lea.vmem %s6, 1
    %v1848 = vld [vmem:[%s1847] sm:$0x1]
    %v1850 = vlaneseq
    %v1851 = vshrl.u32 %v1850, 7
    %v1852 = vsub.s32 0, %v1851
    %v1853 = vrot.slane %v1848, %v1852
    %v1856 = vsel %vm228, %v1834, 0
    %v1859 = vsel %vm228, %v1835, 0
    %v1862 = vsel %vm228, %v1836, 0
    %v1865 = vsel %vm228, %v1837, 0
    %v1868 = vsel %vm228, %v1838, 0
    %v1871 = vsel %vm228, %v1839, 0
    %v1874 = vsel %vm228, %v1840, 0
    %v1877 = vsel %vm228, %v1841, 0
    %1879 = vmatprep.subr.mxu0 0.0
    %1880 = vmatpush1.msra.mxu0 0.0
    %1881 = vmatprep.subr.mxu0 0.0
    %1882 = vmatpush1.msra.mxu0 0.0
    %1883 = vmatprep.subr.mxu0 0.0
    %1884 = vmatpush1.msra.mxu0 0.0
    %1885 = vmatprep.subr.mxu0 0.0
    %1886 = vmatpush1.msra.mxu0 0.0
    %1887 = vmatprep.subr.mxu0 0.0
    %1888 = vmatpush1.msra.mxu0 0.0
    %1889 = vmatprep.subr.mxu0 0.0
    %1890 = vmatpush1.msra.mxu0 0.0
    %1891 = vmatprep.subr.mxu0 0.0
    %1892 = vmatpush1.msra.mxu0 0.0
    %1893 = vmatprep.subr.mxu0 0.0
    %1894 = vmatpush1.msra.mxu0 0.0
    %1895 = vmatprep.subr.mxu0 0.0
    %1896 = vmatpush1.msra.mxu0 0.0
    %1897 = vmatprep.subr.mxu0 0.0
    %1898 = vmatpush1.msra.mxu0 0.0
    %1899 = vmatprep.subr.mxu0 0.0
    %1900 = vmatpush1.msra.mxu0 0.0
    %1901 = vmatprep.subr.mxu0 0.0
    %1902 = vmatpush1.msra.mxu0 0.0
    %1903 = vmatprep.subr.mxu0 0.0
    %1904 = vmatpush1.msra.mxu0 %v1846
    %1905 = vmatprep.subr.mxu0 0.0
    %1906 = vmatpush1.msra.mxu0 %v1845
    %1907 = vmatprep.subr.mxu0 0.0
    %1908 = vmatpush1.msra.mxu0 %v1844
    %1909 = vmatprep.subr.mxu0 0.0
    %1910 = vmatpush1.msra.mxu0 %v1843
    %1911 = vmatprep.subr.mxu0 0.0
    %1912 = vmatpush2.msra.mxu0 0.0
    %1913 = vmatprep.subr.mxu0 0.0
    %1914 = vmatpush2.msra.mxu0 0.0
    %1915 = vmatprep.subr.mxu0 0.0
    %1916 = vmatpush2.msra.mxu0 0.0
    %1917 = vmatprep.subr.mxu0 0.0
    %1918 = vmatpush2.msra.mxu0 0.0
    %1919 = vmatprep.subr.mxu0 0.0
    %1920 = vmatpush2.msra.mxu0 0.0
    %1921 = vmatprep.subr.mxu0 0.0
    %1922 = vmatpush2.msra.mxu0 0.0
    %1923 = vmatprep.subr.mxu0 0.0
    %1924 = vmatpush2.msra.mxu0 0.0
    %1925 = vmatprep.subr.mxu0 0.0
    %1926 = vmatpush2.msra.mxu0 0.0
    %1927 = vmatprep.subr.mxu0 0.0
    %1928 = vmatpush2.msra.mxu0 0.0
    %1929 = vmatprep.subr.mxu0 0.0
    %1930 = vmatpush2.msra.mxu0 0.0
    %1931 = vmatprep.subr.mxu0 0.0
    %1932 = vmatpush2.msra.mxu0 0.0
    %1933 = vmatprep.subr.mxu0 0.0
    %1934 = vmatpush2.msra.mxu0 0.0
    %1935 = vmatprep.subr.mxu0 0.0
    %1936 = vmatpush2.msra.mxu0 0.0
    %1937 = vmatprep.subr.mxu0 0.0
    %1938 = vmatpush2.msra.mxu0 0.0
    %1939 = vmatprep.subr.mxu0 0.0
    %1940 = vmatpush2.msra.mxu0 0.0
    %1941 = vmatprep.subr.mxu0 0.0
    %1942 = vmatpush2.msra.mxu0 0.0
    %1943 = vmatprep.mubr.f32.mxu0 0.0
    %1944 = vmatmul.mubr.f32.gmra.mxu0 %v1856
    %v1945 = vpop.f32.mrf.mxu0
    %v1946 = vadd.f32 %v1853, %v1945
    %v1947 = vpop.f32.mrf.mxu0
    %1948 = vmatprep.mubr.f32.mxu0 0.0
    %1949 = vmatmul.mubr.f32.gmra.mxu0 %v1859
    %v1950 = vpop.f32.mrf.mxu0
    %v1951 = vadd.f32 %v1853, %v1950
    %v1952 = vpop.f32.mrf.mxu0
    %1953 = vmatprep.mubr.f32.mxu0 0.0
    %1954 = vmatmul.mubr.f32.gmra.mxu0 %v1862
    %v1955 = vpop.f32.mrf.mxu0
    %v1956 = vadd.f32 %v1853, %v1955
    %v1957 = vpop.f32.mrf.mxu0
    %1958 = vmatprep.mubr.f32.mxu0 0.0
    %1959 = vmatmul.mubr.f32.gmra.mxu0 %v1865
    %v1960 = vpop.f32.mrf.mxu0
    %v1961 = vadd.f32 %v1853, %v1960
    %v1962 = vpop.f32.mrf.mxu0
    %1963 = vmatprep.mubr.f32.mxu0 0.0
    %1964 = vmatmul.mubr.f32.gmra.mxu0 %v1868
    %v1965 = vpop.f32.mrf.mxu0
    %v1966 = vadd.f32 %v1853, %v1965
    %v1967 = vpop.f32.mrf.mxu0
    %1968 = vmatprep.mubr.f32.mxu0 0.0
    %1969 = vmatmul.mubr.f32.gmra.mxu0 %v1871
    %v1970 = vpop.f32.mrf.mxu0
    %v1971 = vadd.f32 %v1853, %v1970
    %v1972 = vpop.f32.mrf.mxu0
    %1973 = vmatprep.mubr.f32.mxu0 0.0
    %1974 = vmatmul.mubr.f32.gmra.mxu0 %v1874
    %v1975 = vpop.f32.mrf.mxu0
    %v1976 = vadd.f32 %v1853, %v1975
    %v1977 = vpop.f32.mrf.mxu0
    %1978 = vmatprep.mubr.f32.mxu0 0.0
    %1979 = vmatmul.mubr.f32.gmra.mxu0 %v1877
    %v1980 = vpop.f32.mrf.mxu0
    %v1981 = vadd.f32 %v1853, %v1980
    %v1982 = vpop.f32.mrf.mxu0
    %1983 = vdwg.mxu0
    %1984 = vst [vmem:[#allocation2] sm:$0xff] %v1946
    %1985 = vst [vmem:[#allocation2 + $0x8] sm:$0xff] %v1951
    %1986 = vst [vmem:[#allocation2 + $0x10] sm:$0xff] %v1956
    %1987 = vst [vmem:[#allocation2 + $0x18] sm:$0xff] %v1961
    %1988 = vst [vmem:[#allocation2 + $0x20] sm:$0xff] %v1966
    %1989 = vst [vmem:[#allocation2 + $0x28] sm:$0xff] %v1971
    %1990 = vst [vmem:[#allocation2 + $0x30] sm:$0xff] %v1976
    %1991 = vst [vmem:[#allocation2 + $0x38] sm:$0xff] %v1981
    %s1992 = scalar_lea.vmem %s5, 32
    %v1993 = vld [vmem:[%s1992] sm:$0xff]
    %v1994 = vld [vmem:[%s1992 + $0x8] sm:$0xff]
    %v1995 = vld [vmem:[%s1992 + $0x10] sm:$0xff]
    %v1996 = vld [vmem:[%s1992 + $0x18] sm:$0xff]
    %v1997 = vld [vmem:[#allocation2] sm:$0xff]
    %v1998 = vmul.f32 %v1997, 0.5
    %v1999 = vtanh.pop %v1998
    %v2000 = vmul.f32 %v1999, 0.5
    %v2001 = vadd.f32 %v2000, 0.5
    %v2002 = vtanh.pop %v1997
    %2004 = vrot.lane.b32.xlu0 %v2002, 64
    %v2005 = vpop.permute.xlu0 %2004
    %v2007 = vmul.f32 %v2001, %v2005
    %v2008 = vtanh.pop %v2007
    %2010 = vrot.lane.b32.xlu0 %v2008, 96
    %v2011 = vpop.permute.xlu0 %2010
    %v2013 = vmul.f32 %v2001, %v2011
    %2015 = vrot.lane.b32.xlu0 %v2013, 32
    %v2016 = vpop.permute.xlu0 %2015
    %2018 = vst.msk [vmem:[#allocation3] sm:$0xff] %vm228, %v2016
    %v2019 = vld [vmem:[#allocation2 + $0x8] sm:$0xff]
    %v2020 = vsel %vm228, %v2016, 0
    %2022 = vmatprep.subr.mxu0 0.0
    %2023 = vmatpush1.msra.mxu0 0.0
    %2024 = vmatprep.subr.mxu0 0.0
    %2025 = vmatpush1.msra.mxu0 0.0
    %2026 = vmatprep.subr.mxu0 0.0
    %2027 = vmatpush1.msra.mxu0 0.0
    %2028 = vmatprep.subr.mxu0 0.0
    %2029 = vmatpush1.msra.mxu0 0.0
    %2030 = vmatprep.subr.mxu0 0.0
    %2031 = vmatpush1.msra.mxu0 0.0
    %2032 = vmatprep.subr.mxu0 0.0
    %2033 = vmatpush1.msra.mxu0 0.0
    %2034 = vmatprep.subr.mxu0 0.0
    %2035 = vmatpush1.msra.mxu0 0.0
    %2036 = vmatprep.subr.mxu0 0.0
    %2037 = vmatpush1.msra.mxu0 0.0
    %2038 = vmatprep.subr.mxu0 0.0
    %2039 = vmatpush1.msra.mxu0 0.0
    %2040 = vmatprep.subr.mxu0 0.0
    %2041 = vmatpush1.msra.mxu0 0.0
    %2042 = vmatprep.subr.mxu0 0.0
    %2043 = vmatpush1.msra.mxu0 0.0
    %2044 = vmatprep.subr.mxu0 0.0
    %2045 = vmatpush1.msra.mxu0 0.0
    %2046 = vmatprep.subr.mxu0 0.0
    %2047 = vmatpush1.msra.mxu0 %v1996
    %2048 = vmatprep.subr.mxu0 0.0
    %2049 = vmatpush1.msra.mxu0 %v1995
    %2050 = vmatprep.subr.mxu0 0.0
    %2051 = vmatpush1.msra.mxu0 %v1994
    %2052 = vmatprep.subr.mxu0 0.0
    %2053 = vmatpush1.msra.mxu0 %v1993
    %2054 = vmatprep.subr.mxu0 0.0
    %2055 = vmatpush2.msra.mxu0 0.0
    %2056 = vmatprep.subr.mxu0 0.0
    %2057 = vmatpush2.msra.mxu0 0.0
    %2058 = vmatprep.subr.mxu0 0.0
    %2059 = vmatpush2.msra.mxu0 0.0
    %2060 = vmatprep.subr.mxu0 0.0
    %2061 = vmatpush2.msra.mxu0 0.0
    %2062 = vmatprep.subr.mxu0 0.0
    %2063 = vmatpush2.msra.mxu0 0.0
    %2064 = vmatprep.subr.mxu0 0.0
    %2065 = vmatpush2.msra.mxu0 0.0
    %2066 = vmatprep.subr.mxu0 0.0
    %2067 = vmatpush2.msra.mxu0 0.0
    %2068 = vmatprep.subr.mxu0 0.0
    %2069 = vmatpush2.msra.mxu0 0.0
    %2070 = vmatprep.subr.mxu0 0.0
    %2071 = vmatpush2.msra.mxu0 0.0
    %2072 = vmatprep.subr.mxu0 0.0
    %2073 = vmatpush2.msra.mxu0 0.0
    %2074 = vmatprep.subr.mxu0 0.0
    %2075 = vmatpush2.msra.mxu0 0.0
    %2076 = vmatprep.subr.mxu0 0.0
    %2077 = vmatpush2.msra.mxu0 0.0
    %2078 = vmatprep.subr.mxu0 0.0
    %2079 = vmatpush2.msra.mxu0 0.0
    %2080 = vmatprep.subr.mxu0 0.0
    %2081 = vmatpush2.msra.mxu0 0.0
    %2082 = vmatprep.subr.mxu0 0.0
    %2083 = vmatpush2.msra.mxu0 0.0
    %2084 = vmatprep.subr.mxu0 0.0
    %2085 = vmatpush2.msra.mxu0 0.0
    %2086 = vmatprep.mubr.f32.mxu0 0.0
    %2087 = vmatmul.mubr.f32.gmra.mxu0 %v2020
    %v2088 = vpop.f32.mrf.mxu0
    %v2089 = vadd.f32 0.0, %v2088
    %v2090 = vpop.f32.mrf.mxu0
    %2091 = vdwg.mxu0
    %v2092 = vadd.f32 %v2019, %v2089
    %v2093 = vmul.f32 %v2092, 0.5
    %v2094 = vtanh.pop %v2093
    %v2095 = vmul.f32 %v2094, 0.5
    %v2096 = vadd.f32 %v2095, 0.5
    %v2097 = vtanh.pop %v2092
    %2099 = vrot.lane.b32.xlu0 %v2007, 32
    %v2100 = vpop.permute.xlu0 %2099
    %v2102 = vmul.f32 %v2096, %v2100
    %2104 = vrot.lane.b32.xlu0 %v2097, 64
    %v2105 = vpop.permute.xlu0 %2104
    %v2107 = vmul.f32 %v2096, %v2105
    %2109 = vrot.lane.b32.xlu0 %v2107, 32
    %v2110 = vpop.permute.xlu0 %2109
    %v2112 = vadd.f32 %v2102, %v2110
    %v2113 = vtanh.pop %v2112
    %2115 = vrot.lane.b32.xlu0 %v2113, 64
    %v2116 = vpop.permute.xlu0 %2115
    %v2118 = vmul.f32 %v2096, %v2116
    %2120 = vrot.lane.b32.xlu0 %v2118, 32
    %v2121 = vpop.permute.xlu0 %2120
    %2123 = vst.msk [vmem:[#allocation3 + $0x8] sm:$0xff] %vm228, %v2121
    %v2124 = vld [vmem:[#allocation2 + $0x10] sm:$0xff]
    %v2125 = vsel %vm228, %v2121, 0
    %2127 = vmatprep.subr.mxu0 0.0
    %2128 = vmatpush1.msra.mxu0 0.0
    %2129 = vmatprep.subr.mxu0 0.0
    %2130 = vmatpush1.msra.mxu0 0.0
    %2131 = vmatprep.subr.mxu0 0.0
    %2132 = vmatpush1.msra.mxu0 0.0
    %2133 = vmatprep.subr.mxu0 0.0
    %2134 = vmatpush1.msra.mxu0 0.0
    %2135 = vmatprep.subr.mxu0 0.0
    %2136 = vmatpush1.msra.mxu0 0.0
    %2137 = vmatprep.subr.mxu0 0.0
    %2138 = vmatpush1.msra.mxu0 0.0
    %2139 = vmatprep.subr.mxu0 0.0
    %2140 = vmatpush1.msra.mxu0 0.0
    %2141 = vmatprep.subr.mxu0 0.0
    %2142 = vmatpush1.msra.mxu0 0.0
    %2143 = vmatprep.subr.mxu0 0.0
    %2144 = vmatpush1.msra.mxu0 0.0
    %2145 = vmatprep.subr.mxu0 0.0
    %2146 = vmatpush1.msra.mxu0 0.0
    %2147 = vmatprep.subr.mxu0 0.0
    %2148 = vmatpush1.msra.mxu0 0.0
    %2149 = vmatprep.subr.mxu0 0.0
    %2150 = vmatpush1.msra.mxu0 0.0
    %2151 = vmatprep.subr.mxu0 0.0
    %2152 = vmatpush1.msra.mxu0 %v1996
    %2153 = vmatprep.subr.mxu0 0.0
    %2154 = vmatpush1.msra.mxu0 %v1995
    %2155 = vmatprep.subr.mxu0 0.0
    %2156 = vmatpush1.msra.mxu0 %v1994
    %2157 = vmatprep.subr.mxu0 0.0
    %2158 = vmatpush1.msra.mxu0 %v1993
    %2159 = vmatprep.subr.mxu0 0.0
    %2160 = vmatpush2.msra.mxu0 0.0
    %2161 = vmatprep.subr.mxu0 0.0
    %2162 = vmatpush2.msra.mxu0 0.0
    %2163 = vmatprep.subr.mxu0 0.0
    %2164 = vmatpush2.msra.mxu0 0.0
    %2165 = vmatprep.subr.mxu0 0.0
    %2166 = vmatpush2.msra.mxu0 0.0
    %2167 = vmatprep.subr.mxu0 0.0
    %2168 = vmatpush2.msra.mxu0 0.0
    %2169 = vmatprep.subr.mxu0 0.0
    %2170 = vmatpush2.msra.mxu0 0.0
    %2171 = vmatprep.subr.mxu0 0.0
    %2172 = vmatpush2.msra.mxu0 0.0
    %2173 = vmatprep.subr.mxu0 0.0
    %2174 = vmatpush2.msra.mxu0 0.0
    %2175 = vmatprep.subr.mxu0 0.0
    %2176 = vmatpush2.msra.mxu0 0.0
    %2177 = vmatprep.subr.mxu0 0.0
    %2178 = vmatpush2.msra.mxu0 0.0
    %2179 = vmatprep.subr.mxu0 0.0
    %2180 = vmatpush2.msra.mxu0 0.0
    %2181 = vmatprep.subr.mxu0 0.0
    %2182 = vmatpush2.msra.mxu0 0.0
    %2183 = vmatprep.subr.mxu0 0.0
    %2184 = vmatpush2.msra.mxu0 0.0
    %2185 = vmatprep.subr.mxu0 0.0
    %2186 = vmatpush2.msra.mxu0 0.0
    %2187 = vmatprep.subr.mxu0 0.0
    %2188 = vmatpush2.msra.mxu0 0.0
    %2189 = vmatprep.subr.mxu0 0.0
    %2190 = vmatpush2.msra.mxu0 0.0
    %2191 = vmatprep.mubr.f32.mxu0 0.0
    %2192 = vmatmul.mubr.f32.gmra.mxu0 %v2125
    %v2193 = vpop.f32.mrf.mxu0
    %v2194 = vadd.f32 0.0, %v2193
    %v2195 = vpop.f32.mrf.mxu0
    %2196 = vdwg.mxu0
    %v2197 = vadd.f32 %v2124, %v2194
    %v2198 = vmul.f32 %v2197, 0.5
    %v2199 = vtanh.pop %v2198
    %v2200 = vmul.f32 %v2199, 0.5
    %v2201 = vadd.f32 %v2200, 0.5
    %v2202 = vtanh.pop %v2197
    %v2203 = vmul.f32 %v2201, %v2112
    %2205 = vrot.lane.b32.xlu0 %v2202, 64
    %v2206 = vpop.permute.xlu0 %2205
    %v2208 = vmul.f32 %v2201, %v2206
    %2210 = vrot.lane.b32.xlu0 %v2208, 32
    %v2211 = vpop.permute.xlu0 %2210
    %v2213 = vadd.f32 %v2203, %v2211
    %v2214 = vtanh.pop %v2213
    %2216 = vrot.lane.b32.xlu0 %v2214, 64
    %v2217 = vpop.permute.xlu0 %2216
    %v2219 = vmul.f32 %v2201, %v2217
    %2221 = vrot.lane.b32.xlu0 %v2219, 32
    %v2222 = vpop.permute.xlu0 %2221
    %2224 = vst.msk [vmem:[#allocation3 + $0x10] sm:$0xff] %vm228, %v2222
    %v2225 = vld [vmem:[#allocation2 + $0x18] sm:$0xff]
    %v2226 = vsel %vm228, %v2222, 0
    %2228 = vmatprep.subr.mxu0 0.0
    %2229 = vmatpush1.msra.mxu0 0.0
    %2230 = vmatprep.subr.mxu0 0.0
    %2231 = vmatpush1.msra.mxu0 0.0
    %2232 = vmatprep.subr.mxu0 0.0
    %2233 = vmatpush1.msra.mxu0 0.0
    %2234 = vmatprep.subr.mxu0 0.0
    %2235 = vmatpush1.msra.mxu0 0.0
    %2236 = vmatprep.subr.mxu0 0.0
    %2237 = vmatpush1.msra.mxu0 0.0
    %2238 = vmatprep.subr.mxu0 0.0
    %2239 = vmatpush1.msra.mxu0 0.0
    %2240 = vmatprep.subr.mxu0 0.0
    %2241 = vmatpush1.msra.mxu0 0.0
    %2242 = vmatprep.subr.mxu0 0.0
    %2243 = vmatpush1.msra.mxu0 0.0
    %2244 = vmatprep.subr.mxu0 0.0
    %2245 = vmatpush1.msra.mxu0 0.0
    %2246 = vmatprep.subr.mxu0 0.0
    %2247 = vmatpush1.msra.mxu0 0.0
    %2248 = vmatprep.subr.mxu0 0.0
    %2249 = vmatpush1.msra.mxu0 0.0
    %2250 = vmatprep.subr.mxu0 0.0
    %2251 = vmatpush1.msra.mxu0 0.0
    %2252 = vmatprep.subr.mxu0 0.0
    %2253 = vmatpush1.msra.mxu0 %v1996
    %2254 = vmatprep.subr.mxu0 0.0
    %2255 = vmatpush1.msra.mxu0 %v1995
    %2256 = vmatprep.subr.mxu0 0.0
    %2257 = vmatpush1.msra.mxu0 %v1994
    %2258 = vmatprep.subr.mxu0 0.0
    %2259 = vmatpush1.msra.mxu0 %v1993
    %2260 = vmatprep.subr.mxu0 0.0
    %2261 = vmatpush2.msra.mxu0 0.0
    %2262 = vmatprep.subr.mxu0 0.0
    %2263 = vmatpush2.msra.mxu0 0.0
    %2264 = vmatprep.subr.mxu0 0.0
    %2265 = vmatpush2.msra.mxu0 0.0
    %2266 = vmatprep.subr.mxu0 0.0
    %2267 = vmatpush2.msra.mxu0 0.0
    %2268 = vmatprep.subr.mxu0 0.0
    %2269 = vmatpush2.msra.mxu0 0.0
    %2270 = vmatprep.subr.mxu0 0.0
    %2271 = vmatpush2.msra.mxu0 0.0
    %2272 = vmatprep.subr.mxu0 0.0
    %2273 = vmatpush2.msra.mxu0 0.0
    %2274 = vmatprep.subr.mxu0 0.0
    %2275 = vmatpush2.msra.mxu0 0.0
    %2276 = vmatprep.subr.mxu0 0.0
    %2277 = vmatpush2.msra.mxu0 0.0
    %2278 = vmatprep.subr.mxu0 0.0
    %2279 = vmatpush2.msra.mxu0 0.0
    %2280 = vmatprep.subr.mxu0 0.0
    %2281 = vmatpush2.msra.mxu0 0.0
    %2282 = vmatprep.subr.mxu0 0.0
    %2283 = vmatpush2.msra.mxu0 0.0
    %2284 = vmatprep.subr.mxu0 0.0
    %2285 = vmatpush2.msra.mxu0 0.0
    %2286 = vmatprep.subr.mxu0 0.0
    %2287 = vmatpush2.msra.mxu0 0.0
    %2288 = vmatprep.subr.mxu0 0.0
    %2289 = vmatpush2.msra.mxu0 0.0
    %2290 = vmatprep.subr.mxu0 0.0
    %2291 = vmatpush2.msra.mxu0 0.0
    %2292 = vmatprep.mubr.f32.mxu0 0.0
    %2293 = vmatmul.mubr.f32.gmra.mxu0 %v2226
    %v2294 = vpop.f32.mrf.mxu0
    %v2295 = vadd.f32 0.0, %v2294
    %v2296 = vpop.f32.mrf.mxu0
    %2297 = vdwg.mxu0
    %v2298 = vadd.f32 %v2225, %v2295
    %v2299 = vmul.f32 %v2298, 0.5
    %v2300 = vtanh.pop %v2299
    %v2301 = vmul.f32 %v2300, 0.5
    %v2302 = vadd.f32 %v2301, 0.5
    %v2303 = vtanh.pop %v2298
    %v2304 = vmul.f32 %v2302, %v2213
    %2306 = vrot.lane.b32.xlu0 %v2303, 64
    %v2307 = vpop.permute.xlu0 %2306
    %v2309 = vmul.f32 %v2302, %v2307
    %2311 = vrot.lane.b32.xlu0 %v2309, 32
    %v2312 = vpop.permute.xlu0 %2311
    %v2314 = vadd.f32 %v2304, %v2312
    %v2315 = vtanh.pop %v2314
    %2317 = vrot.lane.b32.xlu0 %v2315, 64
    %v2318 = vpop.permute.xlu0 %2317
    %v2320 = vmul.f32 %v2302, %v2318
    %2322 = vrot.lane.b32.xlu0 %v2320, 32
    %v2323 = vpop.permute.xlu0 %2322
    %2325 = vst.msk [vmem:[#allocation3 + $0x18] sm:$0xff] %vm228, %v2323
    %v2326 = vld [vmem:[#allocation2 + $0x20] sm:$0xff]
    %v2327 = vsel %vm228, %v2323, 0
    %2329 = vmatprep.subr.mxu0 0.0
    %2330 = vmatpush1.msra.mxu0 0.0
    %2331 = vmatprep.subr.mxu0 0.0
    %2332 = vmatpush1.msra.mxu0 0.0
    %2333 = vmatprep.subr.mxu0 0.0
    %2334 = vmatpush1.msra.mxu0 0.0
    %2335 = vmatprep.subr.mxu0 0.0
    %2336 = vmatpush1.msra.mxu0 0.0
    %2337 = vmatprep.subr.mxu0 0.0
    %2338 = vmatpush1.msra.mxu0 0.0
    %2339 = vmatprep.subr.mxu0 0.0
    %2340 = vmatpush1.msra.mxu0 0.0
    %2341 = vmatprep.subr.mxu0 0.0
    %2342 = vmatpush1.msra.mxu0 0.0
    %2343 = vmatprep.subr.mxu0 0.0
    %2344 = vmatpush1.msra.mxu0 0.0
    %2345 = vmatprep.subr.mxu0 0.0
    %2346 = vmatpush1.msra.mxu0 0.0
    %2347 = vmatprep.subr.mxu0 0.0
    %2348 = vmatpush1.msra.mxu0 0.0
    %2349 = vmatprep.subr.mxu0 0.0
    %2350 = vmatpush1.msra.mxu0 0.0
    %2351 = vmatprep.subr.mxu0 0.0
    %2352 = vmatpush1.msra.mxu0 0.0
    %2353 = vmatprep.subr.mxu0 0.0
    %2354 = vmatpush1.msra.mxu0 %v1996
    %2355 = vmatprep.subr.mxu0 0.0
    %2356 = vmatpush1.msra.mxu0 %v1995
    %2357 = vmatprep.subr.mxu0 0.0
    %2358 = vmatpush1.msra.mxu0 %v1994
    %2359 = vmatprep.subr.mxu0 0.0
    %2360 = vmatpush1.msra.mxu0 %v1993
    %2361 = vmatprep.subr.mxu0 0.0
    %2362 = vmatpush2.msra.mxu0 0.0
    %2363 = vmatprep.subr.mxu0 0.0
    %2364 = vmatpush2.msra.mxu0 0.0
    %2365 = vmatprep.subr.mxu0 0.0
    %2366 = vmatpush2.msra.mxu0 0.0
    %2367 = vmatprep.subr.mxu0 0.0
    %2368 = vmatpush2.msra.mxu0 0.0
    %2369 = vmatprep.subr.mxu0 0.0
    %2370 = vmatpush2.msra.mxu0 0.0
    %2371 = vmatprep.subr.mxu0 0.0
    %2372 = vmatpush2.msra.mxu0 0.0
    %2373 = vmatprep.subr.mxu0 0.0
    %2374 = vmatpush2.msra.mxu0 0.0
    %2375 = vmatprep.subr.mxu0 0.0
    %2376 = vmatpush2.msra.mxu0 0.0
    %2377 = vmatprep.subr.mxu0 0.0
    %2378 = vmatpush2.msra.mxu0 0.0
    %2379 = vmatprep.subr.mxu0 0.0
    %2380 = vmatpush2.msra.mxu0 0.0
    %2381 = vmatprep.subr.mxu0 0.0
    %2382 = vmatpush2.msra.mxu0 0.0
    %2383 = vmatprep.subr.mxu0 0.0
    %2384 = vmatpush2.msra.mxu0 0.0
    %2385 = vmatprep.subr.mxu0 0.0
    %2386 = vmatpush2.msra.mxu0 0.0
    %2387 = vmatprep.subr.mxu0 0.0
    %2388 = vmatpush2.msra.mxu0 0.0
    %2389 = vmatprep.subr.mxu0 0.0
    %2390 = vmatpush2.msra.mxu0 0.0
    %2391 = vmatprep.subr.mxu0 0.0
    %2392 = vmatpush2.msra.mxu0 0.0
    %2393 = vmatprep.mubr.f32.mxu0 0.0
    %2394 = vmatmul.mubr.f32.gmra.mxu0 %v2327
    %v2395 = vpop.f32.mrf.mxu0
    %v2396 = vadd.f32 0.0, %v2395
    %v2397 = vpop.f32.mrf.mxu0
    %2398 = vdwg.mxu0
    %v2399 = vadd.f32 %v2326, %v2396
    %v2400 = vmul.f32 %v2399, 0.5
    %v2401 = vtanh.pop %v2400
    %v2402 = vmul.f32 %v2401, 0.5
    %v2403 = vadd.f32 %v2402, 0.5
    %v2404 = vtanh.pop %v2399
    %v2405 = vmul.f32 %v2403, %v2314
    %2407 = vrot.lane.b32.xlu0 %v2404, 64
    %v2408 = vpop.permute.xlu0 %2407
    %v2410 = vmul.f32 %v2403, %v2408
    %2412 = vrot.lane.b32.xlu0 %v2410, 32
    %v2413 = vpop.permute.xlu0 %2412
    %v2415 = vadd.f32 %v2405, %v2413
    %v2416 = vtanh.pop %v2415
    %2418 = vrot.lane.b32.xlu0 %v2416, 64
    %v2419 = vpop.permute.xlu0 %2418
    %v2421 = vmul.f32 %v2403, %v2419
    %2423 = vrot.lane.b32.xlu0 %v2421, 32
    %v2424 = vpop.permute.xlu0 %2423
    %2426 = vst.msk [vmem:[#allocation3 + $0x20] sm:$0xff] %vm228, %v2424
    %v2427 = vld [vmem:[#allocation2 + $0x28] sm:$0xff]
    %v2428 = vsel %vm228, %v2424, 0
    %2430 = vmatprep.subr.mxu0 0.0
    %2431 = vmatpush1.msra.mxu0 0.0
    %2432 = vmatprep.subr.mxu0 0.0
    %2433 = vmatpush1.msra.mxu0 0.0
    %2434 = vmatprep.subr.mxu0 0.0
    %2435 = vmatpush1.msra.mxu0 0.0
    %2436 = vmatprep.subr.mxu0 0.0
    %2437 = vmatpush1.msra.mxu0 0.0
    %2438 = vmatprep.subr.mxu0 0.0
    %2439 = vmatpush1.msra.mxu0 0.0
    %2440 = vmatprep.subr.mxu0 0.0
    %2441 = vmatpush1.msra.mxu0 0.0
    %2442 = vmatprep.subr.mxu0 0.0
    %2443 = vmatpush1.msra.mxu0 0.0
    %2444 = vmatprep.subr.mxu0 0.0
    %2445 = vmatpush1.msra.mxu0 0.0
    %2446 = vmatprep.subr.mxu0 0.0
    %2447 = vmatpush1.msra.mxu0 0.0
    %2448 = vmatprep.subr.mxu0 0.0
    %2449 = vmatpush1.msra.mxu0 0.0
    %2450 = vmatprep.subr.mxu0 0.0
    %2451 = vmatpush1.msra.mxu0 0.0
    %2452 = vmatprep.subr.mxu0 0.0
    %2453 = vmatpush1.msra.mxu0 0.0
    %2454 = vmatprep.subr.mxu0 0.0
    %2455 = vmatpush1.msra.mxu0 %v1996
    %2456 = vmatprep.subr.mxu0 0.0
    %2457 = vmatpush1.msra.mxu0 %v1995
    %2458 = vmatprep.subr.mxu0 0.0
    %2459 = vmatpush1.msra.mxu0 %v1994
    %2460 = vmatprep.subr.mxu0 0.0
    %2461 = vmatpush1.msra.mxu0 %v1993
    %2462 = vmatprep.subr.mxu0 0.0
    %2463 = vmatpush2.msra.mxu0 0.0
    %2464 = vmatprep.subr.mxu0 0.0
    %2465 = vmatpush2.msra.mxu0 0.0
    %2466 = vmatprep.subr.mxu0 0.0
    %2467 = vmatpush2.msra.mxu0 0.0
    %2468 = vmatprep.subr.mxu0 0.0
    %2469 = vmatpush2.msra.mxu0 0.0
    %2470 = vmatprep.subr.mxu0 0.0
    %2471 = vmatpush2.msra.mxu0 0.0
    %2472 = vmatprep.subr.mxu0 0.0
    %2473 = vmatpush2.msra.mxu0 0.0
    %2474 = vmatprep.subr.mxu0 0.0
    %2475 = vmatpush2.msra.mxu0 0.0
    %2476 = vmatprep.subr.mxu0 0.0
    %2477 = vmatpush2.msra.mxu0 0.0
    %2478 = vmatprep.subr.mxu0 0.0
    %2479 = vmatpush2.msra.mxu0 0.0
    %2480 = vmatprep.subr.mxu0 0.0
    %2481 = vmatpush2.msra.mxu0 0.0
    %2482 = vmatprep.subr.mxu0 0.0
    %2483 = vmatpush2.msra.mxu0 0.0
    %2484 = vmatprep.subr.mxu0 0.0
    %2485 = vmatpush2.msra.mxu0 0.0
    %2486 = vmatprep.subr.mxu0 0.0
    %2487 = vmatpush2.msra.mxu0 0.0
    %2488 = vmatprep.subr.mxu0 0.0
    %2489 = vmatpush2.msra.mxu0 0.0
    %2490 = vmatprep.subr.mxu0 0.0
    %2491 = vmatpush2.msra.mxu0 0.0
    %2492 = vmatprep.subr.mxu0 0.0
    %2493 = vmatpush2.msra.mxu0 0.0
    %2494 = vmatprep.mubr.f32.mxu0 0.0
    %2495 = vmatmul.mubr.f32.gmra.mxu0 %v2428
    %v2496 = vpop.f32.mrf.mxu0
    %v2497 = vadd.f32 0.0, %v2496
    %v2498 = vpop.f32.mrf.mxu0
    %2499 = vdwg.mxu0
    %v2500 = vadd.f32 %v2427, %v2497
    %v2501 = vmul.f32 %v2500, 0.5
    %v2502 = vtanh.pop %v2501
    %v2503 = vmul.f32 %v2502, 0.5
    %v2504 = vadd.f32 %v2503, 0.5
    %v2505 = vtanh.pop %v2500
    %v2506 = vmul.f32 %v2504, %v2415
    %2508 = vrot.lane.b32.xlu0 %v2505, 64
    %v2509 = vpop.permute.xlu0 %2508
    %v2511 = vmul.f32 %v2504, %v2509
    %2513 = vrot.lane.b32.xlu0 %v2511, 32
    %v2514 = vpop.permute.xlu0 %2513
    %v2516 = vadd.f32 %v2506, %v2514
    %v2517 = vtanh.pop %v2516
    %2519 = vrot.lane.b32.xlu0 %v2517, 64
    %v2520 = vpop.permute.xlu0 %2519
    %v2522 = vmul.f32 %v2504, %v2520
    %2524 = vrot.lane.b32.xlu0 %v2522, 32
    %v2525 = vpop.permute.xlu0 %2524
    %2527 = vst.msk [vmem:[#allocation3 + $0x28] sm:$0xff] %vm228, %v2525
    %v2528 = vld [vmem:[#allocation2 + $0x30] sm:$0xff]
    %v2529 = vsel %vm228, %v2525, 0
    %2531 = vmatprep.subr.mxu0 0.0
    %2532 = vmatpush1.msra.mxu0 0.0
    %2533 = vmatprep.subr.mxu0 0.0
    %2534 = vmatpush1.msra.mxu0 0.0
    %2535 = vmatprep.subr.mxu0 0.0
    %2536 = vmatpush1.msra.mxu0 0.0
    %2537 = vmatprep.subr.mxu0 0.0
    %2538 = vmatpush1.msra.mxu0 0.0
    %2539 = vmatprep.subr.mxu0 0.0
    %2540 = vmatpush1.msra.mxu0 0.0
    %2541 = vmatprep.subr.mxu0 0.0
    %2542 = vmatpush1.msra.mxu0 0.0
    %2543 = vmatprep.subr.mxu0 0.0
    %2544 = vmatpush1.msra.mxu0 0.0
    %2545 = vmatprep.subr.mxu0 0.0
    %2546 = vmatpush1.msra.mxu0 0.0
    %2547 = vmatprep.subr.mxu0 0.0
    %2548 = vmatpush1.msra.mxu0 0.0
    %2549 = vmatprep.subr.mxu0 0.0
    %2550 = vmatpush1.msra.mxu0 0.0
    %2551 = vmatprep.subr.mxu0 0.0
    %2552 = vmatpush1.msra.mxu0 0.0
    %2553 = vmatprep.subr.mxu0 0.0
    %2554 = vmatpush1.msra.mxu0 0.0
    %2555 = vmatprep.subr.mxu0 0.0
    %2556 = vmatpush1.msra.mxu0 %v1996
    %2557 = vmatprep.subr.mxu0 0.0
    %2558 = vmatpush1.msra.mxu0 %v1995
    %2559 = vmatprep.subr.mxu0 0.0
    %2560 = vmatpush1.msra.mxu0 %v1994
    %2561 = vmatprep.subr.mxu0 0.0
    %2562 = vmatpush1.msra.mxu0 %v1993
    %2563 = vmatprep.subr.mxu0 0.0
    %2564 = vmatpush2.msra.mxu0 0.0
    %2565 = vmatprep.subr.mxu0 0.0
    %2566 = vmatpush2.msra.mxu0 0.0
    %2567 = vmatprep.subr.mxu0 0.0
    %2568 = vmatpush2.msra.mxu0 0.0
    %2569 = vmatprep.subr.mxu0 0.0
    %2570 = vmatpush2.msra.mxu0 0.0
    %2571 = vmatprep.subr.mxu0 0.0
    %2572 = vmatpush2.msra.mxu0 0.0
    %2573 = vmatprep.subr.mxu0 0.0
    %2574 = vmatpush2.msra.mxu0 0.0
    %2575 = vmatprep.subr.mxu0 0.0
    %2576 = vmatpush2.msra.mxu0 0.0
    %2577 = vmatprep.subr.mxu0 0.0
    %2578 = vmatpush2.msra.mxu0 0.0
    %2579 = vmatprep.subr.mxu0 0.0
    %2580 = vmatpush2.msra.mxu0 0.0
    %2581 = vmatprep.subr.mxu0 0.0
    %2582 = vmatpush2.msra.mxu0 0.0
    %2583 = vmatprep.subr.mxu0 0.0
    %2584 = vmatpush2.msra.mxu0 0.0
    %2585 = vmatprep.subr.mxu0 0.0
    %2586 = vmatpush2.msra.mxu0 0.0
    %2587 = vmatprep.subr.mxu0 0.0
    %2588 = vmatpush2.msra.mxu0 0.0
    %2589 = vmatprep.subr.mxu0 0.0
    %2590 = vmatpush2.msra.mxu0 0.0
    %2591 = vmatprep.subr.mxu0 0.0
    %2592 = vmatpush2.msra.mxu0 0.0
    %2593 = vmatprep.subr.mxu0 0.0
    %2594 = vmatpush2.msra.mxu0 0.0
    %2595 = vmatprep.mubr.f32.mxu0 0.0
    %2596 = vmatmul.mubr.f32.gmra.mxu0 %v2529
    %v2597 = vpop.f32.mrf.mxu0
    %v2598 = vadd.f32 0.0, %v2597
    %v2599 = vpop.f32.mrf.mxu0
    %2600 = vdwg.mxu0
    %v2601 = vadd.f32 %v2528, %v2598
    %v2602 = vmul.f32 %v2601, 0.5
    %v2603 = vtanh.pop %v2602
    %v2604 = vmul.f32 %v2603, 0.5
    %v2605 = vadd.f32 %v2604, 0.5
    %v2606 = vtanh.pop %v2601
    %v2607 = vmul.f32 %v2605, %v2516
    %2609 = vrot.lane.b32.xlu0 %v2606, 64
    %v2610 = vpop.permute.xlu0 %2609
    %v2612 = vmul.f32 %v2605, %v2610
    %2614 = vrot.lane.b32.xlu0 %v2612, 32
    %v2615 = vpop.permute.xlu0 %2614
    %v2617 = vadd.f32 %v2607, %v2615
    %v2618 = vtanh.pop %v2617
    %2620 = vrot.lane.b32.xlu0 %v2618, 64
    %v2621 = vpop.permute.xlu0 %2620
    %v2623 = vmul.f32 %v2605, %v2621
    %2625 = vrot.lane.b32.xlu0 %v2623, 32
    %v2626 = vpop.permute.xlu0 %2625
    %2628 = vst.msk [vmem:[#allocation3 + $0x30] sm:$0xff] %vm228, %v2626
    %v2629 = vld [vmem:[#allocation2 + $0x38] sm:$0xff]
    %v2630 = vsel %vm228, %v2626, 0
    %2632 = vmatprep.subr.mxu0 0.0
    %2633 = vmatpush1.msra.mxu0 0.0
    %2634 = vmatprep.subr.mxu0 0.0
    %2635 = vmatpush1.msra.mxu0 0.0
    %2636 = vmatprep.subr.mxu0 0.0
    %2637 = vmatpush1.msra.mxu0 0.0
    %2638 = vmatprep.subr.mxu0 0.0
    %2639 = vmatpush1.msra.mxu0 0.0
    %2640 = vmatprep.subr.mxu0 0.0
    %2641 = vmatpush1.msra.mxu0 0.0
    %2642 = vmatprep.subr.mxu0 0.0
    %2643 = vmatpush1.msra.mxu0 0.0
    %2644 = vmatprep.subr.mxu0 0.0
    %2645 = vmatpush1.msra.mxu0 0.0
    %2646 = vmatprep.subr.mxu0 0.0
    %2647 = vmatpush1.msra.mxu0 0.0
    %2648 = vmatprep.subr.mxu0 0.0
    %2649 = vmatpush1.msra.mxu0 0.0
    %2650 = vmatprep.subr.mxu0 0.0
    %2651 = vmatpush1.msra.mxu0 0.0
    %2652 = vmatprep.subr.mxu0 0.0
    %2653 = vmatpush1.msra.mxu0 0.0
    %2654 = vmatprep.subr.mxu0 0.0
    %2655 = vmatpush1.msra.mxu0 0.0
    %2656 = vmatprep.subr.mxu0 0.0
    %2657 = vmatpush1.msra.mxu0 %v1996
    %2658 = vmatprep.subr.mxu0 0.0
    %2659 = vmatpush1.msra.mxu0 %v1995
    %2660 = vmatprep.subr.mxu0 0.0
    %2661 = vmatpush1.msra.mxu0 %v1994
    %2662 = vmatprep.subr.mxu0 0.0
    %2663 = vmatpush1.msra.mxu0 %v1993
    %2664 = vmatprep.subr.mxu0 0.0
    %2665 = vmatpush2.msra.mxu0 0.0
    %2666 = vmatprep.subr.mxu0 0.0
    %2667 = vmatpush2.msra.mxu0 0.0
    %2668 = vmatprep.subr.mxu0 0.0
    %2669 = vmatpush2.msra.mxu0 0.0
    %2670 = vmatprep.subr.mxu0 0.0
    %2671 = vmatpush2.msra.mxu0 0.0
    %2672 = vmatprep.subr.mxu0 0.0
    %2673 = vmatpush2.msra.mxu0 0.0
    %2674 = vmatprep.subr.mxu0 0.0
    %2675 = vmatpush2.msra.mxu0 0.0
    %2676 = vmatprep.subr.mxu0 0.0
    %2677 = vmatpush2.msra.mxu0 0.0
    %2678 = vmatprep.subr.mxu0 0.0
    %2679 = vmatpush2.msra.mxu0 0.0
    %2680 = vmatprep.subr.mxu0 0.0
    %2681 = vmatpush2.msra.mxu0 0.0
    %2682 = vmatprep.subr.mxu0 0.0
    %2683 = vmatpush2.msra.mxu0 0.0
    %2684 = vmatprep.subr.mxu0 0.0
    %2685 = vmatpush2.msra.mxu0 0.0
    %2686 = vmatprep.subr.mxu0 0.0
    %2687 = vmatpush2.msra.mxu0 0.0
    %2688 = vmatprep.subr.mxu0 0.0
    %2689 = vmatpush2.msra.mxu0 0.0
    %2690 = vmatprep.subr.mxu0 0.0
    %2691 = vmatpush2.msra.mxu0 0.0
    %2692 = vmatprep.subr.mxu0 0.0
    %2693 = vmatpush2.msra.mxu0 0.0
    %2694 = vmatprep.subr.mxu0 0.0
    %2695 = vmatpush2.msra.mxu0 0.0
    %2696 = vmatprep.mubr.f32.mxu0 0.0
    %2697 = vmatmul.mubr.f32.gmra.mxu0 %v2630
    %v2698 = vpop.f32.mrf.mxu0
    %v2699 = vadd.f32 0.0, %v2698
    %v2700 = vpop.f32.mrf.mxu0
    %2701 = vdwg.mxu0
    %v2702 = vadd.f32 %v2629, %v2699
    %v2703 = vmul.f32 %v2702, 0.5
    %v2704 = vtanh.pop %v2703
    %v2705 = vmul.f32 %v2704, 0.5
    %v2706 = vadd.f32 %v2705, 0.5
    %v2707 = vtanh.pop %v2702
    %v2708 = vmul.f32 %v2706, %v2617
    %2710 = vrot.lane.b32.xlu0 %v2707, 64
    %v2711 = vpop.permute.xlu0 %2710
    %v2713 = vmul.f32 %v2706, %v2711
    %2715 = vrot.lane.b32.xlu0 %v2713, 32
    %v2716 = vpop.permute.xlu0 %2715
    %v2718 = vadd.f32 %v2708, %v2716
    %v2719 = vtanh.pop %v2718
    %2721 = vrot.lane.b32.xlu0 %v2719, 64
    %v2722 = vpop.permute.xlu0 %2721
    %v2724 = vmul.f32 %v2706, %v2722
    %2726 = vrot.lane.b32.xlu0 %v2724, 32
    %v2727 = vpop.permute.xlu0 %2726
    %2729 = vst.msk [vmem:[#allocation3 + $0x38] sm:$0xff] %vm228, %v2727
    %v2730 = vld [vmem:[#allocation3] sm:$0xff]
    %v2731 = vld [vmem:[#allocation3 + $0x8] sm:$0xff]
    %v2732 = vld [vmem:[#allocation3 + $0x10] sm:$0xff]
    %v2733 = vld [vmem:[#allocation3 + $0x18] sm:$0xff]
    %v2734 = vld [vmem:[#allocation3 + $0x20] sm:$0xff]
    %v2735 = vld [vmem:[#allocation3 + $0x28] sm:$0xff]
    %v2736 = vld [vmem:[#allocation3 + $0x30] sm:$0xff]
    %v2737 = vld [vmem:[#allocation3 + $0x38] sm:$0xff]
    %s2738 = scalar_lea.vmem %s4, 64
    %v2739 = vld [vmem:[%s2738] sm:$0xff]
    %v2740 = vld [vmem:[%s2738 + $0x8] sm:$0xff]
    %v2741 = vld [vmem:[%s2738 + $0x10] sm:$0xff]
    %v2742 = vld [vmem:[%s2738 + $0x18] sm:$0xff]
    %s2743 = scalar_lea.vmem %s6, 2
    %v2744 = vld [vmem:[%s2743] sm:$0x1]
    %v2746 = vlaneseq
    %v2747 = vshrl.u32 %v2746, 7
    %v2748 = vsub.s32 0, %v2747
    %v2749 = vrot.slane %v2744, %v2748
    %v2752 = vsel %vm228, %v2730, 0
    %v2755 = vsel %vm228, %v2731, 0
    %v2758 = vsel %vm228, %v2732, 0
    %v2761 = vsel %vm228, %v2733, 0
    %v2764 = vsel %vm228, %v2734, 0
    %v2767 = vsel %vm228, %v2735, 0
    %v2770 = vsel %vm228, %v2736, 0
    %v2773 = vsel %vm228, %v2737, 0
    %2775 = vmatprep.subr.mxu0 0.0
    %2776 = vmatpush1.msra.mxu0 0.0
    %2777 = vmatprep.subr.mxu0 0.0
    %2778 = vmatpush1.msra.mxu0 0.0
    %2779 = vmatprep.subr.mxu0 0.0
    %2780 = vmatpush1.msra.mxu0 0.0
    %2781 = vmatprep.subr.mxu0 0.0
    %2782 = vmatpush1.msra.mxu0 0.0
    %2783 = vmatprep.subr.mxu0 0.0
    %2784 = vmatpush1.msra.mxu0 0.0
    %2785 = vmatprep.subr.mxu0 0.0
    %2786 = vmatpush1.msra.mxu0 0.0
    %2787 = vmatprep.subr.mxu0 0.0
    %2788 = vmatpush1.msra.mxu0 0.0
    %2789 = vmatprep.subr.mxu0 0.0
    %2790 = vmatpush1.msra.mxu0 0.0
    %2791 = vmatprep.subr.mxu0 0.0
    %2792 = vmatpush1.msra.mxu0 0.0
    %2793 = vmatprep.subr.mxu0 0.0
    %2794 = vmatpush1.msra.mxu0 0.0
    %2795 = vmatprep.subr.mxu0 0.0
    %2796 = vmatpush1.msra.mxu0 0.0
    %2797 = vmatprep.subr.mxu0 0.0
    %2798 = vmatpush1.msra.mxu0 0.0
    %2799 = vmatprep.subr.mxu0 0.0
    %2800 = vmatpush1.msra.mxu0 %v2742
    %2801 = vmatprep.subr.mxu0 0.0
    %2802 = vmatpush1.msra.mxu0 %v2741
    %2803 = vmatprep.subr.mxu0 0.0
    %2804 = vmatpush1.msra.mxu0 %v2740
    %2805 = vmatprep.subr.mxu0 0.0
    %2806 = vmatpush1.msra.mxu0 %v2739
    %2807 = vmatprep.subr.mxu0 0.0
    %2808 = vmatpush2.msra.mxu0 0.0
    %2809 = vmatprep.subr.mxu0 0.0
    %2810 = vmatpush2.msra.mxu0 0.0
    %2811 = vmatprep.subr.mxu0 0.0
    %2812 = vmatpush2.msra.mxu0 0.0
    %2813 = vmatprep.subr.mxu0 0.0
    %2814 = vmatpush2.msra.mxu0 0.0
    %2815 = vmatprep.subr.mxu0 0.0
    %2816 = vmatpush2.msra.mxu0 0.0
    %2817 = vmatprep.subr.mxu0 0.0
    %2818 = vmatpush2.msra.mxu0 0.0
    %2819 = vmatprep.subr.mxu0 0.0
    %2820 = vmatpush2.msra.mxu0 0.0
    %2821 = vmatprep.subr.mxu0 0.0
    %2822 = vmatpush2.msra.mxu0 0.0
    %2823 = vmatprep.subr.mxu0 0.0
    %2824 = vmatpush2.msra.mxu0 0.0
    %2825 = vmatprep.subr.mxu0 0.0
    %2826 = vmatpush2.msra.mxu0 0.0
    %2827 = vmatprep.subr.mxu0 0.0
    %2828 = vmatpush2.msra.mxu0 0.0
    %2829 = vmatprep.subr.mxu0 0.0
    %2830 = vmatpush2.msra.mxu0 0.0
    %2831 = vmatprep.subr.mxu0 0.0
    %2832 = vmatpush2.msra.mxu0 0.0
    %2833 = vmatprep.subr.mxu0 0.0
    %2834 = vmatpush2.msra.mxu0 0.0
    %2835 = vmatprep.subr.mxu0 0.0
    %2836 = vmatpush2.msra.mxu0 0.0
    %2837 = vmatprep.subr.mxu0 0.0
    %2838 = vmatpush2.msra.mxu0 0.0
    %2839 = vmatprep.mubr.f32.mxu0 0.0
    %2840 = vmatmul.mubr.f32.gmra.mxu0 %v2752
    %v2841 = vpop.f32.mrf.mxu0
    %v2842 = vadd.f32 %v2749, %v2841
    %v2843 = vpop.f32.mrf.mxu0
    %2844 = vmatprep.mubr.f32.mxu0 0.0
    %2845 = vmatmul.mubr.f32.gmra.mxu0 %v2755
    %v2846 = vpop.f32.mrf.mxu0
    %v2847 = vadd.f32 %v2749, %v2846
    %v2848 = vpop.f32.mrf.mxu0
    %2849 = vmatprep.mubr.f32.mxu0 0.0
    %2850 = vmatmul.mubr.f32.gmra.mxu0 %v2758
    %v2851 = vpop.f32.mrf.mxu0
    %v2852 = vadd.f32 %v2749, %v2851
    %v2853 = vpop.f32.mrf.mxu0
    %2854 = vmatprep.mubr.f32.mxu0 0.0
    %2855 = vmatmul.mubr.f32.gmra.mxu0 %v2761
    %v2856 = vpop.f32.mrf.mxu0
    %v2857 = vadd.f32 %v2749, %v2856
    %v2858 = vpop.f32.mrf.mxu0
    %2859 = vmatprep.mubr.f32.mxu0 0.0
    %2860 = vmatmul.mubr.f32.gmra.mxu0 %v2764
    %v2861 = vpop.f32.mrf.mxu0
    %v2862 = vadd.f32 %v2749, %v2861
    %v2863 = vpop.f32.mrf.mxu0
    %2864 = vmatprep.mubr.f32.mxu0 0.0
    %2865 = vmatmul.mubr.f32.gmra.mxu0 %v2767
    %v2866 = vpop.f32.mrf.mxu0
    %v2867 = vadd.f32 %v2749, %v2866
    %v2868 = vpop.f32.mrf.mxu0
    %2869 = vmatprep.mubr.f32.mxu0 0.0
    %2870 = vmatmul.mubr.f32.gmra.mxu0 %v2770
    %v2871 = vpop.f32.mrf.mxu0
    %v2872 = vadd.f32 %v2749, %v2871
    %v2873 = vpop.f32.mrf.mxu0
    %2874 = vmatprep.mubr.f32.mxu0 0.0
    %2875 = vmatmul.mubr.f32.gmra.mxu0 %v2773
    %v2876 = vpop.f32.mrf.mxu0
    %v2877 = vadd.f32 %v2749, %v2876
    %v2878 = vpop.f32.mrf.mxu0
    %2879 = vdwg.mxu0
    %2880 = vst [vmem:[#allocation2] sm:$0xff] %v2842
    %2881 = vst [vmem:[#allocation2 + $0x8] sm:$0xff] %v2847
    %2882 = vst [vmem:[#allocation2 + $0x10] sm:$0xff] %v2852
    %2883 = vst [vmem:[#allocation2 + $0x18] sm:$0xff] %v2857
    %2884 = vst [vmem:[#allocation2 + $0x20] sm:$0xff] %v2862
    %2885 = vst [vmem:[#allocation2 + $0x28] sm:$0xff] %v2867
    %2886 = vst [vmem:[#allocation2 + $0x30] sm:$0xff] %v2872
    %2887 = vst [vmem:[#allocation2 + $0x38] sm:$0xff] %v2877
    %s2888 = scalar_lea.vmem %s5, 64
    %v2889 = vld [vmem:[%s2888] sm:$0xff]
    %v2890 = vld [vmem:[%s2888 + $0x8] sm:$0xff]
    %v2891 = vld [vmem:[%s2888 + $0x10] sm:$0xff]
    %v2892 = vld [vmem:[%s2888 + $0x18] sm:$0xff]
    %v2893 = vld [vmem:[#allocation2] sm:$0xff]
    %v2894 = vmul.f32 %v2893, 0.5
    %v2895 = vtanh.pop %v2894
    %v2896 = vmul.f32 %v2895, 0.5
    %v2897 = vadd.f32 %v2896, 0.5
    %v2898 = vtanh.pop %v2893
    %2900 = vrot.lane.b32.xlu0 %v2898, 64
    %v2901 = vpop.permute.xlu0 %2900
    %v2903 = vmul.f32 %v2897, %v2901
    %v2904 = vtanh.pop %v2903
    %2906 = vrot.lane.b32.xlu0 %v2904, 96
    %v2907 = vpop.permute.xlu0 %2906
    %v2909 = vmul.f32 %v2897, %v2907
    %v2910 = vld [vmem:[#allocation2 + $0x8] sm:$0xff]
    %2912 = vrot.lane.b32.xlu0 %v2909, 32
    %v2913 = vpop.permute.xlu0 %2912
    %v2914 = vsel %vm228, %v2913, 0
    %2916 = vmatprep.subr.mxu0 0.0
    %2917 = vmatpush1.msra.mxu0 0.0
    %2918 = vmatprep.subr.mxu0 0.0
    %2919 = vmatpush1.msra.mxu0 0.0
    %2920 = vmatprep.subr.mxu0 0.0
    %2921 = vmatpush1.msra.mxu0 0.0
    %2922 = vmatprep.subr.mxu0 0.0
    %2923 = vmatpush1.msra.mxu0 0.0
    %2924 = vmatprep.subr.mxu0 0.0
    %2925 = vmatpush1.msra.mxu0 0.0
    %2926 = vmatprep.subr.mxu0 0.0
    %2927 = vmatpush1.msra.mxu0 0.0
    %2928 = vmatprep.subr.mxu0 0.0
    %2929 = vmatpush1.msra.mxu0 0.0
    %2930 = vmatprep.subr.mxu0 0.0
    %2931 = vmatpush1.msra.mxu0 0.0
    %2932 = vmatprep.subr.mxu0 0.0
    %2933 = vmatpush1.msra.mxu0 0.0
    %2934 = vmatprep.subr.mxu0 0.0
    %2935 = vmatpush1.msra.mxu0 0.0
    %2936 = vmatprep.subr.mxu0 0.0
    %2937 = vmatpush1.msra.mxu0 0.0
    %2938 = vmatprep.subr.mxu0 0.0
    %2939 = vmatpush1.msra.mxu0 0.0
    %2940 = vmatprep.subr.mxu0 0.0
    %2941 = vmatpush1.msra.mxu0 %v2892
    %2942 = vmatprep.subr.mxu0 0.0
    %2943 = vmatpush1.msra.mxu0 %v2891
    %2944 = vmatprep.subr.mxu0 0.0
    %2945 = vmatpush1.msra.mxu0 %v2890
    %2946 = vmatprep.subr.mxu0 0.0
    %2947 = vmatpush1.msra.mxu0 %v2889
    %2948 = vmatprep.subr.mxu0 0.0
    %2949 = vmatpush2.msra.mxu0 0.0
    %2950 = vmatprep.subr.mxu0 0.0
    %2951 = vmatpush2.msra.mxu0 0.0
    %2952 = vmatprep.subr.mxu0 0.0
    %2953 = vmatpush2.msra.mxu0 0.0
    %2954 = vmatprep.subr.mxu0 0.0
    %2955 = vmatpush2.msra.mxu0 0.0
    %2956 = vmatprep.subr.mxu0 0.0
    %2957 = vmatpush2.msra.mxu0 0.0
    %2958 = vmatprep.subr.mxu0 0.0
    %2959 = vmatpush2.msra.mxu0 0.0
    %2960 = vmatprep.subr.mxu0 0.0
    %2961 = vmatpush2.msra.mxu0 0.0
    %2962 = vmatprep.subr.mxu0 0.0
    %2963 = vmatpush2.msra.mxu0 0.0
    %2964 = vmatprep.subr.mxu0 0.0
    %2965 = vmatpush2.msra.mxu0 0.0
    %2966 = vmatprep.subr.mxu0 0.0
    %2967 = vmatpush2.msra.mxu0 0.0
    %2968 = vmatprep.subr.mxu0 0.0
    %2969 = vmatpush2.msra.mxu0 0.0
    %2970 = vmatprep.subr.mxu0 0.0
    %2971 = vmatpush2.msra.mxu0 0.0
    %2972 = vmatprep.subr.mxu0 0.0
    %2973 = vmatpush2.msra.mxu0 0.0
    %2974 = vmatprep.subr.mxu0 0.0
    %2975 = vmatpush2.msra.mxu0 0.0
    %2976 = vmatprep.subr.mxu0 0.0
    %2977 = vmatpush2.msra.mxu0 0.0
    %2978 = vmatprep.subr.mxu0 0.0
    %2979 = vmatpush2.msra.mxu0 0.0
    %2980 = vmatprep.mubr.f32.mxu0 0.0
    %2981 = vmatmul.mubr.f32.gmra.mxu0 %v2914
    %v2982 = vpop.f32.mrf.mxu0
    %v2983 = vadd.f32 0.0, %v2982
    %v2984 = vpop.f32.mrf.mxu0
    %2985 = vdwg.mxu0
    %v2986 = vadd.f32 %v2910, %v2983
    %v2987 = vmul.f32 %v2986, 0.5
    %v2988 = vtanh.pop %v2987
    %v2989 = vmul.f32 %v2988, 0.5
    %v2990 = vadd.f32 %v2989, 0.5
    %v2991 = vtanh.pop %v2986
    %2993 = vrot.lane.b32.xlu0 %v2903, 32
    %v2994 = vpop.permute.xlu0 %2993
    %v2996 = vmul.f32 %v2990, %v2994
    %2998 = vrot.lane.b32.xlu0 %v2991, 64
    %v2999 = vpop.permute.xlu0 %2998
    %v3001 = vmul.f32 %v2990, %v2999
    %3003 = vrot.lane.b32.xlu0 %v3001, 32
    %v3004 = vpop.permute.xlu0 %3003
    %v3006 = vadd.f32 %v2996, %v3004
    %v3007 = vtanh.pop %v3006
    %3009 = vrot.lane.b32.xlu0 %v3007, 64
    %v3010 = vpop.permute.xlu0 %3009
    %v3012 = vmul.f32 %v2990, %v3010
    %v3013 = vld [vmem:[#allocation2 + $0x10] sm:$0xff]
    %3015 = vrot.lane.b32.xlu0 %v3012, 32
    %v3016 = vpop.permute.xlu0 %3015
    %v3017 = vsel %vm228, %v3016, 0
    %3019 = vmatprep.subr.mxu0 0.0
    %3020 = vmatpush1.msra.mxu0 0.0
    %3021 = vmatprep.subr.mxu0 0.0
    %3022 = vmatpush1.msra.mxu0 0.0
    %3023 = vmatprep.subr.mxu0 0.0
    %3024 = vmatpush1.msra.mxu0 0.0
    %3025 = vmatprep.subr.mxu0 0.0
    %3026 = vmatpush1.msra.mxu0 0.0
    %3027 = vmatprep.subr.mxu0 0.0
    %3028 = vmatpush1.msra.mxu0 0.0
    %3029 = vmatprep.subr.mxu0 0.0
    %3030 = vmatpush1.msra.mxu0 0.0
    %3031 = vmatprep.subr.mxu0 0.0
    %3032 = vmatpush1.msra.mxu0 0.0
    %3033 = vmatprep.subr.mxu0 0.0
    %3034 = vmatpush1.msra.mxu0 0.0
    %3035 = vmatprep.subr.mxu0 0.0
    %3036 = vmatpush1.msra.mxu0 0.0
    %3037 = vmatprep.subr.mxu0 0.0
    %3038 = vmatpush1.msra.mxu0 0.0
    %3039 = vmatprep.subr.mxu0 0.0
    %3040 = vmatpush1.msra.mxu0 0.0
    %3041 = vmatprep.subr.mxu0 0.0
    %3042 = vmatpush1.msra.mxu0 0.0
    %3043 = vmatprep.subr.mxu0 0.0
    %3044 = vmatpush1.msra.mxu0 %v2892
    %3045 = vmatprep.subr.mxu0 0.0
    %3046 = vmatpush1.msra.mxu0 %v2891
    %3047 = vmatprep.subr.mxu0 0.0
    %3048 = vmatpush1.msra.mxu0 %v2890
    %3049 = vmatprep.subr.mxu0 0.0
    %3050 = vmatpush1.msra.mxu0 %v2889
    %3051 = vmatprep.subr.mxu0 0.0
    %3052 = vmatpush2.msra.mxu0 0.0
    %3053 = vmatprep.subr.mxu0 0.0
    %3054 = vmatpush2.msra.mxu0 0.0
    %3055 = vmatprep.subr.mxu0 0.0
    %3056 = vmatpush2.msra.mxu0 0.0
    %3057 = vmatprep.subr.mxu0 0.0
    %3058 = vmatpush2.msra.mxu0 0.0
    %3059 = vmatprep.subr.mxu0 0.0
    %3060 = vmatpush2.msra.mxu0 0.0
    %3061 = vmatprep.subr.mxu0 0.0
    %3062 = vmatpush2.msra.mxu0 0.0
    %3063 = vmatprep.subr.mxu0 0.0
    %3064 = vmatpush2.msra.mxu0 0.0
    %3065 = vmatprep.subr.mxu0 0.0
    %3066 = vmatpush2.msra.mxu0 0.0
    %3067 = vmatprep.subr.mxu0 0.0
    %3068 = vmatpush2.msra.mxu0 0.0
    %3069 = vmatprep.subr.mxu0 0.0
    %3070 = vmatpush2.msra.mxu0 0.0
    %3071 = vmatprep.subr.mxu0 0.0
    %3072 = vmatpush2.msra.mxu0 0.0
    %3073 = vmatprep.subr.mxu0 0.0
    %3074 = vmatpush2.msra.mxu0 0.0
    %3075 = vmatprep.subr.mxu0 0.0
    %3076 = vmatpush2.msra.mxu0 0.0
    %3077 = vmatprep.subr.mxu0 0.0
    %3078 = vmatpush2.msra.mxu0 0.0
    %3079 = vmatprep.subr.mxu0 0.0
    %3080 = vmatpush2.msra.mxu0 0.0
    %3081 = vmatprep.subr.mxu0 0.0
    %3082 = vmatpush2.msra.mxu0 0.0
    %3083 = vmatprep.mubr.f32.mxu0 0.0
    %3084 = vmatmul.mubr.f32.gmra.mxu0 %v3017
    %v3085 = vpop.f32.mrf.mxu0
    %v3086 = vadd.f32 0.0, %v3085
    %v3087 = vpop.f32.mrf.mxu0
    %3088 = vdwg.mxu0
    %v3089 = vadd.f32 %v3013, %v3086
    %v3090 = vmul.f32 %v3089, 0.5
    %v3091 = vtanh.pop %v3090
    %v3092 = vmul.f32 %v3091, 0.5
    %v3093 = vadd.f32 %v3092, 0.5
    %v3094 = vtanh.pop %v3089
    %v3095 = vmul.f32 %v3093, %v3006
    %3097 = vrot.lane.b32.xlu0 %v3094, 64
    %v3098 = vpop.permute.xlu0 %3097
    %v3100 = vmul.f32 %v3093, %v3098
    %3102 = vrot.lane.b32.xlu0 %v3100, 32
    %v3103 = vpop.permute.xlu0 %3102
    %v3105 = vadd.f32 %v3095, %v3103
    %v3106 = vtanh.pop %v3105
    %3108 = vrot.lane.b32.xlu0 %v3106, 64
    %v3109 = vpop.permute.xlu0 %3108
    %v3111 = vmul.f32 %v3093, %v3109
    %v3112 = vld [vmem:[#allocation2 + $0x18] sm:$0xff]
    %3114 = vrot.lane.b32.xlu0 %v3111, 32
    %v3115 = vpop.permute.xlu0 %3114
    %v3116 = vsel %vm228, %v3115, 0
    %3118 = vmatprep.subr.mxu0 0.0
    %3119 = vmatpush1.msra.mxu0 0.0
    %3120 = vmatprep.subr.mxu0 0.0
    %3121 = vmatpush1.msra.mxu0 0.0
    %3122 = vmatprep.subr.mxu0 0.0
    %3123 = vmatpush1.msra.mxu0 0.0
    %3124 = vmatprep.subr.mxu0 0.0
    %3125 = vmatpush1.msra.mxu0 0.0
    %3126 = vmatprep.subr.mxu0 0.0
    %3127 = vmatpush1.msra.mxu0 0.0
    %3128 = vmatprep.subr.mxu0 0.0
    %3129 = vmatpush1.msra.mxu0 0.0
    %3130 = vmatprep.subr.mxu0 0.0
    %3131 = vmatpush1.msra.mxu0 0.0
    %3132 = vmatprep.subr.mxu0 0.0
    %3133 = vmatpush1.msra.mxu0 0.0
    %3134 = vmatprep.subr.mxu0 0.0
    %3135 = vmatpush1.msra.mxu0 0.0
    %3136 = vmatprep.subr.mxu0 0.0
    %3137 = vmatpush1.msra.mxu0 0.0
    %3138 = vmatprep.subr.mxu0 0.0
    %3139 = vmatpush1.msra.mxu0 0.0
    %3140 = vmatprep.subr.mxu0 0.0
    %3141 = vmatpush1.msra.mxu0 0.0
    %3142 = vmatprep.subr.mxu0 0.0
    %3143 = vmatpush1.msra.mxu0 %v2892
    %3144 = vmatprep.subr.mxu0 0.0
    %3145 = vmatpush1.msra.mxu0 %v2891
    %3146 = vmatprep.subr.mxu0 0.0
    %3147 = vmatpush1.msra.mxu0 %v2890
    %3148 = vmatprep.subr.mxu0 0.0
    %3149 = vmatpush1.msra.mxu0 %v2889
    %3150 = vmatprep.subr.mxu0 0.0
    %3151 = vmatpush2.msra.mxu0 0.0
    %3152 = vmatprep.subr.mxu0 0.0
    %3153 = vmatpush2.msra.mxu0 0.0
    %3154 = vmatprep.subr.mxu0 0.0
    %3155 = vmatpush2.msra.mxu0 0.0
    %3156 = vmatprep.subr.mxu0 0.0
    %3157 = vmatpush2.msra.mxu0 0.0
    %3158 = vmatprep.subr.mxu0 0.0
    %3159 = vmatpush2.msra.mxu0 0.0
    %3160 = vmatprep.subr.mxu0 0.0
    %3161 = vmatpush2.msra.mxu0 0.0
    %3162 = vmatprep.subr.mxu0 0.0
    %3163 = vmatpush2.msra.mxu0 0.0
    %3164 = vmatprep.subr.mxu0 0.0
    %3165 = vmatpush2.msra.mxu0 0.0
    %3166 = vmatprep.subr.mxu0 0.0
    %3167 = vmatpush2.msra.mxu0 0.0
    %3168 = vmatprep.subr.mxu0 0.0
    %3169 = vmatpush2.msra.mxu0 0.0
    %3170 = vmatprep.subr.mxu0 0.0
    %3171 = vmatpush2.msra.mxu0 0.0
    %3172 = vmatprep.subr.mxu0 0.0
    %3173 = vmatpush2.msra.mxu0 0.0
    %3174 = vmatprep.subr.mxu0 0.0
    %3175 = vmatpush2.msra.mxu0 0.0
    %3176 = vmatprep.subr.mxu0 0.0
    %3177 = vmatpush2.msra.mxu0 0.0
    %3178 = vmatprep.subr.mxu0 0.0
    %3179 = vmatpush2.msra.mxu0 0.0
    %3180 = vmatprep.subr.mxu0 0.0
    %3181 = vmatpush2.msra.mxu0 0.0
    %3182 = vmatprep.mubr.f32.mxu0 0.0
    %3183 = vmatmul.mubr.f32.gmra.mxu0 %v3116
    %v3184 = vpop.f32.mrf.mxu0
    %v3185 = vadd.f32 0.0, %v3184
    %v3186 = vpop.f32.mrf.mxu0
    %3187 = vdwg.mxu0
    %v3188 = vadd.f32 %v3112, %v3185
    %v3189 = vmul.f32 %v3188, 0.5
    %v3190 = vtanh.pop %v3189
    %v3191 = vmul.f32 %v3190, 0.5
    %v3192 = vadd.f32 %v3191, 0.5
    %v3193 = vtanh.pop %v3188
    %v3194 = vmul.f32 %v3192, %v3105
    %3196 = vrot.lane.b32.xlu0 %v3193, 64
    %v3197 = vpop.permute.xlu0 %3196
    %v3199 = vmul.f32 %v3192, %v3197
    %3201 = vrot.lane.b32.xlu0 %v3199, 32
    %v3202 = vpop.permute.xlu0 %3201
    %v3204 = vadd.f32 %v3194, %v3202
    %v3205 = vtanh.pop %v3204
    %3207 = vrot.lane.b32.xlu0 %v3205, 64
    %v3208 = vpop.permute.xlu0 %3207
    %v3210 = vmul.f32 %v3192, %v3208
    %v3211 = vld [vmem:[#allocation2 + $0x20] sm:$0xff]
    %3213 = vrot.lane.b32.xlu0 %v3210, 32
    %v3214 = vpop.permute.xlu0 %3213
    %v3215 = vsel %vm228, %v3214, 0
    %3217 = vmatprep.subr.mxu0 0.0
    %3218 = vmatpush1.msra.mxu0 0.0
    %3219 = vmatprep.subr.mxu0 0.0
    %3220 = vmatpush1.msra.mxu0 0.0
    %3221 = vmatprep.subr.mxu0 0.0
    %3222 = vmatpush1.msra.mxu0 0.0
    %3223 = vmatprep.subr.mxu0 0.0
    %3224 = vmatpush1.msra.mxu0 0.0
    %3225 = vmatprep.subr.mxu0 0.0
    %3226 = vmatpush1.msra.mxu0 0.0
    %3227 = vmatprep.subr.mxu0 0.0
    %3228 = vmatpush1.msra.mxu0 0.0
    %3229 = vmatprep.subr.mxu0 0.0
    %3230 = vmatpush1.msra.mxu0 0.0
    %3231 = vmatprep.subr.mxu0 0.0
    %3232 = vmatpush1.msra.mxu0 0.0
    %3233 = vmatprep.subr.mxu0 0.0
    %3234 = vmatpush1.msra.mxu0 0.0
    %3235 = vmatprep.subr.mxu0 0.0
    %3236 = vmatpush1.msra.mxu0 0.0
    %3237 = vmatprep.subr.mxu0 0.0
    %3238 = vmatpush1.msra.mxu0 0.0
    %3239 = vmatprep.subr.mxu0 0.0
    %3240 = vmatpush1.msra.mxu0 0.0
    %3241 = vmatprep.subr.mxu0 0.0
    %3242 = vmatpush1.msra.mxu0 %v2892
    %3243 = vmatprep.subr.mxu0 0.0
    %3244 = vmatpush1.msra.mxu0 %v2891
    %3245 = vmatprep.subr.mxu0 0.0
    %3246 = vmatpush1.msra.mxu0 %v2890
    %3247 = vmatprep.subr.mxu0 0.0
    %3248 = vmatpush1.msra.mxu0 %v2889
    %3249 = vmatprep.subr.mxu0 0.0
    %3250 = vmatpush2.msra.mxu0 0.0
    %3251 = vmatprep.subr.mxu0 0.0
    %3252 = vmatpush2.msra.mxu0 0.0
    %3253 = vmatprep.subr.mxu0 0.0
    %3254 = vmatpush2.msra.mxu0 0.0
    %3255 = vmatprep.subr.mxu0 0.0
    %3256 = vmatpush2.msra.mxu0 0.0
    %3257 = vmatprep.subr.mxu0 0.0
    %3258 = vmatpush2.msra.mxu0 0.0
    %3259 = vmatprep.subr.mxu0 0.0
    %3260 = vmatpush2.msra.mxu0 0.0
    %3261 = vmatprep.subr.mxu0 0.0
    %3262 = vmatpush2.msra.mxu0 0.0
    %3263 = vmatprep.subr.mxu0 0.0
    %3264 = vmatpush2.msra.mxu0 0.0
    %3265 = vmatprep.subr.mxu0 0.0
    %3266 = vmatpush2.msra.mxu0 0.0
    %3267 = vmatprep.subr.mxu0 0.0
    %3268 = vmatpush2.msra.mxu0 0.0
    %3269 = vmatprep.subr.mxu0 0.0
    %3270 = vmatpush2.msra.mxu0 0.0
    %3271 = vmatprep.subr.mxu0 0.0
    %3272 = vmatpush2.msra.mxu0 0.0
    %3273 = vmatprep.subr.mxu0 0.0
    %3274 = vmatpush2.msra.mxu0 0.0
    %3275 = vmatprep.subr.mxu0 0.0
    %3276 = vmatpush2.msra.mxu0 0.0
    %3277 = vmatprep.subr.mxu0 0.0
    %3278 = vmatpush2.msra.mxu0 0.0
    %3279 = vmatprep.subr.mxu0 0.0
    %3280 = vmatpush2.msra.mxu0 0.0
    %3281 = vmatprep.mubr.f32.mxu0 0.0
    %3282 = vmatmul.mubr.f32.gmra.mxu0 %v3215
    %v3283 = vpop.f32.mrf.mxu0
    %v3284 = vadd.f32 0.0, %v3283
    %v3285 = vpop.f32.mrf.mxu0
    %3286 = vdwg.mxu0
    %v3287 = vadd.f32 %v3211, %v3284
    %v3288 = vmul.f32 %v3287, 0.5
    %v3289 = vtanh.pop %v3288
    %v3290 = vmul.f32 %v3289, 0.5
    %v3291 = vadd.f32 %v3290, 0.5
    %v3292 = vtanh.pop %v3287
    %v3293 = vmul.f32 %v3291, %v3204
    %3295 = vrot.lane.b32.xlu0 %v3292, 64
    %v3296 = vpop.permute.xlu0 %3295
    %v3298 = vmul.f32 %v3291, %v3296
    %3300 = vrot.lane.b32.xlu0 %v3298, 32
    %v3301 = vpop.permute.xlu0 %3300
    %v3303 = vadd.f32 %v3293, %v3301
    %v3304 = vtanh.pop %v3303
    %3306 = vrot.lane.b32.xlu0 %v3304, 64
    %v3307 = vpop.permute.xlu0 %3306
    %v3309 = vmul.f32 %v3291, %v3307
    %v3310 = vld [vmem:[#allocation2 + $0x28] sm:$0xff]
    %3312 = vrot.lane.b32.xlu0 %v3309, 32
    %v3313 = vpop.permute.xlu0 %3312
    %v3314 = vsel %vm228, %v3313, 0
    %3316 = vmatprep.subr.mxu0 0.0
    %3317 = vmatpush1.msra.mxu0 0.0
    %3318 = vmatprep.subr.mxu0 0.0
    %3319 = vmatpush1.msra.mxu0 0.0
    %3320 = vmatprep.subr.mxu0 0.0
    %3321 = vmatpush1.msra.mxu0 0.0
    %3322 = vmatprep.subr.mxu0 0.0
    %3323 = vmatpush1.msra.mxu0 0.0
    %3324 = vmatprep.subr.mxu0 0.0
    %3325 = vmatpush1.msra.mxu0 0.0
    %3326 = vmatprep.subr.mxu0 0.0
    %3327 = vmatpush1.msra.mxu0 0.0
    %3328 = vmatprep.subr.mxu0 0.0
    %3329 = vmatpush1.msra.mxu0 0.0
    %3330 = vmatprep.subr.mxu0 0.0
    %3331 = vmatpush1.msra.mxu0 0.0
    %3332 = vmatprep.subr.mxu0 0.0
    %3333 = vmatpush1.msra.mxu0 0.0
    %3334 = vmatprep.subr.mxu0 0.0
    %3335 = vmatpush1.msra.mxu0 0.0
    %3336 = vmatprep.subr.mxu0 0.0
    %3337 = vmatpush1.msra.mxu0 0.0
    %3338 = vmatprep.subr.mxu0 0.0
    %3339 = vmatpush1.msra.mxu0 0.0
    %3340 = vmatprep.subr.mxu0 0.0
    %3341 = vmatpush1.msra.mxu0 %v2892
    %3342 = vmatprep.subr.mxu0 0.0
    %3343 = vmatpush1.msra.mxu0 %v2891
    %3344 = vmatprep.subr.mxu0 0.0
    %3345 = vmatpush1.msra.mxu0 %v2890
    %3346 = vmatprep.subr.mxu0 0.0
    %3347 = vmatpush1.msra.mxu0 %v2889
    %3348 = vmatprep.subr.mxu0 0.0
    %3349 = vmatpush2.msra.mxu0 0.0
    %3350 = vmatprep.subr.mxu0 0.0
    %3351 = vmatpush2.msra.mxu0 0.0
    %3352 = vmatprep.subr.mxu0 0.0
    %3353 = vmatpush2.msra.mxu0 0.0
    %3354 = vmatprep.subr.mxu0 0.0
    %3355 = vmatpush2.msra.mxu0 0.0
    %3356 = vmatprep.subr.mxu0 0.0
    %3357 = vmatpush2.msra.mxu0 0.0
    %3358 = vmatprep.subr.mxu0 0.0
    %3359 = vmatpush2.msra.mxu0 0.0
    %3360 = vmatprep.subr.mxu0 0.0
    %3361 = vmatpush2.msra.mxu0 0.0
    %3362 = vmatprep.subr.mxu0 0.0
    %3363 = vmatpush2.msra.mxu0 0.0
    %3364 = vmatprep.subr.mxu0 0.0
    %3365 = vmatpush2.msra.mxu0 0.0
    %3366 = vmatprep.subr.mxu0 0.0
    %3367 = vmatpush2.msra.mxu0 0.0
    %3368 = vmatprep.subr.mxu0 0.0
    %3369 = vmatpush2.msra.mxu0 0.0
    %3370 = vmatprep.subr.mxu0 0.0
    %3371 = vmatpush2.msra.mxu0 0.0
    %3372 = vmatprep.subr.mxu0 0.0
    %3373 = vmatpush2.msra.mxu0 0.0
    %3374 = vmatprep.subr.mxu0 0.0
    %3375 = vmatpush2.msra.mxu0 0.0
    %3376 = vmatprep.subr.mxu0 0.0
    %3377 = vmatpush2.msra.mxu0 0.0
    %3378 = vmatprep.subr.mxu0 0.0
    %3379 = vmatpush2.msra.mxu0 0.0
    %3380 = vmatprep.mubr.f32.mxu0 0.0
    %3381 = vmatmul.mubr.f32.gmra.mxu0 %v3314
    %v3382 = vpop.f32.mrf.mxu0
    %v3383 = vadd.f32 0.0, %v3382
    %v3384 = vpop.f32.mrf.mxu0
    %3385 = vdwg.mxu0
    %v3386 = vadd.f32 %v3310, %v3383
    %v3387 = vmul.f32 %v3386, 0.5
    %v3388 = vtanh.pop %v3387
    %v3389 = vmul.f32 %v3388, 0.5
    %v3390 = vadd.f32 %v3389, 0.5
    %v3391 = vtanh.pop %v3386
    %v3392 = vmul.f32 %v3390, %v3303
    %3394 = vrot.lane.b32.xlu0 %v3391, 64
    %v3395 = vpop.permute.xlu0 %3394
    %v3397 = vmul.f32 %v3390, %v3395
    %3399 = vrot.lane.b32.xlu0 %v3397, 32
    %v3400 = vpop.permute.xlu0 %3399
    %v3402 = vadd.f32 %v3392, %v3400
    %v3403 = vtanh.pop %v3402
    %3405 = vrot.lane.b32.xlu0 %v3403, 64
    %v3406 = vpop.permute.xlu0 %3405
    %v3408 = vmul.f32 %v3390, %v3406
    %v3409 = vld [vmem:[#allocation2 + $0x30] sm:$0xff]
    %3411 = vrot.lane.b32.xlu0 %v3408, 32
    %v3412 = vpop.permute.xlu0 %3411
    %v3413 = vsel %vm228, %v3412, 0
    %3415 = vmatprep.subr.mxu0 0.0
    %3416 = vmatpush1.msra.mxu0 0.0
    %3417 = vmatprep.subr.mxu0 0.0
    %3418 = vmatpush1.msra.mxu0 0.0
    %3419 = vmatprep.subr.mxu0 0.0
    %3420 = vmatpush1.msra.mxu0 0.0
    %3421 = vmatprep.subr.mxu0 0.0
    %3422 = vmatpush1.msra.mxu0 0.0
    %3423 = vmatprep.subr.mxu0 0.0
    %3424 = vmatpush1.msra.mxu0 0.0
    %3425 = vmatprep.subr.mxu0 0.0
    %3426 = vmatpush1.msra.mxu0 0.0
    %3427 = vmatprep.subr.mxu0 0.0
    %3428 = vmatpush1.msra.mxu0 0.0
    %3429 = vmatprep.subr.mxu0 0.0
    %3430 = vmatpush1.msra.mxu0 0.0
    %3431 = vmatprep.subr.mxu0 0.0
    %3432 = vmatpush1.msra.mxu0 0.0
    %3433 = vmatprep.subr.mxu0 0.0
    %3434 = vmatpush1.msra.mxu0 0.0
    %3435 = vmatprep.subr.mxu0 0.0
    %3436 = vmatpush1.msra.mxu0 0.0
    %3437 = vmatprep.subr.mxu0 0.0
    %3438 = vmatpush1.msra.mxu0 0.0
    %3439 = vmatprep.subr.mxu0 0.0
    %3440 = vmatpush1.msra.mxu0 %v2892
    %3441 = vmatprep.subr.mxu0 0.0
    %3442 = vmatpush1.msra.mxu0 %v2891
    %3443 = vmatprep.subr.mxu0 0.0
    %3444 = vmatpush1.msra.mxu0 %v2890
    %3445 = vmatprep.subr.mxu0 0.0
    %3446 = vmatpush1.msra.mxu0 %v2889
    %3447 = vmatprep.subr.mxu0 0.0
    %3448 = vmatpush2.msra.mxu0 0.0
    %3449 = vmatprep.subr.mxu0 0.0
    %3450 = vmatpush2.msra.mxu0 0.0
    %3451 = vmatprep.subr.mxu0 0.0
    %3452 = vmatpush2.msra.mxu0 0.0
    %3453 = vmatprep.subr.mxu0 0.0
    %3454 = vmatpush2.msra.mxu0 0.0
    %3455 = vmatprep.subr.mxu0 0.0
    %3456 = vmatpush2.msra.mxu0 0.0
    %3457 = vmatprep.subr.mxu0 0.0
    %3458 = vmatpush2.msra.mxu0 0.0
    %3459 = vmatprep.subr.mxu0 0.0
    %3460 = vmatpush2.msra.mxu0 0.0
    %3461 = vmatprep.subr.mxu0 0.0
    %3462 = vmatpush2.msra.mxu0 0.0
    %3463 = vmatprep.subr.mxu0 0.0
    %3464 = vmatpush2.msra.mxu0 0.0
    %3465 = vmatprep.subr.mxu0 0.0
    %3466 = vmatpush2.msra.mxu0 0.0
    %3467 = vmatprep.subr.mxu0 0.0
    %3468 = vmatpush2.msra.mxu0 0.0
    %3469 = vmatprep.subr.mxu0 0.0
    %3470 = vmatpush2.msra.mxu0 0.0
    %3471 = vmatprep.subr.mxu0 0.0
    %3472 = vmatpush2.msra.mxu0 0.0
    %3473 = vmatprep.subr.mxu0 0.0
    %3474 = vmatpush2.msra.mxu0 0.0
    %3475 = vmatprep.subr.mxu0 0.0
    %3476 = vmatpush2.msra.mxu0 0.0
    %3477 = vmatprep.subr.mxu0 0.0
    %3478 = vmatpush2.msra.mxu0 0.0
    %3479 = vmatprep.mubr.f32.mxu0 0.0
    %3480 = vmatmul.mubr.f32.gmra.mxu0 %v3413
    %v3481 = vpop.f32.mrf.mxu0
    %v3482 = vadd.f32 0.0, %v3481
    %v3483 = vpop.f32.mrf.mxu0
    %3484 = vdwg.mxu0
    %v3485 = vadd.f32 %v3409, %v3482
    %v3486 = vmul.f32 %v3485, 0.5
    %v3487 = vtanh.pop %v3486
    %v3488 = vmul.f32 %v3487, 0.5
    %v3489 = vadd.f32 %v3488, 0.5
    %v3490 = vtanh.pop %v3485
    %v3491 = vmul.f32 %v3489, %v3402
    %3493 = vrot.lane.b32.xlu0 %v3490, 64
    %v3494 = vpop.permute.xlu0 %3493
    %v3496 = vmul.f32 %v3489, %v3494
    %3498 = vrot.lane.b32.xlu0 %v3496, 32
    %v3499 = vpop.permute.xlu0 %3498
    %v3501 = vadd.f32 %v3491, %v3499
    %v3502 = vtanh.pop %v3501
    %3504 = vrot.lane.b32.xlu0 %v3502, 64
    %v3505 = vpop.permute.xlu0 %3504
    %v3507 = vmul.f32 %v3489, %v3505
    %v3508 = vld [vmem:[#allocation2 + $0x38] sm:$0xff]
    %3510 = vrot.lane.b32.xlu0 %v3507, 32
    %v3511 = vpop.permute.xlu0 %3510
    %v3512 = vsel %vm228, %v3511, 0
    %3514 = vmatprep.subr.mxu0 0.0
    %3515 = vmatpush1.msra.mxu0 0.0
    %3516 = vmatprep.subr.mxu0 0.0
    %3517 = vmatpush1.msra.mxu0 0.0
    %3518 = vmatprep.subr.mxu0 0.0
    %3519 = vmatpush1.msra.mxu0 0.0
    %3520 = vmatprep.subr.mxu0 0.0
    %3521 = vmatpush1.msra.mxu0 0.0
    %3522 = vmatprep.subr.mxu0 0.0
    %3523 = vmatpush1.msra.mxu0 0.0
    %3524 = vmatprep.subr.mxu0 0.0
    %3525 = vmatpush1.msra.mxu0 0.0
    %3526 = vmatprep.subr.mxu0 0.0
    %3527 = vmatpush1.msra.mxu0 0.0
    %3528 = vmatprep.subr.mxu0 0.0
    %3529 = vmatpush1.msra.mxu0 0.0
    %3530 = vmatprep.subr.mxu0 0.0
    %3531 = vmatpush1.msra.mxu0 0.0
    %3532 = vmatprep.subr.mxu0 0.0
    %3533 = vmatpush1.msra.mxu0 0.0
    %3534 = vmatprep.subr.mxu0 0.0
    %3535 = vmatpush1.msra.mxu0 0.0
    %3536 = vmatprep.subr.mxu0 0.0
    %3537 = vmatpush1.msra.mxu0 0.0
    %3538 = vmatprep.subr.mxu0 0.0
    %3539 = vmatpush1.msra.mxu0 %v2892
    %3540 = vmatprep.subr.mxu0 0.0
    %3541 = vmatpush1.msra.mxu0 %v2891
    %3542 = vmatprep.subr.mxu0 0.0
    %3543 = vmatpush1.msra.mxu0 %v2890
    %3544 = vmatprep.subr.mxu0 0.0
    %3545 = vmatpush1.msra.mxu0 %v2889
    %3546 = vmatprep.subr.mxu0 0.0
    %3547 = vmatpush2.msra.mxu0 0.0
    %3548 = vmatprep.subr.mxu0 0.0
    %3549 = vmatpush2.msra.mxu0 0.0
    %3550 = vmatprep.subr.mxu0 0.0
    %3551 = vmatpush2.msra.mxu0 0.0
    %3552 = vmatprep.subr.mxu0 0.0
    %3553 = vmatpush2.msra.mxu0 0.0
    %3554 = vmatprep.subr.mxu0 0.0
    %3555 = vmatpush2.msra.mxu0 0.0
    %3556 = vmatprep.subr.mxu0 0.0
    %3557 = vmatpush2.msra.mxu0 0.0
    %3558 = vmatprep.subr.mxu0 0.0
    %3559 = vmatpush2.msra.mxu0 0.0
    %3560 = vmatprep.subr.mxu0 0.0
    %3561 = vmatpush2.msra.mxu0 0.0
    %3562 = vmatprep.subr.mxu0 0.0
    %3563 = vmatpush2.msra.mxu0 0.0
    %3564 = vmatprep.subr.mxu0 0.0
    %3565 = vmatpush2.msra.mxu0 0.0
    %3566 = vmatprep.subr.mxu0 0.0
    %3567 = vmatpush2.msra.mxu0 0.0
    %3568 = vmatprep.subr.mxu0 0.0
    %3569 = vmatpush2.msra.mxu0 0.0
    %3570 = vmatprep.subr.mxu0 0.0
    %3571 = vmatpush2.msra.mxu0 0.0
    %3572 = vmatprep.subr.mxu0 0.0
    %3573 = vmatpush2.msra.mxu0 0.0
    %3574 = vmatprep.subr.mxu0 0.0
    %3575 = vmatpush2.msra.mxu0 0.0
    %3576 = vmatprep.subr.mxu0 0.0
    %3577 = vmatpush2.msra.mxu0 0.0
    %3578 = vmatprep.mubr.f32.mxu0 0.0
    %3579 = vmatmul.mubr.f32.gmra.mxu0 %v3512
    %v3580 = vpop.f32.mrf.mxu0
    %v3581 = vadd.f32 0.0, %v3580
    %v3582 = vpop.f32.mrf.mxu0
    %3583 = vdwg.mxu0
    %v3584 = vadd.f32 %v3508, %v3581
    %v3585 = vmul.f32 %v3584, 0.5
    %v3586 = vtanh.pop %v3585
    %v3587 = vmul.f32 %v3586, 0.5
    %v3588 = vadd.f32 %v3587, 0.5
    %v3589 = vtanh.pop %v3584
    %v3590 = vmul.f32 %v3588, %v3501
    %3592 = vrot.lane.b32.xlu0 %v3589, 64
    %v3593 = vpop.permute.xlu0 %3592
    %v3595 = vmul.f32 %v3588, %v3593
    %3597 = vrot.lane.b32.xlu0 %v3595, 32
    %v3598 = vpop.permute.xlu0 %3597
    %v3600 = vadd.f32 %v3590, %v3598
    %v3601 = vtanh.pop %v3600
    %3603 = vrot.lane.b32.xlu0 %v3601, 64
    %v3604 = vpop.permute.xlu0 %3603
    %v3606 = vmul.f32 %v3588, %v3604
    %v3607 = vld [vmem:[%s7] sm:$0x1]
    %v3608 = vld [vmem:[#allocation4] sm:$0x1]
    %3610 = vset.pattern.permute.xlu0 0
    %3611 = vperm.xlu0 %3610, %v3608
    %v3612 = vpop.permute.xlu0 %3611
    %v3614 = vlaneseq
    %v3615 = vshrl.u32 %v3614, 7
    %v3616 = vsub.s32 0, %v3615
    %v3617 = vrot.slane %v3612, %v3616
    %3619 = vrot.lane.b32.xlu0 %v3606, 32
    %v3620 = vpop.permute.xlu0 %3619
    %v3622 = vsel %vm228, %v3607, 0
    %v3624 = vsel %vm228, %v3620, 0
    %3626 = vmatprep.subr.mxu0 0.0
    %3627 = vmatpush1.xpose.msra.mxu0 0.0
    %3628 = vmatprep.subr.mxu0 0.0
    %3629 = vmatpush1.xpose.msra.mxu0 0.0
    %3630 = vmatprep.subr.mxu0 0.0
    %3631 = vmatpush1.xpose.msra.mxu0 0.0
    %3632 = vmatprep.subr.mxu0 0.0
    %3633 = vmatpush1.xpose.msra.mxu0 0.0
    %3634 = vmatprep.subr.mxu0 0.0
    %3635 = vmatpush1.xpose.msra.mxu0 0.0
    %3636 = vmatprep.subr.mxu0 0.0
    %3637 = vmatpush1.xpose.msra.mxu0 0.0
    %3638 = vmatprep.subr.mxu0 0.0
    %3639 = vmatpush1.xpose.msra.mxu0 0.0
    %3640 = vmatprep.subr.mxu0 0.0
    %3641 = vmatpush1.xpose.msra.mxu0 0.0
    %3642 = vmatprep.subr.mxu0 0.0
    %3643 = vmatpush1.xpose.msra.mxu0 0.0
    %3644 = vmatprep.subr.mxu0 0.0
    %3645 = vmatpush1.xpose.msra.mxu0 0.0
    %3646 = vmatprep.subr.mxu0 0.0
    %3647 = vmatpush1.xpose.msra.mxu0 0.0
    %3648 = vmatprep.subr.mxu0 0.0
    %3649 = vmatpush1.xpose.msra.mxu0 0.0
    %3650 = vmatprep.subr.mxu0 0.0
    %3651 = vmatpush1.xpose.msra.mxu0 0.0
    %3652 = vmatprep.subr.mxu0 0.0
    %3653 = vmatpush1.xpose.msra.mxu0 0.0
    %3654 = vmatprep.subr.mxu0 0.0
    %3655 = vmatpush1.xpose.msra.mxu0 0.0
    %3656 = vmatprep.subr.mxu0 0.0
    %3657 = vmatpush1.xpose.msra.mxu0 %v3624
    %3658 = vmatprep.subr.mxu0 0.0
    %3659 = vmatpush2.xpose.msra.mxu0 0.0
    %3660 = vmatprep.subr.mxu0 0.0
    %3661 = vmatpush2.xpose.msra.mxu0 0.0
    %3662 = vmatprep.subr.mxu0 0.0
    %3663 = vmatpush2.xpose.msra.mxu0 0.0
    %3664 = vmatprep.subr.mxu0 0.0
    %3665 = vmatpush2.xpose.msra.mxu0 0.0
    %3666 = vmatprep.subr.mxu0 0.0
    %3667 = vmatpush2.xpose.msra.mxu0 0.0
    %3668 = vmatprep.subr.mxu0 0.0
    %3669 = vmatpush2.xpose.msra.mxu0 0.0
    %3670 = vmatprep.subr.mxu0 0.0
    %3671 = vmatpush2.xpose.msra.mxu0 0.0
    %3672 = vmatprep.subr.mxu0 0.0
    %3673 = vmatpush2.xpose.msra.mxu0 0.0
    %3674 = vmatprep.subr.mxu0 0.0
    %3675 = vmatpush2.xpose.msra.mxu0 0.0
    %3676 = vmatprep.subr.mxu0 0.0
    %3677 = vmatpush2.xpose.msra.mxu0 0.0
    %3678 = vmatprep.subr.mxu0 0.0
    %3679 = vmatpush2.xpose.msra.mxu0 0.0
    %3680 = vmatprep.subr.mxu0 0.0
    %3681 = vmatpush2.xpose.msra.mxu0 0.0
    %3682 = vmatprep.subr.mxu0 0.0
    %3683 = vmatpush2.xpose.msra.mxu0 0.0
    %3684 = vmatprep.subr.mxu0 0.0
    %3685 = vmatpush2.xpose.msra.mxu0 0.0
    %3686 = vmatprep.subr.mxu0 0.0
    %3687 = vmatpush2.xpose.msra.mxu0 0.0
    %3688 = vmatprep.subr.mxu0 0.0
    %3689 = vmatpush2.xpose.msra.mxu0 0.0
    %3690 = vmatprep.mubr.f32.mxu0 0.0
    %3691 = vmatmul.mubr.f32.gmra.mxu0 %v3622
    %v3692 = vpop.f32.mrf.mxu0
    %v3693 = vadd.f32 %v3617, %v3692
    %v3694 = vpop.f32.mrf.mxu0
    %3695 = vdwg.mxu0
    %vm3696 = vcmask 57344
    %3697 = vst.msk [vmem:[%s9] sm:$0x1] %vm3696, %v3693
    // Predicated region
    $region42: #{lstm_model_forward.1} parent=1 // pred_check
      _
    $region43: #{lstm_model_forward.1} parent=1 // pred_check_branch
      %3699 = sbr.rel (0) target = $region45
    $region44: #{lstm_model_forward.1} parent=1 // pred_region
      _
    $region45: #{lstm_model_forward.1} parent=1 // pred_fallthru
      _
    // Predicated region
    $region46: #{lstm_model_forward.1} parent=1 // pred_check
      _
    $region47: #{lstm_model_forward.1} parent=1 // pred_check_branch
      %3701 = sbr.rel (0) target = $region49
    $region48: #{lstm_model_forward.1} parent=1 // pred_region
      _
    $region49: #{lstm_model_forward.1} parent=1 // pred_fallthru
      _
    %3702 = vsyncpa [#allocation6], 1

</llo_original>
